<compile_context>
chip_gen: v7x
topology: tpu7x:2x2x1
jax: 0.10.0
libtpu: 0.0.40
codegen_flags: <defaults>
</compile_context>

<pallas_src>
import math
import functools

import jax
import jax.numpy as jnp
from jax.experimental import pallas as pl
from jax.experimental.pallas import tpu as pltpu


def _gattention_kernel(x_ref, gsel_ref, gamma_ref, beta_ref, wqkv_ref, bqkv_ref,
                       wproj_ref, bproj_ref, out_ref, *, num_heads):
    """One grid step == one batch element.

    x_ref      : [1, C, T] f32
    gsel       : [C, C]    f32   (block-diagonal group selector, pre-scaled by 1/(cpg*T))
    gamma/beta : [C, 1]    f32   (GroupNorm affine)
    wqkv       : [3C, C]   bf16  (q/k rows pre-scaled by 1/sqrt(sqrt(head_dim)))
    bqkv       : [3C, 1]   f32   (q/k rows pre-scaled likewise)
    wproj      : [C, C]    bf16
    bproj      : [C, 1]    f32
    out_ref    : [1, C, T] f32
    """
    x = x_ref[0]                                   # [C, T] f32
    C, T = x.shape

    # ---- GroupNorm(G, C), eps=1e-5, affine (GroupNorm32 runs in f32) -------
    # Two-stage reduction that never reshapes the [C, T] activation into a
    # (G, cpg, T) view (cpg may be < 8 sublanes):
    #   1) lane-reduce over T  -> per-channel sums [C, 1]
    #   2) tiny block-diagonal selector matmul (pre-scaled by 1/(cpg*T)) both
    #      averages within each group AND broadcasts the group stat back to
    #      every channel of that group.
    s1 = jnp.sum(x, axis=-1, keepdims=True)                 # [C, 1]
    s2 = jnp.sum(x * x, axis=-1, keepdims=True)             # [C, 1]
    mean = jnp.dot(gsel_ref[...], s1, preferred_element_type=jnp.float32)  # [C, 1]
    ex2 = jnp.dot(gsel_ref[...], s2, preferred_element_type=jnp.float32)   # [C, 1]
    var = ex2 - mean * mean
    rstd = jax.lax.rsqrt(var + 1e-5)
    a_aff = rstd * gamma_ref[...]                            # [C, 1]
    b_aff = beta_ref[...] - mean * a_aff                     # [C, 1]
    xn = (x * a_aff + b_aff).astype(jnp.bfloat16)            # [C, T] bf16

    # ---- qkv 1x1 conv: bf16 MXU matmul, f32 accumulate, f32 bias -----------
    qkv = jnp.dot(wqkv_ref[...], xn, preferred_element_type=jnp.float32)  # [3C, T]
    qkv16 = (qkv + bqkv_ref[...]).astype(jnp.bfloat16)       # single bf16 cast pass

    # ---- multi-head attention (QKVAttentionLegacy); T stays on lanes -------
    # PyTorch runs this in fp16; TPU has no fp16 vector path, so bf16 stands in.
    # TODO(synk): exact fp16 rounding is not reproducible on the TPU vector units.
    H = num_heads
    ch = C // H
    q = qkv16[0 * C:1 * C].reshape(H, ch, T)                 # [H, ch, T]
    k = qkv16[1 * C:2 * C].reshape(H, ch, T)
    v = qkv16[2 * C:3 * C].reshape(H, ch, T)

    # scores[h, t, s] = sum_c q[h,c,t] k[h,c,s]  (scale already folded into W/b;
    # natural dot_general output order -> no transpose / relayout)
    w = jnp.einsum('hct,hcs->hts', q, k,
                   preferred_element_type=jnp.float32)       # [H, T, T] f32
    # TODO(synk): for large T (>= ~512-1024, e.g. C=512,T=1024 UNet levels) the
    # [H, T, T] logits no longer fit VMEM -- switch this region to a KV-tiled
    # online-softmax (flash-style) loop with KV tiles >= 256 columns.
    m = jnp.max(w, axis=-1, keepdims=True)
    e = jnp.exp(w - m)
    p = (e * pl.reciprocal(jnp.sum(e, axis=-1, keepdims=True), approx=True)
         ).astype(jnp.bfloat16)                              # [H, T, T] bf16

    # a[h, c, t] = sum_s v[h,c,s] p[h,t,s]  (again the natural output order)
    a = jnp.einsum('hcs,hts->hct', v, p,
                   preferred_element_type=jnp.float32)       # [H, ch, T] f32
    a16 = a.reshape(C, T).astype(jnp.bfloat16)

    # ---- proj_out 1x1 conv (bf16 MXU) + f32 bias + f32 residual ------------
    h = jnp.dot(wproj_ref[...], a16, preferred_element_type=jnp.float32)  # [C, T]
    out_ref[0] = x + (h + bproj_ref[...])


def gattention_block(x, params, *, num_groups, num_heads):
    """x: [B, C, H, W] float32 (NCHW, like the PyTorch module)."""
    B, C, Hs, Ws = x.shape
    assert C % num_heads == 0 and C % num_groups == 0
    T = Hs * Ws
    ch = C // num_heads
    cpg = C // num_groups
    x_flat = x.reshape(B, C, T).astype(jnp.float32)

    gamma = params['norm_gamma'].reshape(C, 1).astype(jnp.float32)
    beta = params['norm_beta'].reshape(C, 1).astype(jnp.float32)

    # Block-diagonal group selector (ones within each group), with the
    # 1/(cpg*T) averaging factor folded in.  Built once on the host side and
    # DMA'd into VMEM a single time (constant block index across the grid).
    gi = jnp.arange(C)[:, None] // cpg
    gj = jnp.arange(C)[None, :] // cpg
    gsel = (gi == gj).astype(jnp.float32) * (1.0 / (cpg * T))   # [C, C]

    # Fold the attention scale 1/sqrt(sqrt(head_dim)) into the q and k rows of
    # the qkv conv (weights AND bias) -- free at wrapper time, removes two full
    # [C, T] VPU multiply passes per grid step and one bf16 rounding step.
    scale = 1.0 / math.sqrt(math.sqrt(ch))
    row_scale = jnp.concatenate(
        [jnp.full((2 * C, 1), scale, jnp.float32), jnp.ones((C, 1), jnp.float32)],
        axis=0)
    wqkv = (params['qkv_w'].reshape(3 * C, C).astype(jnp.float32) * row_scale
            ).astype(jnp.bfloat16)          # bf16 weights: full-rate MXU, half DMA
    bqkv = params['qkv_b'].reshape(3 * C, 1).astype(jnp.float32) * row_scale
    wproj = params['proj_w'].reshape(C, C).astype(jnp.bfloat16)
    bproj = params['proj_b'].reshape(C, 1).astype(jnp.float32)

    # Advisory cost estimate for XLA's scheduler around the custom call.
    flops = int(B * (2 * T * (3 * C * C + C * C) + 4 * num_heads * ch * T * T))
    transcendentals = int(B * num_heads * T * T)          # softmax exp
    bytes_accessed = int(2 * x_flat.size * 4 + wqkv.size * 2 + wproj.size * 2
                         + gsel.size * 4
                         + (bqkv.size + bproj.size + gamma.size + beta.size) * 4)
    cost = pl.CostEstimate(flops=flops, transcendentals=transcendentals,
                           bytes_accessed=bytes_accessed)

    # Size the scoped-VMEM limit from the actual per-step working set instead of
    # relying on the generation-dependent default (16/32 MiB).
    work = (2 * 2 * C * T * 4                     # x/out blocks, double-buffered
            + 2 * (3 * C * C + C * C) * 2         # bf16 weights, double-buffered
            + 2 * C * C * 4                       # group selector
            + 2 * 8 * C * 4                       # biases / affine params
            + 3 * C * T * (4 + 2)                 # qkv f32 + bf16
            + num_heads * T * T * (4 + 4 + 2)     # logits f32, exp f32, probs bf16
            + 4 * C * T * 4)                      # xn / a / h temporaries
    vmem_limit = int(min(max(2 * work, 32 * 1024 * 1024), 64 * 1024 * 1024))

    kernel = functools.partial(_gattention_kernel, num_heads=num_heads)

    out = pl.pallas_call(
        kernel,
        out_shape=jax.ShapeDtypeStruct((B, C, T), jnp.float32),
        # Batch axis is "parallel": on v7x the two TensorCores split the batch.
        grid=(B,),
        in_specs=[
            pl.BlockSpec((1, C, T), lambda i: (i, 0, 0)),      # x, one batch/step
            pl.BlockSpec((C, C), lambda i: (0, 0)),            # group selector (f32)
            pl.BlockSpec((C, 1), lambda i: (0, 0)),            # gamma
            pl.BlockSpec((C, 1), lambda i: (0, 0)),            # beta
            pl.BlockSpec((3 * C, C), lambda i: (0, 0)),        # qkv weight (bf16)
            pl.BlockSpec((3 * C, 1), lambda i: (0, 0)),        # qkv bias (f32)
            pl.BlockSpec((C, C), lambda i: (0, 0)),            # proj weight (bf16)
            pl.BlockSpec((C, 1), lambda i: (0, 0)),            # proj bias (f32)
        ],
        out_specs=pl.BlockSpec((1, C, T), lambda i: (i, 0, 0)),
        compiler_params=pltpu.CompilerParams(
            dimension_semantics=("parallel",),
            vmem_limit_bytes=vmem_limit),
        cost_estimate=cost,
    )(x_flat, gsel, gamma, beta, wqkv, bqkv, wproj, bproj)

    return out.reshape(B, C, Hs, Ws)


def reference(x, params, num_groups, num_heads):
    """Pure-JAX reference mirroring GAttentionBlock._forward (bf16 attention)."""
    B, C, Hs, Ws = x.shape
    T = Hs * Ws
    xf = x.reshape(B, C, T)

    xg = xf.reshape(B, num_groups, -1)
    mean = xg.mean(-1, keepdims=True)
    var = ((xg - mean) ** 2).mean(-1, keepdims=True)
    xn = ((xg - mean) / jnp.sqrt(var + 1e-5)).reshape(B, C, T)
    xn = xn * params['norm_gamma'][None, :, None] + params['norm_beta'][None, :, None]

    wqkv = params['qkv_w'].reshape(3 * C, C)
    qkv = jnp.einsum('oc,bct->bot', wqkv, xn) + params['qkv_b'][None, :, None]

    H = num_heads
    ch = C // H
    scale = 1.0 / math.sqrt(math.sqrt(ch))
    qkv16 = qkv.astype(jnp.bfloat16).reshape(B, 3, H, ch, T)
    q, k, v = qkv16[:, 0], qkv16[:, 1], qkv16[:, 2]
    w = jnp.einsum('bhct,bhcs->bhts', q * scale, k * scale,
                   preferred_element_type=jnp.float32)
    p = jax.nn.softmax(w, axis=-1).astype(jnp.bfloat16)
    a = jnp.einsum('bhts,bhcs->bhct', p, v,
                   preferred_element_type=jnp.float32).reshape(B, C, T)

    wproj = params['proj_w'].reshape(C, C)
    h = jnp.einsum('oc,bct->bot', wproj, a) + params['proj_b'][None, :, None]
    return (xf + h).reshape(B, C, Hs, Ws)


if __name__ == "__main__":
    # channels=64, num_head_channels=32 -> num_heads=2; dims=2; 16x16 spatial
    # (T=256, a lane-dense multiple of 128); batch 2.
    B, C, Hs, Ws = 2, 64, 16, 16
    num_heads = 2
    num_groups = 32   # normalization(channels) == GroupNorm32(32, channels)

    key = jax.random.PRNGKey(0)
    kx, kqw, kqb, kpw, kpb = jax.random.split(key, 5)
    x = jax.random.normal(kx, (B, C, Hs, Ws), jnp.float32)

    params = {
        # GroupNorm default init: weight=1, bias=0
        'norm_gamma': jnp.ones((C,), jnp.float32),
        'norm_beta': jnp.zeros((C,), jnp.float32),
        # qkv: Conv2d(C, 3C, 1) -> weight [3C, C, 1, 1], bias [3C]
        'qkv_w': jax.random.normal(kqw, (3 * C, C, 1, 1), jnp.float32) * 0.1,
        'qkv_b': jax.random.normal(kqb, (3 * C,), jnp.float32) * 0.1,
        # proj_out: Conv2d(C, C, 1).  NOTE: PyTorch zero_module() zero-inits this;
        # nonzero deterministic weights are used here so the projection path is exercised.
        'proj_w': jax.random.normal(kpw, (C, C, 1, 1), jnp.float32) * 0.05,
        'proj_b': jax.random.normal(kpb, (C,), jnp.float32) * 0.05,
    }

    out = gattention_block(x, params, num_groups=num_groups, num_heads=num_heads)
    out = jax.block_until_ready(out)

    ref = reference(x, params, num_groups, num_heads)
    assert out.shape == x.shape == ref.shape
    max_err = float(jnp.max(jnp.abs(out - ref)))
    if not bool(jnp.allclose(out, ref, atol=2e-2, rtol=2e-2)):
        raise AssertionError(f"kernel mismatch vs reference, max_err={max_err}")
    print("KERNEL_OK")
</pallas_src>

<mosaic_0001>
module attributes {stable_mosaic.version = 11 : i64} {
  func.func @_gattention_kernel(%arg0: i32, %arg1: memref<1x64x256xf32, #tpu.memory_space<vmem>>, %arg2: memref<64x64xf32, #tpu.memory_space<vmem>>, %arg3: memref<64x1xf32, #tpu.memory_space<vmem>>, %arg4: memref<64x1xf32, #tpu.memory_space<vmem>>, %arg5: memref<192x64xbf16, #tpu.memory_space<vmem>>, %arg6: memref<192x1xf32, #tpu.memory_space<vmem>>, %arg7: memref<64x64xbf16, #tpu.memory_space<vmem>>, %arg8: memref<64x1xf32, #tpu.memory_space<vmem>>, %arg9: memref<1x64x256xf32, #tpu.memory_space<vmem>>) attributes {dimension_semantics = [#tpu.dimension_semantics<parallel>], iteration_bounds = array<i64: 2>, scalar_prefetch = 0 : i64, scratch_operands = 0 : i64, tpu.core_type = #tpu.core_type<tc>, window_params = [{transform_indices = @transform_0, window_bounds = array<i64: 1, 64, 256>}, {pipeline_mode = #tpu.pipeline_mode<synchronous>, transform_indices = @transform_1, window_bounds = array<i64: 64, 64>}, {pipeline_mode = #tpu.pipeline_mode<synchronous>, transform_indices = @transform_2, window_bounds = array<i64: 64, 1>}, {pipeline_mode = #tpu.pipeline_mode<synchronous>, transform_indices = @transform_3, window_bounds = array<i64: 64, 1>}, {pipeline_mode = #tpu.pipeline_mode<synchronous>, transform_indices = @transform_4, window_bounds = array<i64: 192, 64>}, {pipeline_mode = #tpu.pipeline_mode<synchronous>, transform_indices = @transform_5, window_bounds = array<i64: 192, 1>}, {pipeline_mode = #tpu.pipeline_mode<synchronous>, transform_indices = @transform_6, window_bounds = array<i64: 64, 64>}, {pipeline_mode = #tpu.pipeline_mode<synchronous>, transform_indices = @transform_7, window_bounds = array<i64: 64, 1>}, {transform_indices = @transform_8, window_bounds = array<i64: 1, 64, 256>}]} {
    %c0 = arith.constant 0 : index
    %c0_0 = arith.constant 0 : index
    %c0_1 = arith.constant 0 : index
    %0 = vector.load %arg1[%c0, %c0_0, %c0_1] : memref<1x64x256xf32, #tpu.memory_space<vmem>>, vector<1x64x256xf32>
    %1 = vector.shape_cast %0 : vector<1x64x256xf32> to vector<64x256xf32>
    %cst = arith.constant dense<0.000000e+00> : vector<64xf32>
    %2 = vector.multi_reduction <add>, %1, %cst [1] : vector<64x256xf32> to vector<64xf32>
    %3 = vector.shape_cast %2 : vector<64xf32> to vector<64x1xf32>
    %4 = arith.mulf %1, %1 : vector<64x256xf32>
    %cst_2 = arith.constant dense<0.000000e+00> : vector<64xf32>
    %5 = vector.multi_reduction <add>, %4, %cst_2 [1] : vector<64x256xf32> to vector<64xf32>
    %6 = vector.shape_cast %5 : vector<64xf32> to vector<64x1xf32>
    %c0_3 = arith.constant 0 : index
    %c0_4 = arith.constant 0 : index
    %7 = vector.load %arg2[%c0_3, %c0_4] : memref<64x64xf32, #tpu.memory_space<vmem>>, vector<64x64xf32>
    %cst_5 = arith.constant dense<0.000000e+00> : vector<64x1xf32>
    %8 = tpu.matmul %7, %3, %cst_5 {dimension_numbers = #tpu.dot_dimension_numbers<[1], [0], [0], [1], [0, 0, 1, 1], [], []>} : vector<64x64xf32>, vector<64x1xf32>, vector<64x1xf32> -> vector<64x1xf32>
    %c0_6 = arith.constant 0 : index
    %c0_7 = arith.constant 0 : index
    %9 = vector.load %arg2[%c0_6, %c0_7] : memref<64x64xf32, #tpu.memory_space<vmem>>, vector<64x64xf32>
    %cst_8 = arith.constant dense<0.000000e+00> : vector<64x1xf32>
    %10 = tpu.matmul %9, %6, %cst_8 {dimension_numbers = #tpu.dot_dimension_numbers<[1], [0], [0], [1], [0, 0, 1, 1], [], []>} : vector<64x64xf32>, vector<64x1xf32>, vector<64x1xf32> -> vector<64x1xf32>
    %11 = arith.mulf %8, %8 : vector<64x1xf32>
    %12 = arith.subf %10, %11 : vector<64x1xf32>
    %cst_9 = arith.constant 9.99999974E-6 : f32
    %13 = vector.broadcast %cst_9 : f32 to vector<64x1xf32>
    %14 = arith.addf %12, %13 : vector<64x1xf32>
    %15 = math.rsqrt %14 : vector<64x1xf32>
    %c0_10 = arith.constant 0 : index
    %c0_11 = arith.constant 0 : index
    %16 = vector.load %arg3[%c0_10, %c0_11] : memref<64x1xf32, #tpu.memory_space<vmem>>, vector<64x1xf32>
    %17 = arith.mulf %15, %16 : vector<64x1xf32>
    %c0_12 = arith.constant 0 : index
    %c0_13 = arith.constant 0 : index
    %18 = vector.load %arg4[%c0_12, %c0_13] : memref<64x1xf32, #tpu.memory_space<vmem>>, vector<64x1xf32>
    %19 = arith.mulf %8, %17 : vector<64x1xf32>
    %20 = arith.subf %18, %19 : vector<64x1xf32>
    %21 = vector.broadcast %17 : vector<64x1xf32> to vector<64x256xf32>
    %22 = arith.mulf %1, %21 : vector<64x256xf32>
    %23 = vector.broadcast %20 : vector<64x1xf32> to vector<64x256xf32>
    %24 = arith.addf %22, %23 : vector<64x256xf32>
    %25 = arith.truncf %24 : vector<64x256xf32> to vector<64x256xbf16>
    %c0_14 = arith.constant 0 : index
    %c0_15 = arith.constant 0 : index
    %26 = vector.load %arg5[%c0_14, %c0_15] : memref<192x64xbf16, #tpu.memory_space<vmem>>, vector<192x64xbf16>
    %cst_16 = arith.constant dense<0.000000e+00> : vector<192x256xf32>
    %27 = tpu.matmul %26, %25, %cst_16 {dimension_numbers = #tpu.dot_dimension_numbers<[1], [0], [0], [1], [0, 0, 1, 1], [], []>} : vector<192x64xbf16>, vector<64x256xbf16>, vector<192x256xf32> -> vector<192x256xf32>
    %c0_17 = arith.constant 0 : index
    %c0_18 = arith.constant 0 : index
    %28 = vector.load %arg6[%c0_17, %c0_18] : memref<192x1xf32, #tpu.memory_space<vmem>>, vector<192x1xf32>
    %29 = vector.broadcast %28 : vector<192x1xf32> to vector<192x256xf32>
    %30 = arith.addf %27, %29 : vector<192x256xf32>
    %31 = arith.truncf %30 : vector<192x256xf32> to vector<192x256xbf16>
    %32 = vector.extract_strided_slice %31 {offsets = [0, 0], sizes = [64, 256], strides = [1, 1]} : vector<192x256xbf16> to vector<64x256xbf16>
    %33 = vector.shape_cast %32 : vector<64x256xbf16> to vector<2x32x256xbf16>
    %34 = vector.extract_strided_slice %31 {offsets = [64, 0], sizes = [64, 256], strides = [1, 1]} : vector<192x256xbf16> to vector<64x256xbf16>
    %35 = vector.shape_cast %34 : vector<64x256xbf16> to vector<2x32x256xbf16>
    %36 = vector.extract_strided_slice %31 {offsets = [128, 0], sizes = [64, 256], strides = [1, 1]} : vector<192x256xbf16> to vector<64x256xbf16>
    %37 = vector.shape_cast %36 : vector<64x256xbf16> to vector<2x32x256xbf16>
    "tpu.trace_start"() <{level = 10 : i32, message = "hct,hcs->hts"}> : () -> ()
    %cst_19 = arith.constant dense<0.000000e+00> : vector<2x256x256xf32>
    %38 = tpu.matmul %33, %35, %cst_19 {dimension_numbers = #tpu.dot_dimension_numbers<[1], [1], [2], [2], [0, 0, 0, 2, 1, 2], [0], [0]>} : vector<2x32x256xbf16>, vector<2x32x256xbf16>, vector<2x256x256xf32> -> vector<2x256x256xf32>
    "tpu.trace_stop"() : () -> ()
    %cst_20 = arith.constant dense<0xFF800000> : vector<2x256xf32>
    %39 = vector.multi_reduction <maximumf>, %38, %cst_20 [2] : vector<2x256x256xf32> to vector<2x256xf32>
    %40 = vector.shape_cast %39 : vector<2x256xf32> to vector<2x256x1xf32>
    %41 = vector.broadcast %40 : vector<2x256x1xf32> to vector<2x256x256xf32>
    %42 = arith.subf %38, %41 : vector<2x256x256xf32>
    %43 = math.exp %42 : vector<2x256x256xf32>
    %cst_21 = arith.constant dense<0.000000e+00> : vector<2x256xf32>
    %44 = vector.multi_reduction <add>, %43, %cst_21 [2] : vector<2x256x256xf32> to vector<2x256xf32>
    %45 = vector.shape_cast %44 : vector<2x256xf32> to vector<2x256x1xf32>
    %46 = tpu.reciprocal %45 {approx = true} : vector<2x256x1xf32> -> vector<2x256x1xf32>
    %47 = vector.broadcast %46 : vector<2x256x1xf32> to vector<2x256x256xf32>
    %48 = arith.mulf %43, %47 : vector<2x256x256xf32>
    %49 = arith.truncf %48 : vector<2x256x256xf32> to vector<2x256x256xbf16>
    "tpu.trace_start"() <{level = 10 : i32, message = "hcs,hts->hct"}> : () -> ()
    %cst_22 = arith.constant dense<0.000000e+00> : vector<2x32x256xf32>
    %50 = tpu.matmul %37, %49, %cst_22 {dimension_numbers = #tpu.dot_dimension_numbers<[2], [2], [1], [1], [0, 0, 0, 1, 1, 1], [0], [0]>} : vector<2x32x256xbf16>, vector<2x256x256xbf16>, vector<2x32x256xf32> -> vector<2x32x256xf32>
    "tpu.trace_stop"() : () -> ()
    %51 = vector.shape_cast %50 : vector<2x32x256xf32> to vector<64x256xf32>
    %52 = arith.truncf %51 : vector<64x256xf32> to vector<64x256xbf16>
    %c0_23 = arith.constant 0 : index
    %c0_24 = arith.constant 0 : index
    %53 = vector.load %arg7[%c0_23, %c0_24] : memref<64x64xbf16, #tpu.memory_space<vmem>>, vector<64x64xbf16>
    %cst_25 = arith.constant dense<0.000000e+00> : vector<64x256xf32>
    %54 = tpu.matmul %53, %52, %cst_25 {dimension_numbers = #tpu.dot_dimension_numbers<[1], [0], [0], [1], [0, 0, 1, 1], [], []>} : vector<64x64xbf16>, vector<64x256xbf16>, vector<64x256xf32> -> vector<64x256xf32>
    %c0_26 = arith.constant 0 : index
    %c0_27 = arith.constant 0 : index
    %55 = vector.load %arg8[%c0_26, %c0_27] : memref<64x1xf32, #tpu.memory_space<vmem>>, vector<64x1xf32>
    %56 = vector.broadcast %55 : vector<64x1xf32> to vector<64x256xf32>
    %57 = arith.addf %54, %56 : vector<64x256xf32>
    %58 = arith.addf %1, %57 : vector<64x256xf32>
    %c0_28 = arith.constant 0 : index
    %c0_29 = arith.constant 0 : index
    %c0_30 = arith.constant 0 : index
    %59 = vector.load %arg9[%c0_28, %c0_29, %c0_30] : memref<1x64x256xf32, #tpu.memory_space<vmem>>, vector<1x64x256xf32>
    %60 = vector.shape_cast %59 : vector<1x64x256xf32> to vector<64x256xf32>
    %61 = vector.shape_cast %58 : vector<64x256xf32> to vector<1x64x256xf32>
    tpu.vector_store %arg9[%c0_28, %c0_29, %c0_30], %61 {strides = array<i32>} : memref<1x64x256xf32, #tpu.memory_space<vmem>>, vector<1x64x256xf32>,
    return
  }
  func.func @transform_0(%arg0: i32) -> (i32, i32, i32) {
    %c0_i32 = arith.constant 0 : i32
    %c0_i32_0 = arith.constant 0 : i32
    %c0_i32_1 = arith.constant 0 : i32
    return %arg0, %c0_i32, %c0_i32_0 : i32, i32, i32
  }
  func.func @transform_1(%arg0: i32) -> (i32, i32) {
    %c0_i32 = arith.constant 0 : i32
    %c0_i32_0 = arith.constant 0 : i32
    %c0_i32_1 = arith.constant 0 : i32
    return %c0_i32, %c0_i32_0 : i32, i32
  }
  func.func @transform_2(%arg0: i32) -> (i32, i32) {
    %c0_i32 = arith.constant 0 : i32
    %c0_i32_0 = arith.constant 0 : i32
    %c0_i32_1 = arith.constant 0 : i32
    return %c0_i32, %c0_i32_0 : i32, i32
  }
  func.func @transform_3(%arg0: i32) -> (i32, i32) {
    %c0_i32 = arith.constant 0 : i32
    %c0_i32_0 = arith.constant 0 : i32
    %c0_i32_1 = arith.constant 0 : i32
    return %c0_i32, %c0_i32_0 : i32, i32
  }
  func.func @transform_4(%arg0: i32) -> (i32, i32) {
    %c0_i32 = arith.constant 0 : i32
    %c0_i32_0 = arith.constant 0 : i32
    %c0_i32_1 = arith.constant 0 : i32
    return %c0_i32, %c0_i32_0 : i32, i32
  }
  func.func @transform_5(%arg0: i32) -> (i32, i32) {
    %c0_i32 = arith.constant 0 : i32
    %c0_i32_0 = arith.constant 0 : i32
    %c0_i32_1 = arith.constant 0 : i32
    return %c0_i32, %c0_i32_0 : i32, i32
  }
  func.func @transform_6(%arg0: i32) -> (i32, i32) {
    %c0_i32 = arith.constant 0 : i32
    %c0_i32_0 = arith.constant 0 : i32
    %c0_i32_1 = arith.constant 0 : i32
    return %c0_i32, %c0_i32_0 : i32, i32
  }
  func.func @transform_7(%arg0: i32) -> (i32, i32) {
    %c0_i32 = arith.constant 0 : i32
    %c0_i32_0 = arith.constant 0 : i32
    %c0_i32_1 = arith.constant 0 : i32
    return %c0_i32, %c0_i32_0 : i32, i32
  }
  func.func @transform_8(%arg0: i32) -> (i32, i32, i32) {
    %c0_i32 = arith.constant 0 : i32
    %c0_i32_0 = arith.constant 0 : i32
    %c0_i32_1 = arith.constant 0 : i32
    return %arg0, %c0_i32, %c0_i32_0 : i32, i32, i32
  }
}

</mosaic_0001>

<llo_original>
// kernel: tpu_custom_call.1
$region0: #{tpu_custom_call.1}
  #allocation0 [shape = 'u32[]', space=smem, size = 0x4, offset = 0x4, fixed_abs, tag = 'smem constant byte address 0x4 - core index']
  #allocation1 [shape = 'u32[144,128]{1,0:T(1,128)}', space=vmem, size = 0x12000, scoped, tag = 'internal scratch']
  %s0 = inlined_call_operand.vmem [shape: f32[2,64,256], index: 0, kind: input, shape index: {}]
  %s1 = inlined_call_operand.vmem [shape: f32[64,64], index: 1, kind: input, shape index: {}]
  %s2 = inlined_call_operand.vmem [shape: f32[64,1], index: 2, kind: input, shape index: {}]
  %s3 = inlined_call_operand.vmem [shape: f32[64,1], index: 3, kind: input, shape index: {}]
  %s4 = inlined_call_operand.vmem [shape: bf16[192,64], index: 4, kind: input, shape index: {}]
  %s5 = inlined_call_operand.vmem [shape: f32[192,1], index: 5, kind: input, shape index: {}]
  %s6 = inlined_call_operand.vmem [shape: bf16[64,64], index: 6, kind: input, shape index: {}]
  %s7 = inlined_call_operand.vmem [shape: f32[64,1], index: 7, kind: input, shape index: {}]
  %s8 = inlined_call_operand.hbm [shape: f32[2,64,256], index: 8, kind: output, shape index: {}]
  %s9 = sld [smem:[#allocation0]]
  $region65: #{tpu_custom_call.1} parent=0
    _
  %s11 = ssub.s32 1, %s9
  %s12 = scalar_select 0, %s11, %s9
  $region1: #{tpu_custom_call.1} parent=0
    #allocation2 [shape = 'u8[131072]{0}', space=vmem, size = 0x20000, scoped, tag = 'output window, operand 0']
    #allocation3 [shape = 's32[2]{0}', space=sflag, size = 0x8, scoped, tag = 'scoped memory for tpu_custom_call.1']
    %13 = vsyncpa [#allocation3], 0
    %s14 = scalar_lea.sflag [#allocation3], 1
    %15 = vsyncpa %s14, 0
    loop: start=0, step=1, limit=4
    $region2: #{tpu_custom_call.1} parent=1 // loop_pre_header
      _
    $region3: #{tpu_custom_call.1} parent=1 // loop_header
      %s17 = sphi 0, %s21
      %p18 = scmp.ge.s32.totalorder %s17, 4
      %s27 = sphi 0, %s29
      %s30 = sphi 0, %s27
      %s31 = sphi 0, %s30
      %s47 = sphi 0, %s31
      %s51 = sphi 0, %s51
      %s53 = sphi 0, %s51
      %s54 = sphi 0, %s53
      %s68 = sphi 0, %s54
      %s72 = sphi 0, %s72
      %s74 = sphi 0, %s72
      %s75 = sphi 0, %s74
      %s89 = sphi 0, %s75
      %s93 = sphi 0, %s93
      %s95 = sphi 0, %s93
      %s96 = sphi 0, %s95
      %s110 = sphi 0, %s96
      %s114 = sphi 0, %s114
      %s116 = sphi 0, %s114
      %s117 = sphi 0, %s116
      %s131 = sphi 0, %s117
      %s135 = sphi 0, %s135
      %s137 = sphi 0, %s135
      %s138 = sphi 0, %s137
      %s152 = sphi 0, %s138
      %s156 = sphi 0, %s156
      %s158 = sphi 0, %s156
      %s159 = sphi 0, %s158
      %s173 = sphi 0, %s159
      %s177 = sphi 0, %s177
      %s179 = sphi 0, %s177
      %s180 = sphi 0, %s179
      %s194 = sphi 0, %s180
      %s200 = sphi 0, %s202
      %s203 = sphi 0, %s200
      %s204 = sphi 0, %s203
      %s220 = sphi 0, %s204
    $region4: #{tpu_custom_call.1} parent=1 // loop_header_branch
      %20 = sbr.rel (%p18) target = $region8
    $region5: #{tpu_custom_call.1} parent=1 // loop_body
      %s22 = ssub.s32 %s17, 1
      %s23 = ssub.s32 %s17, 2
      %s24 = sadd.s32 %s17, 1
      %s25 = ssub.s32 %s17, %s24
      %p26 = scmp.eq.s32.totalorder %s25, 0
      %s28 = sadd.s32 %s27, 1
      %s29 = scalar_select %p26, %s27, %s28
      %p32 = pneg %p26
      %p33 = scmp.eq.s32.totalorder %s17, 1
      %p34 = por %p32, %p33
      %p35 = scmp.ne.s32.totalorder %s27, %s30
      %p36 = scmp.eq.s32.totalorder %s17, 0
      %p37 = por %p35, %p36
      %p38 = scmp.ne.s32.totalorder %s27, %s30
      %p39 = scmp.eq.s32.totalorder %s22, 1
      %p40 = por %p38, %p39
      %p41 = scmp.ne.s32.totalorder %s30, %s31
      %p42 = scmp.eq.s32.totalorder %s22, 0
      %p43 = por %p41, %p42
      %p44 = scmp.ne.s32.totalorder %s30, %s31
      %p45 = scmp.eq.s32.totalorder %s23, 1
      %p46 = por %p44, %p45
      %p48 = scmp.ne.s32.totalorder %s31, %s47
      %p49 = scmp.eq.s32.totalorder %s23, 0
      %p50 = por %p48, %p49
      %s52 = sadd.s32 %s51, 1
      %p55 = scmp.eq.s32.totalorder %s17, 1
      %p56 = scmp.ne.s32.totalorder %s51, %s53
      %p57 = scmp.eq.s32.totalorder %s17, 0
      %p58 = por %p56, %p57
      %p59 = scmp.ne.s32.totalorder %s51, %s53
      %p60 = scmp.eq.s32.totalorder %s22, 1
      %p61 = por %p59, %p60
      %p62 = scmp.ne.s32.totalorder %s53, %s54
      %p63 = scmp.eq.s32.totalorder %s22, 0
      %p64 = por %p62, %p63
      %p65 = scmp.ne.s32.totalorder %s53, %s54
      %p66 = scmp.eq.s32.totalorder %s23, 1
      %p67 = por %p65, %p66
      %p69 = scmp.ne.s32.totalorder %s54, %s68
      %p70 = scmp.eq.s32.totalorder %s23, 0
      %p71 = por %p69, %p70
      %s73 = sadd.s32 %s72, 1
      %p76 = scmp.eq.s32.totalorder %s17, 1
      %p77 = scmp.ne.s32.totalorder %s72, %s74
      %p78 = scmp.eq.s32.totalorder %s17, 0
      %p79 = por %p77, %p78
      %p80 = scmp.ne.s32.totalorder %s72, %s74
      %p81 = scmp.eq.s32.totalorder %s22, 1
      %p82 = por %p80, %p81
      %p83 = scmp.ne.s32.totalorder %s74, %s75
      %p84 = scmp.eq.s32.totalorder %s22, 0
      %p85 = por %p83, %p84
      %p86 = scmp.ne.s32.totalorder %s74, %s75
      %p87 = scmp.eq.s32.totalorder %s23, 1
      %p88 = por %p86, %p87
      %p90 = scmp.ne.s32.totalorder %s75, %s89
      %p91 = scmp.eq.s32.totalorder %s23, 0
      %p92 = por %p90, %p91
      %s94 = sadd.s32 %s93, 1
      %p97 = scmp.eq.s32.totalorder %s17, 1
      %p98 = scmp.ne.s32.totalorder %s93, %s95
      %p99 = scmp.eq.s32.totalorder %s17, 0
      %p100 = por %p98, %p99
      %p101 = scmp.ne.s32.totalorder %s93, %s95
      %p102 = scmp.eq.s32.totalorder %s22, 1
      %p103 = por %p101, %p102
      %p104 = scmp.ne.s32.totalorder %s95, %s96
      %p105 = scmp.eq.s32.totalorder %s22, 0
      %p106 = por %p104, %p105
      %p107 = scmp.ne.s32.totalorder %s95, %s96
      %p108 = scmp.eq.s32.totalorder %s23, 1
      %p109 = por %p107, %p108
      %p111 = scmp.ne.s32.totalorder %s96, %s110
      %p112 = scmp.eq.s32.totalorder %s23, 0
      %p113 = por %p111, %p112
      %s115 = sadd.s32 %s114, 1
      %p118 = scmp.eq.s32.totalorder %s17, 1
      %p119 = scmp.ne.s32.totalorder %s114, %s116
      %p120 = scmp.eq.s32.totalorder %s17, 0
      %p121 = por %p119, %p120
      %p122 = scmp.ne.s32.totalorder %s114, %s116
      %p123 = scmp.eq.s32.totalorder %s22, 1
      %p124 = por %p122, %p123
      %p125 = scmp.ne.s32.totalorder %s116, %s117
      %p126 = scmp.eq.s32.totalorder %s22, 0
      %p127 = por %p125, %p126
      %p128 = scmp.ne.s32.totalorder %s116, %s117
      %p129 = scmp.eq.s32.totalorder %s23, 1
      %p130 = por %p128, %p129
      %p132 = scmp.ne.s32.totalorder %s117, %s131
      %p133 = scmp.eq.s32.totalorder %s23, 0
      %p134 = por %p132, %p133
      %s136 = sadd.s32 %s135, 1
      %p139 = scmp.eq.s32.totalorder %s17, 1
      %p140 = scmp.ne.s32.totalorder %s135, %s137
      %p141 = scmp.eq.s32.totalorder %s17, 0
      %p142 = por %p140, %p141
      %p143 = scmp.ne.s32.totalorder %s135, %s137
      %p144 = scmp.eq.s32.totalorder %s22, 1
      %p145 = por %p143, %p144
      %p146 = scmp.ne.s32.totalorder %s137, %s138
      %p147 = scmp.eq.s32.totalorder %s22, 0
      %p148 = por %p146, %p147
      %p149 = scmp.ne.s32.totalorder %s137, %s138
      %p150 = scmp.eq.s32.totalorder %s23, 1
      %p151 = por %p149, %p150
      %p153 = scmp.ne.s32.totalorder %s138, %s152
      %p154 = scmp.eq.s32.totalorder %s23, 0
      %p155 = por %p153, %p154
      %s157 = sadd.s32 %s156, 1
      %p160 = scmp.eq.s32.totalorder %s17, 1
      %p161 = scmp.ne.s32.totalorder %s156, %s158
      %p162 = scmp.eq.s32.totalorder %s17, 0
      %p163 = por %p161, %p162
      %p164 = scmp.ne.s32.totalorder %s156, %s158
      %p165 = scmp.eq.s32.totalorder %s22, 1
      %p166 = por %p164, %p165
      %p167 = scmp.ne.s32.totalorder %s158, %s159
      %p168 = scmp.eq.s32.totalorder %s22, 0
      %p169 = por %p167, %p168
      %p170 = scmp.ne.s32.totalorder %s158, %s159
      %p171 = scmp.eq.s32.totalorder %s23, 1
      %p172 = por %p170, %p171
      %p174 = scmp.ne.s32.totalorder %s159, %s173
      %p175 = scmp.eq.s32.totalorder %s23, 0
      %p176 = por %p174, %p175
      %s178 = sadd.s32 %s177, 1
      %p181 = scmp.eq.s32.totalorder %s17, 1
      %p182 = scmp.ne.s32.totalorder %s177, %s179
      %p183 = scmp.eq.s32.totalorder %s17, 0
      %p184 = por %p182, %p183
      %p185 = scmp.ne.s32.totalorder %s177, %s179
      %p186 = scmp.eq.s32.totalorder %s22, 1
      %p187 = por %p185, %p186
      %p188 = scmp.ne.s32.totalorder %s179, %s180
      %p189 = scmp.eq.s32.totalorder %s22, 0
      %p190 = por %p188, %p189
      %p191 = scmp.ne.s32.totalorder %s179, %s180
      %p192 = scmp.eq.s32.totalorder %s23, 1
      %p193 = por %p191, %p192
      %p195 = scmp.ne.s32.totalorder %s180, %s194
      %p196 = scmp.eq.s32.totalorder %s23, 0
      %p197 = por %p195, %p196
      %s198 = ssub.s32 %s17, %s24
      %p199 = scmp.eq.s32.totalorder %s198, 0
      %s201 = sadd.s32 %s200, 1
      %s202 = scalar_select %p199, %s200, %s201
      %p205 = pneg %p199
      %p206 = scmp.eq.s32.totalorder %s17, 1
      %p207 = por %p205, %p206
      %p208 = scmp.ne.s32.totalorder %s200, %s203
      %p209 = scmp.eq.s32.totalorder %s17, 0
      %p210 = por %p208, %p209
      %p211 = scmp.ne.s32.totalorder %s200, %s203
      %p212 = scmp.eq.s32.totalorder %s22, 1
      %p213 = por %p211, %p212
      %p214 = scmp.ne.s32.totalorder %s203, %s204
      %p215 = scmp.eq.s32.totalorder %s22, 0
      %p216 = por %p214, %p215
      %p217 = scmp.ne.s32.totalorder %s203, %s204
      %p218 = scmp.eq.s32.totalorder %s23, 1
      %p219 = por %p217, %p218
      %p221 = scmp.ne.s32.totalorder %s204, %s220
      %p222 = scmp.eq.s32.totalorder %s23, 0
      %p223 = por %p221, %p222
      %p224 = scmp.le.s32.totalorder 1, %s17
      %p225 = scmp.lt.s32.totalorder %s17, 3
      %p226 = pnand %p224, %p225
      %p227 = pneg %p226
      // Predicated region
      $region9: #{tpu_custom_call.1} parent=5 // pred_check
        _
      $region10: #{tpu_custom_call.1} parent=5 // pred_check_branch
        %229 = sbr.rel (%p226) target = $region12
      $region11: #{tpu_custom_call.1} parent=5 // pred_region
        %s230 = ssub.s32 %s17, 1
        // Predicated region
        $region13: #{tpu_custom_call.1} parent=11 // pred_check
          %p231 = pneg %p64
        $region14: #{tpu_custom_call.1} parent=11 // pred_check_branch
          %233 = sbr.rel (%p231) target = $region16
        $region15: #{tpu_custom_call.1} parent=11 // pred_region
          _
        $region16: #{tpu_custom_call.1} parent=11 // pred_fallthru
          _
        // Predicated region
        $region17: #{tpu_custom_call.1} parent=11 // pred_check
          %p234 = pneg %p85
        $region18: #{tpu_custom_call.1} parent=11 // pred_check_branch
          %236 = sbr.rel (%p234) target = $region20
        $region19: #{tpu_custom_call.1} parent=11 // pred_region
          _
        $region20: #{tpu_custom_call.1} parent=11 // pred_fallthru
          _
        // Predicated region
        $region21: #{tpu_custom_call.1} parent=11 // pred_check
          %p237 = pneg %p106
        $region22: #{tpu_custom_call.1} parent=11 // pred_check_branch
          %239 = sbr.rel (%p237) target = $region24
        $region23: #{tpu_custom_call.1} parent=11 // pred_region
          _
        $region24: #{tpu_custom_call.1} parent=11 // pred_fallthru
          _
        // Predicated region
        $region25: #{tpu_custom_call.1} parent=11 // pred_check
          %p240 = pneg %p127
        $region26: #{tpu_custom_call.1} parent=11 // pred_check_branch
          %242 = sbr.rel (%p240) target = $region28
        $region27: #{tpu_custom_call.1} parent=11 // pred_region
          _
        $region28: #{tpu_custom_call.1} parent=11 // pred_fallthru
          _
        // Predicated region
        $region29: #{tpu_custom_call.1} parent=11 // pred_check
          %p243 = pneg %p148
        $region30: #{tpu_custom_call.1} parent=11 // pred_check_branch
          %245 = sbr.rel (%p243) target = $region32
        $region31: #{tpu_custom_call.1} parent=11 // pred_region
          _
        $region32: #{tpu_custom_call.1} parent=11 // pred_fallthru
          _
        // Predicated region
        $region33: #{tpu_custom_call.1} parent=11 // pred_check
          %p246 = pneg %p169
        $region34: #{tpu_custom_call.1} parent=11 // pred_check_branch
          %248 = sbr.rel (%p246) target = $region36
        $region35: #{tpu_custom_call.1} parent=11 // pred_region
          _
        $region36: #{tpu_custom_call.1} parent=11 // pred_fallthru
          _
        // Predicated region
        $region37: #{tpu_custom_call.1} parent=11 // pred_check
          %p249 = pneg %p190
        $region38: #{tpu_custom_call.1} parent=11 // pred_check_branch
          %251 = sbr.rel (%p249) target = $region40
        $region39: #{tpu_custom_call.1} parent=11 // pred_region
          _
        $region40: #{tpu_custom_call.1} parent=11 // pred_fallthru
          _
      $region12: #{tpu_custom_call.1} parent=5 // pred_fallthru
        _
      %p252 = scmp.lt.s32.totalorder %s17, 2
      // Predicated region
      $region41: #{tpu_custom_call.1} parent=5 // pred_check
        %p253 = pneg %p252
      $region42: #{tpu_custom_call.1} parent=5 // pred_check_branch
        %255 = sbr.rel (%p253) target = $region44
      $region43: #{tpu_custom_call.1} parent=5 // pred_region
        // Predicated region
        $region45: #{tpu_custom_call.1} parent=43 // pred_check
          %p256 = pneg %p37
        $region46: #{tpu_custom_call.1} parent=43 // pred_check_branch
          %258 = sbr.rel (%p256) target = $region48
        $region47: #{tpu_custom_call.1} parent=43 // pred_region
          %p259 = scmp.lt.s32.totalorder %s17, 1
          %s260 = scalar_select %p259, %s17, 1
          %s261 = smul.addr %s260, 16
          %s262 = smul.addr %s261, 8
          %s263 = scalar_lea.vmem %s0, %s262
        $region48: #{tpu_custom_call.1} parent=43 // pred_fallthru
          _
      $region44: #{tpu_custom_call.1} parent=5 // pred_fallthru
        _
      %p264 = scmp.le.s32.totalorder 1, %s17
      %p265 = scmp.lt.s32.totalorder %s17, 3
      %p266 = pnand %p264, %p265
      %p267 = pneg %p266
      // Predicated region
      $region49: #{tpu_custom_call.1} parent=5 // pred_check
        _
      $region50: #{tpu_custom_call.1} parent=5 // pred_check_branch
        %269 = sbr.rel (%p266) target = $region52
      $region51: #{tpu_custom_call.1} parent=5 // pred_region
        %s270 = ssub.s32 %s17, 1
        %p271 = scmp.lt.s32.totalorder %s22, 1
        %s272 = scalar_select %p271, %s22, 1
        %s273 = smul.addr %s272, 16
        %s274 = smul.addr %s273, 8
        %s275 = scalar_lea.vmem %s0, %s274
        %p276 = pneg %p43
        %p277 = pneg %p40
        %p278 = pneg %p64
        %p279 = pneg %p61
        %p280 = pneg %p85
        %p281 = pneg %p82
        %p282 = pneg %p106
        %p283 = pneg %p103
        %p284 = pneg %p127
        %p285 = pneg %p124
        %p286 = pneg %p148
        %p287 = pneg %p145
        %p288 = pneg %p169
        %p289 = pneg %p166
        %p290 = pneg %p190
        %p291 = pneg %p187
        %p292 = pneg %p216
        %p293 = pneg %p213
        %s294 = sand.u32 %s203, 1
        %s295 = scalar_lea.sflag [#allocation3], %s294
        %s296 = sand.u32 %s203, 1
        %s297 = smul.addr %s296, 128
        %s298 = scalar_lea.vmem [#allocation2], %s297
        %p299 = scmp.lt.s32.totalorder %s22, 1
        %s300 = scalar_select %p299, %s22, 1
        %s301 = smul.addr %s300, 16
        %s302 = smul.addr %s301, 8
        %s303 = scalar_lea.vmem %s0, %s302
        %v305 = vld [vmem:[%s303] sm:$0xff]
        %v306 = vld [vmem:[%s303 + $0x8] sm:$0xff]
        %v307 = vld [vmem:[%s303 + $0x10] sm:$0xff]
        %v308 = vld [vmem:[%s303 + $0x18] sm:$0xff]
        %v309 = vld [vmem:[%s303 + $0x20] sm:$0xff]
        %v310 = vld [vmem:[%s303 + $0x28] sm:$0xff]
        %v311 = vld [vmem:[%s303 + $0x30] sm:$0xff]
        %v312 = vld [vmem:[%s303 + $0x38] sm:$0xff]
        %v313 = vld [vmem:[%s303 + $0x40] sm:$0xff]
        %v314 = vld [vmem:[%s303 + $0x48] sm:$0xff]
        %v315 = vld [vmem:[%s303 + $0x50] sm:$0xff]
        %v316 = vld [vmem:[%s303 + $0x58] sm:$0xff]
        %v317 = vld [vmem:[%s303 + $0x60] sm:$0xff]
        %v318 = vld [vmem:[%s303 + $0x68] sm:$0xff]
        %v319 = vld [vmem:[%s303 + $0x70] sm:$0xff]
        %v320 = vld [vmem:[%s303 + $0x78] sm:$0xff]
        %v321 = vadd.f32 %v305, %v306
        %322 = vadd.xlane.f32.xlu0 %v321
        %v323 = vpop.xlane.xlu0 %322
        %v324 = vadd.f32 %v307, %v308
        %325 = vadd.xlane.f32.xlu0 %v324
        %v326 = vpop.xlane.xlu0 %325
        %v327 = vadd.f32 %v309, %v310
        %328 = vadd.xlane.f32.xlu0 %v327
        %v329 = vpop.xlane.xlu0 %328
        %v330 = vadd.f32 %v311, %v312
        %331 = vadd.xlane.f32.xlu0 %v330
        %v332 = vpop.xlane.xlu0 %331
        %v333 = vadd.f32 %v313, %v314
        %334 = vadd.xlane.f32.xlu0 %v333
        %v335 = vpop.xlane.xlu0 %334
        %v336 = vadd.f32 %v315, %v316
        %337 = vadd.xlane.f32.xlu0 %v336
        %v338 = vpop.xlane.xlu0 %337
        %v339 = vadd.f32 %v317, %v318
        %340 = vadd.xlane.f32.xlu0 %v339
        %v341 = vpop.xlane.xlu0 %340
        %v342 = vadd.f32 %v319, %v320
        %343 = vadd.xlane.f32.xlu0 %v342
        %v344 = vpop.xlane.xlu0 %343
        %v345 = vmul.f32 %v305, %v305
        %v346 = vmul.f32 %v306, %v306
        %v347 = vmul.f32 %v307, %v307
        %v348 = vmul.f32 %v308, %v308
        %v349 = vmul.f32 %v309, %v309
        %v350 = vmul.f32 %v310, %v310
        %v351 = vmul.f32 %v311, %v311
        %v352 = vmul.f32 %v312, %v312
        %v353 = vmul.f32 %v313, %v313
        %v354 = vmul.f32 %v314, %v314
        %v355 = vmul.f32 %v315, %v315
        %v356 = vmul.f32 %v316, %v316
        %v357 = vmul.f32 %v317, %v317
        %v358 = vmul.f32 %v318, %v318
        %v359 = vmul.f32 %v319, %v319
        %v360 = vmul.f32 %v320, %v320
        %v361 = vadd.f32 %v345, %v346
        %362 = vadd.xlane.f32.xlu0 %v361
        %v363 = vpop.xlane.xlu0 %362
        %v364 = vadd.f32 %v347, %v348
        %365 = vadd.xlane.f32.xlu0 %v364
        %v366 = vpop.xlane.xlu0 %365
        %v367 = vadd.f32 %v349, %v350
        %368 = vadd.xlane.f32.xlu0 %v367
        %v369 = vpop.xlane.xlu0 %368
        %v370 = vadd.f32 %v351, %v352
        %371 = vadd.xlane.f32.xlu0 %v370
        %v372 = vpop.xlane.xlu0 %371
        %v373 = vadd.f32 %v353, %v354
        %374 = vadd.xlane.f32.xlu0 %v373
        %v375 = vpop.xlane.xlu0 %374
        %v376 = vadd.f32 %v355, %v356
        %377 = vadd.xlane.f32.xlu0 %v376
        %v378 = vpop.xlane.xlu0 %377
        %v379 = vadd.f32 %v357, %v358
        %380 = vadd.xlane.f32.xlu0 %v379
        %v381 = vpop.xlane.xlu0 %380
        %v382 = vadd.f32 %v359, %v360
        %383 = vadd.xlane.f32.xlu0 %v382
        %v384 = vpop.xlane.xlu0 %383
        %v385 = vld [vmem:[%s1] sm:$0xff]
        %v386 = vld [vmem:[%s1 + $0x8] sm:$0xff]
        %v387 = vld [vmem:[%s1 + $0x10] sm:$0xff]
        %v388 = vld [vmem:[%s1 + $0x18] sm:$0xff]
        %v389 = vld [vmem:[%s1 + $0x20] sm:$0xff]
        %v390 = vld [vmem:[%s1 + $0x28] sm:$0xff]
        %v391 = vld [vmem:[%s1 + $0x30] sm:$0xff]
        %v392 = vld [vmem:[%s1 + $0x38] sm:$0xff]
        %vm393 = vcmask 523264
        %v395 = vsel %vm393, %v385, 0
        %v398 = vsel %vm393, %v386, 0
        %v401 = vsel %vm393, %v387, 0
        %v404 = vsel %vm393, %v388, 0
        %v407 = vsel %vm393, %v389, 0
        %v410 = vsel %vm393, %v390, 0
        %v413 = vsel %vm393, %v391, 0
        %v416 = vsel %vm393, %v392, 0
        %418 = vmatprep.subr.mxu0 0.0
        %419 = vmatpush1.msra.mxu0 %v323
        %420 = vmatprep.subr.mxu0 0.0
        %421 = vmatpush1.msra.mxu0 %v326
        %422 = vmatprep.subr.mxu0 0.0
        %423 = vmatpush1.msra.mxu0 %v329
        %424 = vmatprep.subr.mxu0 0.0
        %425 = vmatpush1.msra.mxu0 %v332
        %426 = vmatprep.subr.mxu0 0.0
        %427 = vmatpush1.msra.mxu0 %v335
        %428 = vmatprep.subr.mxu0 0.0
        %429 = vmatpush1.msra.mxu0 %v338
        %430 = vmatprep.subr.mxu0 0.0
        %431 = vmatpush1.msra.mxu0 %v341
        %432 = vmatprep.subr.mxu0 0.0
        %433 = vmatpush1.msra.mxu0 %v344
        %434 = vmatprep.subr.mxu0 0.0
        %435 = vmatpush1.msra.mxu0 0.0
        %436 = vmatprep.subr.mxu0 0.0
        %437 = vmatpush1.msra.mxu0 0.0
        %438 = vmatprep.subr.mxu0 0.0
        %439 = vmatpush1.msra.mxu0 0.0
        %440 = vmatprep.subr.mxu0 0.0
        %441 = vmatpush1.msra.mxu0 0.0
        %442 = vmatprep.subr.mxu0 0.0
        %443 = vmatpush1.msra.mxu0 0.0
        %444 = vmatprep.subr.mxu0 0.0
        %445 = vmatpush1.msra.mxu0 0.0
        %446 = vmatprep.subr.mxu0 0.0
        %447 = vmatpush1.msra.mxu0 0.0
        %448 = vmatprep.subr.mxu0 0.0
        %449 = vmatpush1.msra.mxu0 0.0
        %450 = vmatprep.subr.mxu0 0.0
        %451 = vmatpush1.msra.mxu0 0.0
        %452 = vmatprep.subr.mxu0 0.0
        %453 = vmatpush1.msra.mxu0 0.0
        %454 = vmatprep.subr.mxu0 0.0
        %455 = vmatpush1.msra.mxu0 0.0
        %456 = vmatprep.subr.mxu0 0.0
        %457 = vmatpush1.msra.mxu0 0.0
        %458 = vmatprep.subr.mxu0 0.0
        %459 = vmatpush1.msra.mxu0 0.0
        %460 = vmatprep.subr.mxu0 0.0
        %461 = vmatpush1.msra.mxu0 0.0
        %462 = vmatprep.subr.mxu0 0.0
        %463 = vmatpush1.msra.mxu0 0.0
        %464 = vmatprep.subr.mxu0 0.0
        %465 = vmatpush1.msra.mxu0 0.0
        %466 = vmatprep.subr.mxu0 0.0
        %467 = vmatpush1.msra.mxu0 0.0
        %468 = vmatprep.subr.mxu0 0.0
        %469 = vmatpush1.msra.mxu0 0.0
        %470 = vmatprep.subr.mxu0 0.0
        %471 = vmatpush1.msra.mxu0 0.0
        %472 = vmatprep.subr.mxu0 0.0
        %473 = vmatpush1.msra.mxu0 0.0
        %474 = vmatprep.subr.mxu0 0.0
        %475 = vmatpush1.msra.mxu0 0.0
        %476 = vmatprep.subr.mxu0 0.0
        %477 = vmatpush1.msra.mxu0 0.0
        %478 = vmatprep.subr.mxu0 0.0
        %479 = vmatpush1.msra.mxu0 0.0
        %480 = vmatprep.subr.mxu0 0.0
        %481 = vmatpush1.msra.mxu0 0.0
        %482 = vmatprep.mubr.f32.mxu0 0.0
        %483 = vmatmul.mubr.f32.gmra.mrb[0].mxu0 %v395
        %v484 = vpop.f32.mrb[0].mxu0
        %v485 = vadd.f32 0.0, %v484
        %v486 = vpop.f32.mrb[0].mxu0
        %487 = vmatprep.mubr.f32.mxu0 0.0
        %488 = vmatmul.mubr.f32.gmra.mrb[0].mxu0 %v398
        %v489 = vpop.f32.mrb[0].mxu0
        %v490 = vadd.f32 0.0, %v489
        %v491 = vpop.f32.mrb[0].mxu0
        %492 = vmatprep.mubr.f32.mxu0 0.0
        %493 = vmatmul.mubr.f32.gmra.mrb[0].mxu0 %v401
        %v494 = vpop.f32.mrb[0].mxu0
        %v495 = vadd.f32 0.0, %v494
        %v496 = vpop.f32.mrb[0].mxu0
        %497 = vmatprep.mubr.f32.mxu0 0.0
        %498 = vmatmul.mubr.f32.gmra.mrb[0].mxu0 %v404
        %v499 = vpop.f32.mrb[0].mxu0
        %v500 = vadd.f32 0.0, %v499
        %v501 = vpop.f32.mrb[0].mxu0
        %502 = vmatprep.mubr.f32.mxu0 0.0
        %503 = vmatmul.mubr.f32.gmra.mrb[0].mxu0 %v407
        %v504 = vpop.f32.mrb[0].mxu0
        %v505 = vadd.f32 0.0, %v504
        %v506 = vpop.f32.mrb[0].mxu0
        %507 = vmatprep.mubr.f32.mxu0 0.0
        %508 = vmatmul.mubr.f32.gmra.mrb[0].mxu0 %v410
        %v509 = vpop.f32.mrb[0].mxu0
        %v510 = vadd.f32 0.0, %v509
        %v511 = vpop.f32.mrb[0].mxu0
        %512 = vmatprep.mubr.f32.mxu0 0.0
        %513 = vmatmul.mubr.f32.gmra.mrb[0].mxu0 %v413
        %v514 = vpop.f32.mrb[0].mxu0
        %v515 = vadd.f32 0.0, %v514
        %v516 = vpop.f32.mrb[0].mxu0
        %517 = vmatprep.mubr.f32.mxu0 0.0
        %518 = vmatmul.mubr.f32.gmra.mrb[0].mxu0 %v416
        %v519 = vpop.f32.mrb[0].mxu0
        %v520 = vadd.f32 0.0, %v519
        %v521 = vpop.f32.mrb[0].mxu0
        %522 = vdwg.mxu0
        %523 = vmatprep.subr.mxu0 0.0
        %524 = vmatpush1.msra.mxu0 %v363
        %525 = vmatprep.subr.mxu0 0.0
        %526 = vmatpush1.msra.mxu0 %v366
        %527 = vmatprep.subr.mxu0 0.0
        %528 = vmatpush1.msra.mxu0 %v369
        %529 = vmatprep.subr.mxu0 0.0
        %530 = vmatpush1.msra.mxu0 %v372
        %531 = vmatprep.subr.mxu0 0.0
        %532 = vmatpush1.msra.mxu0 %v375
        %533 = vmatprep.subr.mxu0 0.0
        %534 = vmatpush1.msra.mxu0 %v378
        %535 = vmatprep.subr.mxu0 0.0
        %536 = vmatpush1.msra.mxu0 %v381
        %537 = vmatprep.subr.mxu0 0.0
        %538 = vmatpush1.msra.mxu0 %v384
        %539 = vmatprep.subr.mxu0 0.0
        %540 = vmatpush1.msra.mxu0 0.0
        %541 = vmatprep.subr.mxu0 0.0
        %542 = vmatpush1.msra.mxu0 0.0
        %543 = vmatprep.subr.mxu0 0.0
        %544 = vmatpush1.msra.mxu0 0.0
        %545 = vmatprep.subr.mxu0 0.0
        %546 = vmatpush1.msra.mxu0 0.0
        %547 = vmatprep.subr.mxu0 0.0
        %548 = vmatpush1.msra.mxu0 0.0
        %549 = vmatprep.subr.mxu0 0.0
        %550 = vmatpush1.msra.mxu0 0.0
        %551 = vmatprep.subr.mxu0 0.0
        %552 = vmatpush1.msra.mxu0 0.0
        %553 = vmatprep.subr.mxu0 0.0
        %554 = vmatpush1.msra.mxu0 0.0
        %555 = vmatprep.subr.mxu0 0.0
        %556 = vmatpush1.msra.mxu0 0.0
        %557 = vmatprep.subr.mxu0 0.0
        %558 = vmatpush1.msra.mxu0 0.0
        %559 = vmatprep.subr.mxu0 0.0
        %560 = vmatpush1.msra.mxu0 0.0
        %561 = vmatprep.subr.mxu0 0.0
        %562 = vmatpush1.msra.mxu0 0.0
        %563 = vmatprep.subr.mxu0 0.0
        %564 = vmatpush1.msra.mxu0 0.0
        %565 = vmatprep.subr.mxu0 0.0
        %566 = vmatpush1.msra.mxu0 0.0
        %567 = vmatprep.subr.mxu0 0.0
        %568 = vmatpush1.msra.mxu0 0.0
        %569 = vmatprep.subr.mxu0 0.0
        %570 = vmatpush1.msra.mxu0 0.0
        %571 = vmatprep.subr.mxu0 0.0
        %572 = vmatpush1.msra.mxu0 0.0
        %573 = vmatprep.subr.mxu0 0.0
        %574 = vmatpush1.msra.mxu0 0.0
        %575 = vmatprep.subr.mxu0 0.0
        %576 = vmatpush1.msra.mxu0 0.0
        %577 = vmatprep.subr.mxu0 0.0
        %578 = vmatpush1.msra.mxu0 0.0
        %579 = vmatprep.subr.mxu0 0.0
        %580 = vmatpush1.msra.mxu0 0.0
        %581 = vmatprep.subr.mxu0 0.0
        %582 = vmatpush1.msra.mxu0 0.0
        %583 = vmatprep.subr.mxu0 0.0
        %584 = vmatpush1.msra.mxu0 0.0
        %585 = vmatprep.subr.mxu0 0.0
        %586 = vmatpush1.msra.mxu0 0.0
        %587 = vmatprep.mubr.f32.mxu0 0.0
        %588 = vmatmul.mubr.f32.gmra.mrb[0].mxu0 %v395
        %v589 = vpop.f32.mrb[0].mxu0
        %v590 = vadd.f32 0.0, %v589
        %v591 = vpop.f32.mrb[0].mxu0
        %592 = vmatprep.mubr.f32.mxu0 0.0
        %593 = vmatmul.mubr.f32.gmra.mrb[0].mxu0 %v398
        %v594 = vpop.f32.mrb[0].mxu0
        %v595 = vadd.f32 0.0, %v594
        %v596 = vpop.f32.mrb[0].mxu0
        %597 = vmatprep.mubr.f32.mxu0 0.0
        %598 = vmatmul.mubr.f32.gmra.mrb[0].mxu0 %v401
        %v599 = vpop.f32.mrb[0].mxu0
        %v600 = vadd.f32 0.0, %v599
        %v601 = vpop.f32.mrb[0].mxu0
        %602 = vmatprep.mubr.f32.mxu0 0.0
        %603 = vmatmul.mubr.f32.gmra.mrb[0].mxu0 %v404
        %v604 = vpop.f32.mrb[0].mxu0
        %v605 = vadd.f32 0.0, %v604
        %v606 = vpop.f32.mrb[0].mxu0
        %607 = vmatprep.mubr.f32.mxu0 0.0
        %608 = vmatmul.mubr.f32.gmra.mrb[0].mxu0 %v407
        %v609 = vpop.f32.mrb[0].mxu0
        %v610 = vadd.f32 0.0, %v609
        %v611 = vpop.f32.mrb[0].mxu0
        %612 = vmatprep.mubr.f32.mxu0 0.0
        %613 = vmatmul.mubr.f32.gmra.mrb[0].mxu0 %v410
        %v614 = vpop.f32.mrb[0].mxu0
        %v615 = vadd.f32 0.0, %v614
        %v616 = vpop.f32.mrb[0].mxu0
        %617 = vmatprep.mubr.f32.mxu0 0.0
        %618 = vmatmul.mubr.f32.gmra.mrb[0].mxu0 %v413
        %v619 = vpop.f32.mrb[0].mxu0
        %v620 = vadd.f32 0.0, %v619
        %v621 = vpop.f32.mrb[0].mxu0
        %622 = vmatprep.mubr.f32.mxu0 0.0
        %623 = vmatmul.mubr.f32.gmra.mrb[0].mxu0 %v416
        %v624 = vpop.f32.mrb[0].mxu0
        %v625 = vadd.f32 0.0, %v624
        %v626 = vpop.f32.mrb[0].mxu0
        %627 = vdwg.mxu0
        %v628 = vmul.f32 %v485, %v485
        %v629 = vmul.f32 %v490, %v490
        %v630 = vmul.f32 %v495, %v495
        %v631 = vmul.f32 %v500, %v500
        %v632 = vmul.f32 %v505, %v505
        %v633 = vmul.f32 %v510, %v510
        %v634 = vmul.f32 %v515, %v515
        %v635 = vmul.f32 %v520, %v520
        %v636 = vsub.f32 %v590, %v628
        %v637 = vsub.f32 %v595, %v629
        %v638 = vsub.f32 %v600, %v630
        %v639 = vsub.f32 %v605, %v631
        %v640 = vsub.f32 %v610, %v632
        %v641 = vsub.f32 %v615, %v633
        %v642 = vsub.f32 %v620, %v634
        %v643 = vsub.f32 %v625, %v635
        %v644 = vadd.f32 %v636, 1e-05
        %v645 = vadd.f32 %v637, 1e-05
        %v646 = vadd.f32 %v638, 1e-05
        %v647 = vadd.f32 %v639, 1e-05
        %v648 = vadd.f32 %v640, 1e-05
        %v649 = vadd.f32 %v641, 1e-05
        %v650 = vadd.f32 %v642, 1e-05
        %v651 = vadd.f32 %v643, 1e-05
        %v652 = vrsqrt.pop %v644
        %v653 = vrsqrt.pop %v645
        %v654 = vrsqrt.pop %v646
        %v655 = vrsqrt.pop %v647
        %v656 = vrsqrt.pop %v648
        %v657 = vrsqrt.pop %v649
        %v658 = vrsqrt.pop %v650
        %v659 = vrsqrt.pop %v651
        %v660 = vld [vmem:[%s2] sm:$0xff]
        %v661 = vld [vmem:[%s2 + $0x8] sm:$0xff]
        %v662 = vld [vmem:[%s2 + $0x10] sm:$0xff]
        %v663 = vld [vmem:[%s2 + $0x18] sm:$0xff]
        %v664 = vld [vmem:[%s2 + $0x20] sm:$0xff]
        %v665 = vld [vmem:[%s2 + $0x28] sm:$0xff]
        %v666 = vld [vmem:[%s2 + $0x30] sm:$0xff]
        %v667 = vld [vmem:[%s2 + $0x38] sm:$0xff]
        %v668 = vmul.f32 %v652, %v660
        %v669 = vmul.f32 %v653, %v661
        %v670 = vmul.f32 %v654, %v662
        %v671 = vmul.f32 %v655, %v663
        %v672 = vmul.f32 %v656, %v664
        %v673 = vmul.f32 %v657, %v665
        %v674 = vmul.f32 %v658, %v666
        %v675 = vmul.f32 %v659, %v667
        %v676 = vld [vmem:[%s3] sm:$0xff]
        %v677 = vld [vmem:[%s3 + $0x8] sm:$0xff]
        %v678 = vld [vmem:[%s3 + $0x10] sm:$0xff]
        %v679 = vld [vmem:[%s3 + $0x18] sm:$0xff]
        %v680 = vld [vmem:[%s3 + $0x20] sm:$0xff]
        %v681 = vld [vmem:[%s3 + $0x28] sm:$0xff]
        %v682 = vld [vmem:[%s3 + $0x30] sm:$0xff]
        %v683 = vld [vmem:[%s3 + $0x38] sm:$0xff]
        %v684 = vmul.f32 %v485, %v668
        %v685 = vmul.f32 %v490, %v669
        %v686 = vmul.f32 %v495, %v670
        %v687 = vmul.f32 %v500, %v671
        %v688 = vmul.f32 %v505, %v672
        %v689 = vmul.f32 %v510, %v673
        %v690 = vmul.f32 %v515, %v674
        %v691 = vmul.f32 %v520, %v675
        %v692 = vsub.f32 %v676, %v684
        %v693 = vsub.f32 %v677, %v685
        %v694 = vsub.f32 %v678, %v686
        %v695 = vsub.f32 %v679, %v687
        %v696 = vsub.f32 %v680, %v688
        %v697 = vsub.f32 %v681, %v689
        %v698 = vsub.f32 %v682, %v690
        %v699 = vsub.f32 %v683, %v691
        %701 = vset.pattern.permute.xlu0 0
        %702 = vperm.xlu0 %701, %v668
        %v703 = vpop.permute.xlu0 %702
        %706 = vset.pattern.permute.xlu0 0
        %707 = vperm.xlu0 %706, %v669
        %v708 = vpop.permute.xlu0 %707
        %711 = vset.pattern.permute.xlu0 0
        %712 = vperm.xlu0 %711, %v670
        %v713 = vpop.permute.xlu0 %712
        %716 = vset.pattern.permute.xlu0 0
        %717 = vperm.xlu0 %716, %v671
        %v718 = vpop.permute.xlu0 %717
        %721 = vset.pattern.permute.xlu0 0
        %722 = vperm.xlu0 %721, %v672
        %v723 = vpop.permute.xlu0 %722
        %726 = vset.pattern.permute.xlu0 0
        %727 = vperm.xlu0 %726, %v673
        %v728 = vpop.permute.xlu0 %727
        %731 = vset.pattern.permute.xlu0 0
        %732 = vperm.xlu0 %731, %v674
        %v733 = vpop.permute.xlu0 %732
        %736 = vset.pattern.permute.xlu0 0
        %737 = vperm.xlu0 %736, %v675
        %v738 = vpop.permute.xlu0 %737
        %v740 = vmul.f32 %v305, %v703
        %v741 = vmul.f32 %v306, %v703
        %v742 = vmul.f32 %v307, %v708
        %v743 = vmul.f32 %v308, %v708
        %v744 = vmul.f32 %v309, %v713
        %v745 = vmul.f32 %v310, %v713
        %v746 = vmul.f32 %v311, %v718
        %v747 = vmul.f32 %v312, %v718
        %v748 = vmul.f32 %v313, %v723
        %v749 = vmul.f32 %v314, %v723
        %v750 = vmul.f32 %v315, %v728
        %v751 = vmul.f32 %v316, %v728
        %v752 = vmul.f32 %v317, %v733
        %v753 = vmul.f32 %v318, %v733
        %v754 = vmul.f32 %v319, %v738
        %v755 = vmul.f32 %v320, %v738
        %757 = vset.pattern.permute.xlu0 0
        %758 = vperm.xlu0 %757, %v692
        %v759 = vpop.permute.xlu0 %758
        %762 = vset.pattern.permute.xlu0 0
        %763 = vperm.xlu0 %762, %v693
        %v764 = vpop.permute.xlu0 %763
        %767 = vset.pattern.permute.xlu0 0
        %768 = vperm.xlu0 %767, %v694
        %v769 = vpop.permute.xlu0 %768
        %772 = vset.pattern.permute.xlu0 0
        %773 = vperm.xlu0 %772, %v695
        %v774 = vpop.permute.xlu0 %773
        %777 = vset.pattern.permute.xlu0 0
        %778 = vperm.xlu0 %777, %v696
        %v779 = vpop.permute.xlu0 %778
        %782 = vset.pattern.permute.xlu0 0
        %783 = vperm.xlu0 %782, %v697
        %v784 = vpop.permute.xlu0 %783
        %787 = vset.pattern.permute.xlu0 0
        %788 = vperm.xlu0 %787, %v698
        %v789 = vpop.permute.xlu0 %788
        %792 = vset.pattern.permute.xlu0 0
        %793 = vperm.xlu0 %792, %v699
        %v794 = vpop.permute.xlu0 %793
        %v796 = vadd.f32 %v740, %v759
        %v797 = vadd.f32 %v741, %v759
        %v798 = vadd.f32 %v742, %v764
        %v799 = vadd.f32 %v743, %v764
        %v800 = vadd.f32 %v744, %v769
        %v801 = vadd.f32 %v745, %v769
        %v802 = vadd.f32 %v746, %v774
        %v803 = vadd.f32 %v747, %v774
        %v804 = vadd.f32 %v748, %v779
        %v805 = vadd.f32 %v749, %v779
        %v806 = vadd.f32 %v750, %v784
        %v807 = vadd.f32 %v751, %v784
        %v808 = vadd.f32 %v752, %v789
        %v809 = vadd.f32 %v753, %v789
        %v810 = vadd.f32 %v754, %v794
        %v811 = vadd.f32 %v755, %v794
        %v812 = vpack.c.bf16 %v798, %v796
        %v813 = vpack.c.bf16 %v799, %v797
        %v814 = vpack.c.bf16 %v802, %v800
        %v815 = vpack.c.bf16 %v803, %v801
        %v816 = vpack.c.bf16 %v806, %v804
        %v817 = vpack.c.bf16 %v807, %v805
        %v818 = vpack.c.bf16 %v810, %v808
        %v819 = vpack.c.bf16 %v811, %v809
        %v820 = vld [vmem:[%s4] sm:$0xf]
        %v821 = vld [vmem:[%s4 + $0x4] sm:$0xf]
        %v822 = vld [vmem:[%s4 + $0x8] sm:$0xf]
        %v823 = vld [vmem:[%s4 + $0xc] sm:$0xf]
        %v824 = vld [vmem:[%s4 + $0x10] sm:$0xf]
        %v825 = vld [vmem:[%s4 + $0x14] sm:$0xf]
        %v826 = vld [vmem:[%s4 + $0x18] sm:$0xf]
        %v827 = vld [vmem:[%s4 + $0x1c] sm:$0xf]
        %v828 = vld [vmem:[%s4 + $0x20] sm:$0xf]
        %v829 = vld [vmem:[%s4 + $0x24] sm:$0xf]
        %v830 = vld [vmem:[%s4 + $0x28] sm:$0xf]
        %v831 = vld [vmem:[%s4 + $0x2c] sm:$0xf]
        %v832 = vld [vmem:[%s4 + $0x30] sm:$0xf]
        %v833 = vld [vmem:[%s4 + $0x34] sm:$0xf]
        %v834 = vld [vmem:[%s4 + $0x38] sm:$0xf]
        %v835 = vld [vmem:[%s4 + $0x3c] sm:$0xf]
        %v836 = vld [vmem:[%s4 + $0x40] sm:$0xf]
        %v837 = vld [vmem:[%s4 + $0x44] sm:$0xf]
        %v838 = vld [vmem:[%s4 + $0x48] sm:$0xf]
        %v839 = vld [vmem:[%s4 + $0x4c] sm:$0xf]
        %v840 = vld [vmem:[%s4 + $0x50] sm:$0xf]
        %v841 = vld [vmem:[%s4 + $0x54] sm:$0xf]
        %v842 = vld [vmem:[%s4 + $0x58] sm:$0xf]
        %v843 = vld [vmem:[%s4 + $0x5c] sm:$0xf]
        %v844 = vld [vmem:[%s5] sm:$0xff]
        %v845 = vld [vmem:[%s5 + $0x8] sm:$0xff]
        %v846 = vld [vmem:[%s5 + $0x10] sm:$0xff]
        %v847 = vld [vmem:[%s5 + $0x18] sm:$0xff]
        %v848 = vld [vmem:[%s5 + $0x20] sm:$0xff]
        %v849 = vld [vmem:[%s5 + $0x28] sm:$0xff]
        %v850 = vld [vmem:[%s5 + $0x30] sm:$0xff]
        %v851 = vld [vmem:[%s5 + $0x38] sm:$0xff]
        %v852 = vld [vmem:[%s5 + $0x40] sm:$0xff]
        %v853 = vld [vmem:[%s5 + $0x48] sm:$0xff]
        %v854 = vld [vmem:[%s5 + $0x50] sm:$0xff]
        %v855 = vld [vmem:[%s5 + $0x58] sm:$0xff]
        %v856 = vld [vmem:[%s5 + $0x60] sm:$0xff]
        %v857 = vld [vmem:[%s5 + $0x68] sm:$0xff]
        %v858 = vld [vmem:[%s5 + $0x70] sm:$0xff]
        %v859 = vld [vmem:[%s5 + $0x78] sm:$0xff]
        %v860 = vld [vmem:[%s5 + $0x80] sm:$0xff]
        %v861 = vld [vmem:[%s5 + $0x88] sm:$0xff]
        %v862 = vld [vmem:[%s5 + $0x90] sm:$0xff]
        %v863 = vld [vmem:[%s5 + $0x98] sm:$0xff]
        %v864 = vld [vmem:[%s5 + $0xa0] sm:$0xff]
        %v865 = vld [vmem:[%s5 + $0xa8] sm:$0xff]
        %v866 = vld [vmem:[%s5 + $0xb0] sm:$0xff]
        %v867 = vld [vmem:[%s5 + $0xb8] sm:$0xff]
        %869 = vset.pattern.permute.xlu0 0
        %870 = vperm.xlu0 %869, %v844
        %v871 = vpop.permute.xlu0 %870
        %874 = vset.pattern.permute.xlu0 0
        %875 = vperm.xlu0 %874, %v845
        %v876 = vpop.permute.xlu0 %875
        %879 = vset.pattern.permute.xlu0 0
        %880 = vperm.xlu0 %879, %v846
        %v881 = vpop.permute.xlu0 %880
        %884 = vset.pattern.permute.xlu0 0
        %885 = vperm.xlu0 %884, %v847
        %v886 = vpop.permute.xlu0 %885
        %889 = vset.pattern.permute.xlu0 0
        %890 = vperm.xlu0 %889, %v848
        %v891 = vpop.permute.xlu0 %890
        %894 = vset.pattern.permute.xlu0 0
        %895 = vperm.xlu0 %894, %v849
        %v896 = vpop.permute.xlu0 %895
        %899 = vset.pattern.permute.xlu0 0
        %900 = vperm.xlu0 %899, %v850
        %v901 = vpop.permute.xlu0 %900
        %904 = vset.pattern.permute.xlu0 0
        %905 = vperm.xlu0 %904, %v851
        %v906 = vpop.permute.xlu0 %905
        %909 = vset.pattern.permute.xlu0 0
        %910 = vperm.xlu0 %909, %v852
        %v911 = vpop.permute.xlu0 %910
        %914 = vset.pattern.permute.xlu0 0
        %915 = vperm.xlu0 %914, %v853
        %v916 = vpop.permute.xlu0 %915
        %919 = vset.pattern.permute.xlu0 0
        %920 = vperm.xlu0 %919, %v854
        %v921 = vpop.permute.xlu0 %920
        %924 = vset.pattern.permute.xlu0 0
        %925 = vperm.xlu0 %924, %v855
        %v926 = vpop.permute.xlu0 %925
        %929 = vset.pattern.permute.xlu0 0
        %930 = vperm.xlu0 %929, %v856
        %v931 = vpop.permute.xlu0 %930
        %934 = vset.pattern.permute.xlu0 0
        %935 = vperm.xlu0 %934, %v857
        %v936 = vpop.permute.xlu0 %935
        %939 = vset.pattern.permute.xlu0 0
        %940 = vperm.xlu0 %939, %v858
        %v941 = vpop.permute.xlu0 %940
        %944 = vset.pattern.permute.xlu0 0
        %945 = vperm.xlu0 %944, %v859
        %v946 = vpop.permute.xlu0 %945
        %949 = vset.pattern.permute.xlu0 0
        %950 = vperm.xlu0 %949, %v860
        %v951 = vpop.permute.xlu0 %950
        %954 = vset.pattern.permute.xlu0 0
        %955 = vperm.xlu0 %954, %v861
        %v956 = vpop.permute.xlu0 %955
        %959 = vset.pattern.permute.xlu0 0
        %960 = vperm.xlu0 %959, %v862
        %v961 = vpop.permute.xlu0 %960
        %964 = vset.pattern.permute.xlu0 0
        %965 = vperm.xlu0 %964, %v863
        %v966 = vpop.permute.xlu0 %965
        %969 = vset.pattern.permute.xlu0 0
        %970 = vperm.xlu0 %969, %v864
        %v971 = vpop.permute.xlu0 %970
        %974 = vset.pattern.permute.xlu0 0
        %975 = vperm.xlu0 %974, %v865
        %v976 = vpop.permute.xlu0 %975
        %979 = vset.pattern.permute.xlu0 0
        %980 = vperm.xlu0 %979, %v866
        %v981 = vpop.permute.xlu0 %980
        %984 = vset.pattern.permute.xlu0 0
        %985 = vperm.xlu0 %984, %v867
        %v986 = vpop.permute.xlu0 %985
        %v1012 = vunpack.c.l.b16 %v820
        %v1013 = vunpack.c.l.b16 %v821
        %v1014 = vunpack.c.l.b16 %v822
        %v1015 = vunpack.c.l.b16 %v823
        %v1016 = vunpack.c.l.b16 %v824
        %v1017 = vunpack.c.l.b16 %v825
        %v1018 = vunpack.c.l.b16 %v826
        %v1019 = vunpack.c.l.b16 %v827
        %v1020 = vunpack.c.l.b16 %v828
        %v1021 = vunpack.c.l.b16 %v829
        %v1022 = vunpack.c.l.b16 %v830
        %v1023 = vunpack.c.l.b16 %v831
        %v1024 = vunpack.c.l.b16 %v832
        %v1025 = vunpack.c.l.b16 %v833
        %v1026 = vunpack.c.l.b16 %v834
        %v1027 = vunpack.c.l.b16 %v835
        %v1028 = vunpack.c.l.b16 %v836
        %v1029 = vunpack.c.l.b16 %v837
        %v1030 = vunpack.c.l.b16 %v838
        %v1031 = vunpack.c.l.b16 %v839
        %v1032 = vunpack.c.l.b16 %v840
        %v1033 = vunpack.c.l.b16 %v841
        %v1034 = vunpack.c.l.b16 %v842
        %v1035 = vunpack.c.l.b16 %v843
        %v1036 = vpack.c.b16 %v1013, %v1012
        %v1037 = vpack.c.b16 %v1015, %v1014
        %v1038 = vpack.c.b16 %v1017, %v1016
        %v1039 = vpack.c.b16 %v1019, %v1018
        %v1040 = vpack.c.b16 %v1021, %v1020
        %v1041 = vpack.c.b16 %v1023, %v1022
        %v1042 = vpack.c.b16 %v1025, %v1024
        %v1043 = vpack.c.b16 %v1027, %v1026
        %v1044 = vpack.c.b16 %v1029, %v1028
        %v1045 = vpack.c.b16 %v1031, %v1030
        %v1046 = vpack.c.b16 %v1033, %v1032
        %v1047 = vpack.c.b16 %v1035, %v1034
        %v1049 = vsel %vm393, %v1036, 0
        %v1052 = vsel %vm393, %v1037, 0
        %v1055 = vsel %vm393, %v1038, 0
        %v1058 = vsel %vm393, %v1039, 0
        %v1061 = vsel %vm393, %v1040, 0
        %v1064 = vsel %vm393, %v1041, 0
        %v1067 = vsel %vm393, %v1042, 0
        %v1070 = vsel %vm393, %v1043, 0
        %v1073 = vsel %vm393, %v1044, 0
        %v1076 = vsel %vm393, %v1045, 0
        %v1079 = vsel %vm393, %v1046, 0
        %v1082 = vsel %vm393, %v1047, 0
        %1084 = vmatprep.subr.bf16.mxu0 %v813
        %1085 = vmatpush1.bf16.msra.mxu0 %v812
        %1086 = vmatprep.subr.bf16.mxu0 %v815
        %1087 = vmatpush1.bf16.msra.mxu0 %v814
        %1088 = vmatprep.subr.bf16.mxu0 %v817
        %1089 = vmatpush1.bf16.msra.mxu0 %v816
        %1090 = vmatprep.subr.bf16.mxu0 %v819
        %1091 = vmatpush1.bf16.msra.mxu0 %v818
        %1092 = vmatprep.subr.bf16.mxu0 0
        %1093 = vmatpush1.bf16.msra.mxu0 0
        %1094 = vmatprep.subr.bf16.mxu0 0
        %1095 = vmatpush1.bf16.msra.mxu0 0
        %1096 = vmatprep.subr.bf16.mxu0 0
        %1097 = vmatpush1.bf16.msra.mxu0 0
        %1098 = vmatprep.subr.bf16.mxu0 0
        %1099 = vmatpush1.bf16.msra.mxu0 0
        %1100 = vmatprep.subr.bf16.mxu0 0
        %1101 = vmatpush1.bf16.msra.mxu0 0
        %1102 = vmatprep.subr.bf16.mxu0 0
        %1103 = vmatpush1.bf16.msra.mxu0 0
        %1104 = vmatprep.subr.bf16.mxu0 0
        %1105 = vmatpush1.bf16.msra.mxu0 0
        %1106 = vmatprep.subr.bf16.mxu0 0
        %1107 = vmatpush1.bf16.msra.mxu0 0
        %1108 = vmatprep.subr.bf16.mxu0 0
        %1109 = vmatpush1.bf16.msra.mxu0 0
        %1110 = vmatprep.subr.bf16.mxu0 0
        %1111 = vmatpush1.bf16.msra.mxu0 0
        %1112 = vmatprep.subr.bf16.mxu0 0
        %1113 = vmatpush1.bf16.msra.mxu0 0
        %1114 = vmatprep.subr.bf16.mxu0 0
        %1115 = vmatpush1.bf16.msra.mxu0 0
        %1116 = vmatprep.mubr.bf16.mxu0 0
        %1117 = vmatmul.mubr.bf16.gmra.mrb[0].mxu0 %v1049
        %v1118 = vpop.f32.mrb[0].mxu0
        %v1119 = vadd.f32 %v871, %v1118
        %v1120 = vpop.f32.mrb[0].mxu0
        %v1121 = vadd.f32 %v871, %v1120
        %v1122 = vpop.f32.mrb[0].mxu0
        %v1123 = vadd.f32 %v876, %v1122
        %v1124 = vpop.f32.mrb[0].mxu0
        %v1125 = vadd.f32 %v876, %v1124
        %1126 = vmatprep.mubr.bf16.mxu0 0
        %1127 = vmatmul.mubr.bf16.gmra.mrb[0].mxu0 %v1052
        %v1128 = vpop.f32.mrb[0].mxu0
        %v1129 = vadd.f32 %v881, %v1128
        %v1130 = vpop.f32.mrb[0].mxu0
        %v1131 = vadd.f32 %v881, %v1130
        %v1132 = vpop.f32.mrb[0].mxu0
        %v1133 = vadd.f32 %v886, %v1132
        %v1134 = vpop.f32.mrb[0].mxu0
        %v1135 = vadd.f32 %v886, %v1134
        %1136 = vmatprep.mubr.bf16.mxu0 0
        %1137 = vmatmul.mubr.bf16.gmra.mrb[0].mxu0 %v1055
        %v1138 = vpop.f32.mrb[0].mxu0
        %v1139 = vadd.f32 %v891, %v1138
        %v1140 = vpop.f32.mrb[0].mxu0
        %v1141 = vadd.f32 %v891, %v1140
        %v1142 = vpop.f32.mrb[0].mxu0
        %v1143 = vadd.f32 %v896, %v1142
        %v1144 = vpop.f32.mrb[0].mxu0
        %v1145 = vadd.f32 %v896, %v1144
        %1146 = vmatprep.mubr.bf16.mxu0 0
        %1147 = vmatmul.mubr.bf16.gmra.mrb[0].mxu0 %v1058
        %v1148 = vpop.f32.mrb[0].mxu0
        %v1149 = vadd.f32 %v901, %v1148
        %v1150 = vpop.f32.mrb[0].mxu0
        %v1151 = vadd.f32 %v901, %v1150
        %v1152 = vpop.f32.mrb[0].mxu0
        %v1153 = vadd.f32 %v906, %v1152
        %v1154 = vpop.f32.mrb[0].mxu0
        %v1155 = vadd.f32 %v906, %v1154
        %1156 = vmatprep.mubr.bf16.mxu0 0
        %1157 = vmatmul.mubr.bf16.gmra.mrb[0].mxu0 %v1061
        %v1158 = vpop.f32.mrb[0].mxu0
        %v1159 = vadd.f32 %v911, %v1158
        %v1160 = vpop.f32.mrb[0].mxu0
        %v1161 = vadd.f32 %v911, %v1160
        %v1162 = vpop.f32.mrb[0].mxu0
        %v1163 = vadd.f32 %v916, %v1162
        %v1164 = vpop.f32.mrb[0].mxu0
        %v1165 = vadd.f32 %v916, %v1164
        %1166 = vmatprep.mubr.bf16.mxu0 0
        %1167 = vmatmul.mubr.bf16.gmra.mrb[0].mxu0 %v1064
        %v1168 = vpop.f32.mrb[0].mxu0
        %v1169 = vadd.f32 %v921, %v1168
        %v1170 = vpop.f32.mrb[0].mxu0
        %v1171 = vadd.f32 %v921, %v1170
        %v1172 = vpop.f32.mrb[0].mxu0
        %v1173 = vadd.f32 %v926, %v1172
        %v1174 = vpop.f32.mrb[0].mxu0
        %v1175 = vadd.f32 %v926, %v1174
        %1176 = vmatprep.mubr.bf16.mxu0 0
        %1177 = vmatmul.mubr.bf16.gmra.mrb[0].mxu0 %v1067
        %v1178 = vpop.f32.mrb[0].mxu0
        %v1179 = vadd.f32 %v931, %v1178
        %v1180 = vpop.f32.mrb[0].mxu0
        %v1181 = vadd.f32 %v931, %v1180
        %v1182 = vpop.f32.mrb[0].mxu0
        %v1183 = vadd.f32 %v936, %v1182
        %v1184 = vpop.f32.mrb[0].mxu0
        %v1185 = vadd.f32 %v936, %v1184
        %1186 = vmatprep.mubr.bf16.mxu0 0
        %1187 = vmatmul.mubr.bf16.gmra.mrb[0].mxu0 %v1070
        %v1188 = vpop.f32.mrb[0].mxu0
        %v1189 = vadd.f32 %v941, %v1188
        %v1190 = vpop.f32.mrb[0].mxu0
        %v1191 = vadd.f32 %v941, %v1190
        %v1192 = vpop.f32.mrb[0].mxu0
        %v1193 = vadd.f32 %v946, %v1192
        %v1194 = vpop.f32.mrb[0].mxu0
        %v1195 = vadd.f32 %v946, %v1194
        %1196 = vmatprep.mubr.bf16.mxu0 0
        %1197 = vmatmul.mubr.bf16.gmra.mrb[0].mxu0 %v1073
        %v1198 = vpop.f32.mrb[0].mxu0
        %v1199 = vadd.f32 %v951, %v1198
        %v1200 = vpop.f32.mrb[0].mxu0
        %v1201 = vadd.f32 %v951, %v1200
        %v1202 = vpop.f32.mrb[0].mxu0
        %v1203 = vadd.f32 %v956, %v1202
        %v1204 = vpop.f32.mrb[0].mxu0
        %v1205 = vadd.f32 %v956, %v1204
        %1206 = vmatprep.mubr.bf16.mxu0 0
        %1207 = vmatmul.mubr.bf16.gmra.mrb[0].mxu0 %v1076
        %v1208 = vpop.f32.mrb[0].mxu0
        %v1209 = vadd.f32 %v961, %v1208
        %v1210 = vpop.f32.mrb[0].mxu0
        %v1211 = vadd.f32 %v961, %v1210
        %v1212 = vpop.f32.mrb[0].mxu0
        %v1213 = vadd.f32 %v966, %v1212
        %v1214 = vpop.f32.mrb[0].mxu0
        %v1215 = vadd.f32 %v966, %v1214
        %1216 = vmatprep.mubr.bf16.mxu0 0
        %1217 = vmatmul.mubr.bf16.gmra.mrb[0].mxu0 %v1079
        %v1218 = vpop.f32.mrb[0].mxu0
        %v1219 = vadd.f32 %v971, %v1218
        %v1220 = vpop.f32.mrb[0].mxu0
        %v1221 = vadd.f32 %v971, %v1220
        %v1222 = vpop.f32.mrb[0].mxu0
        %v1223 = vadd.f32 %v976, %v1222
        %v1224 = vpop.f32.mrb[0].mxu0
        %v1225 = vadd.f32 %v976, %v1224
        %1226 = vmatprep.mubr.bf16.mxu0 0
        %1227 = vmatmul.mubr.bf16.gmra.mrb[0].mxu0 %v1082
        %v1228 = vpop.f32.mrb[0].mxu0
        %v1229 = vadd.f32 %v981, %v1228
        %v1230 = vpop.f32.mrb[0].mxu0
        %v1231 = vadd.f32 %v981, %v1230
        %v1232 = vpop.f32.mrb[0].mxu0
        %v1233 = vadd.f32 %v986, %v1232
        %v1234 = vpop.f32.mrb[0].mxu0
        %v1235 = vadd.f32 %v986, %v1234
        %1236 = vdwg.mxu0
        %v1237 = vpack.c.bf16 %v1123, %v1119
        %v1238 = vpack.c.bf16 %v1125, %v1121
        %v1239 = vpack.c.bf16 %v1133, %v1129
        %v1240 = vpack.c.bf16 %v1135, %v1131
        %v1241 = vpack.c.bf16 %v1143, %v1139
        %v1242 = vpack.c.bf16 %v1145, %v1141
        %v1243 = vpack.c.bf16 %v1153, %v1149
        %v1244 = vpack.c.bf16 %v1155, %v1151
        %v1245 = vpack.c.bf16 %v1163, %v1159
        %v1246 = vpack.c.bf16 %v1165, %v1161
        %v1247 = vpack.c.bf16 %v1173, %v1169
        %v1248 = vpack.c.bf16 %v1175, %v1171
        %v1249 = vpack.c.bf16 %v1183, %v1179
        %v1250 = vpack.c.bf16 %v1185, %v1181
        %v1251 = vpack.c.bf16 %v1193, %v1189
        %v1252 = vpack.c.bf16 %v1195, %v1191
        %v1253 = vpack.c.bf16 %v1203, %v1199
        %v1254 = vpack.c.bf16 %v1205, %v1201
        %v1255 = vpack.c.bf16 %v1213, %v1209
        %v1256 = vpack.c.bf16 %v1215, %v1211
        %v1257 = vpack.c.bf16 %v1223, %v1219
        %v1258 = vpack.c.bf16 %v1225, %v1221
        %v1259 = vpack.c.bf16 %v1233, %v1229
        %v1260 = vpack.c.bf16 %v1235, %v1231
        %1261 = vxpose.xlu0.c.b16.start [1/8] %v1237, 128
        %1262 = vxpose.xlu0.c.b16.cont [2/8] %v1239, 128
        %1263 = vxpose.xlu0.c.b16.cont [3/8] 0, 128
        %1264 = vxpose.xlu0.c.b16.cont [4/8] 0, 128
        %1265 = vxpose.xlu0.c.b16.cont [5/8] 0, 128
        %1266 = vxpose.xlu0.c.b16.cont [6/8] 0, 128
        %1267 = vxpose.xlu0.c.b16.cont [7/8] 0, 128
        %1268 = vxpose.xlu0.c.b16.end [8/8] 0, 128
        %v1269 = vpop.trf.xlu0
        %v1270 = vpop.trf.xlu0
        %v1271 = vpop.trf.xlu0
        %v1272 = vpop.trf.xlu0
        %v1273 = vpop.trf.xlu0
        %v1274 = vpop.trf.xlu0
        %v1275 = vpop.trf.xlu0
        %v1276 = vpop.trf.xlu0
        %1277 = vxpose.xlu0.c.b16.start [1/8] %v1238, 128
        %1278 = vxpose.xlu0.c.b16.cont [2/8] %v1240, 128
        %1279 = vxpose.xlu0.c.b16.cont [3/8] 0, 128
        %1280 = vxpose.xlu0.c.b16.cont [4/8] 0, 128
        %1281 = vxpose.xlu0.c.b16.cont [5/8] 0, 128
        %1282 = vxpose.xlu0.c.b16.cont [6/8] 0, 128
        %1283 = vxpose.xlu0.c.b16.cont [7/8] 0, 128
        %1284 = vxpose.xlu0.c.b16.end [8/8] 0, 128
        %v1285 = vpop.trf.xlu0
        %v1286 = vpop.trf.xlu0
        %v1287 = vpop.trf.xlu0
        %v1288 = vpop.trf.xlu0
        %v1289 = vpop.trf.xlu0
        %v1290 = vpop.trf.xlu0
        %v1291 = vpop.trf.xlu0
        %v1292 = vpop.trf.xlu0
        %vm1293 = vcmask 261120
        %v1295 = vsel %vm1293, %v1269, 0
        %v1298 = vsel %vm1293, %v1270, 0
        %v1301 = vsel %vm1293, %v1271, 0
        %v1304 = vsel %vm1293, %v1272, 0
        %v1307 = vsel %vm1293, %v1273, 0
        %v1310 = vsel %vm1293, %v1274, 0
        %v1313 = vsel %vm1293, %v1275, 0
        %v1316 = vsel %vm1293, %v1276, 0
        %v1319 = vsel %vm1293, %v1285, 0
        %v1322 = vsel %vm1293, %v1286, 0
        %v1325 = vsel %vm1293, %v1287, 0
        %v1328 = vsel %vm1293, %v1288, 0
        %v1331 = vsel %vm1293, %v1289, 0
        %v1334 = vsel %vm1293, %v1290, 0
        %v1337 = vsel %vm1293, %v1291, 0
        %v1340 = vsel %vm1293, %v1292, 0
        %1342 = vmatprep.subr.bf16.mxu0 %v1246
        %1343 = vmatpush1.bf16.msra.mxu0 %v1245
        %1344 = vmatprep.subr.bf16.mxu0 %v1248
        %1345 = vmatpush1.bf16.msra.mxu0 %v1247
        %1346 = vmatprep.subr.bf16.mxu0 0
        %1347 = vmatpush1.bf16.msra.mxu0 0
        %1348 = vmatprep.subr.bf16.mxu0 0
        %1349 = vmatpush1.bf16.msra.mxu0 0
        %1350 = vmatprep.subr.bf16.mxu0 0
        %1351 = vmatpush1.bf16.msra.mxu0 0
        %1352 = vmatprep.subr.bf16.mxu0 0
        %1353 = vmatpush1.bf16.msra.mxu0 0
        %1354 = vmatprep.subr.bf16.mxu0 0
        %1355 = vmatpush1.bf16.msra.mxu0 0
        %1356 = vmatprep.subr.bf16.mxu0 0
        %1357 = vmatpush1.bf16.msra.mxu0 0
        %1358 = vmatprep.subr.bf16.mxu0 0
        %1359 = vmatpush1.bf16.msra.mxu0 0
        %1360 = vmatprep.subr.bf16.mxu0 0
        %1361 = vmatpush1.bf16.msra.mxu0 0
        %1362 = vmatprep.subr.bf16.mxu0 0
        %1363 = vmatpush1.bf16.msra.mxu0 0
        %1364 = vmatprep.subr.bf16.mxu0 0
        %1365 = vmatpush1.bf16.msra.mxu0 0
        %1366 = vmatprep.subr.bf16.mxu0 0
        %1367 = vmatpush1.bf16.msra.mxu0 0
        %1368 = vmatprep.subr.bf16.mxu0 0
        %1369 = vmatpush1.bf16.msra.mxu0 0
        %1370 = vmatprep.subr.bf16.mxu0 0
        %1371 = vmatpush1.bf16.msra.mxu0 0
        %1372 = vmatprep.subr.bf16.mxu0 0
        %1373 = vmatpush1.bf16.msra.mxu0 0
        %1374 = vmatprep.mubr.bf16.mxu0 0
        %1375 = vmatmul.mubr.bf16.gmra.mrb[0].mxu0 %v1295
        %v1376 = vpop.f32.mrb[0].mxu0
        %v1377 = vadd.f32 0.0, %v1376
        %v1378 = vpop.f32.mrb[0].mxu0
        %v1379 = vadd.f32 0.0, %v1378
        %v1380 = vpop.f32.mrb[0].mxu0
        %v1381 = vadd.f32 0.0, %v1380
        %v1382 = vpop.f32.mrb[0].mxu0
        %v1383 = vadd.f32 0.0, %v1382
        %1384 = vmatprep.mubr.bf16.mxu0 0
        %1385 = vmatmul.mubr.bf16.gmra.mrb[0].mxu0 %v1298
        %v1386 = vpop.f32.mrb[0].mxu0
        %v1387 = vadd.f32 0.0, %v1386
        %v1388 = vpop.f32.mrb[0].mxu0
        %v1389 = vadd.f32 0.0, %v1388
        %v1390 = vpop.f32.mrb[0].mxu0
        %v1391 = vadd.f32 0.0, %v1390
        %v1392 = vpop.f32.mrb[0].mxu0
        %v1393 = vadd.f32 0.0, %v1392
        %1394 = vmatprep.mubr.bf16.mxu0 0
        %1395 = vmatmul.mubr.bf16.gmra.mrb[0].mxu0 %v1301
        %v1396 = vpop.f32.mrb[0].mxu0
        %v1397 = vadd.f32 0.0, %v1396
        %v1398 = vpop.f32.mrb[0].mxu0
        %v1399 = vadd.f32 0.0, %v1398
        %v1400 = vpop.f32.mrb[0].mxu0
        %v1401 = vadd.f32 0.0, %v1400
        %v1402 = vpop.f32.mrb[0].mxu0
        %v1403 = vadd.f32 0.0, %v1402
        %1404 = vmatprep.mubr.bf16.mxu0 0
        %1405 = vmatmul.mubr.bf16.gmra.mrb[0].mxu0 %v1304
        %v1406 = vpop.f32.mrb[0].mxu0
        %v1407 = vadd.f32 0.0, %v1406
        %v1408 = vpop.f32.mrb[0].mxu0
        %v1409 = vadd.f32 0.0, %v1408
        %v1410 = vpop.f32.mrb[0].mxu0
        %v1411 = vadd.f32 0.0, %v1410
        %v1412 = vpop.f32.mrb[0].mxu0
        %v1413 = vadd.f32 0.0, %v1412
        %1414 = vmatprep.mubr.bf16.mxu0 0
        %1415 = vmatmul.mubr.bf16.gmra.mrb[0].mxu0 %v1307
        %v1416 = vpop.f32.mrb[0].mxu0
        %v1417 = vadd.f32 0.0, %v1416
        %v1418 = vpop.f32.mrb[0].mxu0
        %v1419 = vadd.f32 0.0, %v1418
        %v1420 = vpop.f32.mrb[0].mxu0
        %v1421 = vadd.f32 0.0, %v1420
        %v1422 = vpop.f32.mrb[0].mxu0
        %v1423 = vadd.f32 0.0, %v1422
        %1424 = vmatprep.mubr.bf16.mxu0 0
        %1425 = vmatmul.mubr.bf16.gmra.mrb[0].mxu0 %v1310
        %v1426 = vpop.f32.mrb[0].mxu0
        %v1427 = vadd.f32 0.0, %v1426
        %v1428 = vpop.f32.mrb[0].mxu0
        %v1429 = vadd.f32 0.0, %v1428
        %v1430 = vpop.f32.mrb[0].mxu0
        %v1431 = vadd.f32 0.0, %v1430
        %v1432 = vpop.f32.mrb[0].mxu0
        %v1433 = vadd.f32 0.0, %v1432
        %1434 = vmatprep.mubr.bf16.mxu0 0
        %1435 = vmatmul.mubr.bf16.gmra.mrb[0].mxu0 %v1313
        %v1436 = vpop.f32.mrb[0].mxu0
        %v1437 = vadd.f32 0.0, %v1436
        %v1438 = vpop.f32.mrb[0].mxu0
        %v1439 = vadd.f32 0.0, %v1438
        %v1440 = vpop.f32.mrb[0].mxu0
        %v1441 = vadd.f32 0.0, %v1440
        %v1442 = vpop.f32.mrb[0].mxu0
        %v1443 = vadd.f32 0.0, %v1442
        %1444 = vmatprep.mubr.bf16.mxu0 0
        %1445 = vmatmul.mubr.bf16.gmra.mrb[0].mxu0 %v1316
        %v1446 = vpop.f32.mrb[0].mxu0
        %v1447 = vadd.f32 0.0, %v1446
        %v1448 = vpop.f32.mrb[0].mxu0
        %v1449 = vadd.f32 0.0, %v1448
        %v1450 = vpop.f32.mrb[0].mxu0
        %v1451 = vadd.f32 0.0, %v1450
        %v1452 = vpop.f32.mrb[0].mxu0
        %v1453 = vadd.f32 0.0, %v1452
        %1454 = vmatprep.mubr.bf16.mxu0 0
        %1455 = vmatmul.mubr.bf16.gmra.mrb[0].mxu0 %v1319
        %v1456 = vpop.f32.mrb[0].mxu0
        %v1457 = vadd.f32 0.0, %v1456
        %v1458 = vpop.f32.mrb[0].mxu0
        %v1459 = vadd.f32 0.0, %v1458
        %v1460 = vpop.f32.mrb[0].mxu0
        %v1461 = vadd.f32 0.0, %v1460
        %v1462 = vpop.f32.mrb[0].mxu0
        %v1463 = vadd.f32 0.0, %v1462
        %1464 = vmatprep.mubr.bf16.mxu0 0
        %1465 = vmatmul.mubr.bf16.gmra.mrb[0].mxu0 %v1322
        %v1466 = vpop.f32.mrb[0].mxu0
        %v1467 = vadd.f32 0.0, %v1466
        %v1468 = vpop.f32.mrb[0].mxu0
        %v1469 = vadd.f32 0.0, %v1468
        %v1470 = vpop.f32.mrb[0].mxu0
        %v1471 = vadd.f32 0.0, %v1470
        %v1472 = vpop.f32.mrb[0].mxu0
        %v1473 = vadd.f32 0.0, %v1472
        %1474 = vmatprep.mubr.bf16.mxu0 0
        %1475 = vmatmul.mubr.bf16.gmra.mrb[0].mxu0 %v1325
        %v1476 = vpop.f32.mrb[0].mxu0
        %v1477 = vadd.f32 0.0, %v1476
        %v1478 = vpop.f32.mrb[0].mxu0
        %v1479 = vadd.f32 0.0, %v1478
        %v1480 = vpop.f32.mrb[0].mxu0
        %v1481 = vadd.f32 0.0, %v1480
        %v1482 = vpop.f32.mrb[0].mxu0
        %v1483 = vadd.f32 0.0, %v1482
        %1484 = vmatprep.mubr.bf16.mxu0 0
        %1485 = vmatmul.mubr.bf16.gmra.mrb[0].mxu0 %v1328
        %v1486 = vpop.f32.mrb[0].mxu0
        %v1487 = vadd.f32 0.0, %v1486
        %v1488 = vpop.f32.mrb[0].mxu0
        %v1489 = vadd.f32 0.0, %v1488
        %v1490 = vpop.f32.mrb[0].mxu0
        %v1491 = vadd.f32 0.0, %v1490
        %v1492 = vpop.f32.mrb[0].mxu0
        %v1493 = vadd.f32 0.0, %v1492
        %1494 = vmatprep.mubr.bf16.mxu0 0
        %1495 = vmatmul.mubr.bf16.gmra.mrb[0].mxu0 %v1331
        %v1496 = vpop.f32.mrb[0].mxu0
        %v1497 = vadd.f32 0.0, %v1496
        %v1498 = vpop.f32.mrb[0].mxu0
        %v1499 = vadd.f32 0.0, %v1498
        %v1500 = vpop.f32.mrb[0].mxu0
        %v1501 = vadd.f32 0.0, %v1500
        %v1502 = vpop.f32.mrb[0].mxu0
        %v1503 = vadd.f32 0.0, %v1502
        %1504 = vmatprep.mubr.bf16.mxu0 0
        %1505 = vmatmul.mubr.bf16.gmra.mrb[0].mxu0 %v1334
        %v1506 = vpop.f32.mrb[0].mxu0
        %v1507 = vadd.f32 0.0, %v1506
        %v1508 = vpop.f32.mrb[0].mxu0
        %v1509 = vadd.f32 0.0, %v1508
        %v1510 = vpop.f32.mrb[0].mxu0
        %v1511 = vadd.f32 0.0, %v1510
        %v1512 = vpop.f32.mrb[0].mxu0
        %v1513 = vadd.f32 0.0, %v1512
        %1514 = vmatprep.mubr.bf16.mxu0 0
        %1515 = vmatmul.mubr.bf16.gmra.mrb[0].mxu0 %v1337
        %v1516 = vpop.f32.mrb[0].mxu0
        %v1517 = vadd.f32 0.0, %v1516
        %v1518 = vpop.f32.mrb[0].mxu0
        %v1519 = vadd.f32 0.0, %v1518
        %v1520 = vpop.f32.mrb[0].mxu0
        %v1521 = vadd.f32 0.0, %v1520
        %v1522 = vpop.f32.mrb[0].mxu0
        %v1523 = vadd.f32 0.0, %v1522
        %1524 = vmatprep.mubr.bf16.mxu0 0
        %1525 = vmatmul.mubr.bf16.gmra.mrb[0].mxu0 %v1340
        %v1526 = vpop.f32.mrb[0].mxu0
        %v1527 = vadd.f32 0.0, %v1526
        %v1528 = vpop.f32.mrb[0].mxu0
        %v1529 = vadd.f32 0.0, %v1528
        %v1530 = vpop.f32.mrb[0].mxu0
        %v1531 = vadd.f32 0.0, %v1530
        %v1532 = vpop.f32.mrb[0].mxu0
        %v1533 = vadd.f32 0.0, %v1532
        %1534 = vdwg.mxu0
        %1535 = vxpose.xlu0.c.b16.start [1/8] %v1241, 128
        %1536 = vxpose.xlu0.c.b16.cont [2/8] %v1243, 128
        %1537 = vxpose.xlu0.c.b16.cont [3/8] 0, 128
        %1538 = vxpose.xlu0.c.b16.cont [4/8] 0, 128
        %1539 = vxpose.xlu0.c.b16.cont [5/8] 0, 128
        %1540 = vxpose.xlu0.c.b16.cont [6/8] 0, 128
        %1541 = vxpose.xlu0.c.b16.cont [7/8] 0, 128
        %1542 = vxpose.xlu0.c.b16.end [8/8] 0, 128
        %v1543 = vpop.trf.xlu0
        %v1544 = vpop.trf.xlu0
        %v1545 = vpop.trf.xlu0
        %v1546 = vpop.trf.xlu0
        %v1547 = vpop.trf.xlu0
        %v1548 = vpop.trf.xlu0
        %v1549 = vpop.trf.xlu0
        %v1550 = vpop.trf.xlu0
        %1551 = vxpose.xlu0.c.b16.start [1/8] %v1242, 128
        %1552 = vxpose.xlu0.c.b16.cont [2/8] %v1244, 128
        %1553 = vxpose.xlu0.c.b16.cont [3/8] 0, 128
        %1554 = vxpose.xlu0.c.b16.cont [4/8] 0, 128
        %1555 = vxpose.xlu0.c.b16.cont [5/8] 0, 128
        %1556 = vxpose.xlu0.c.b16.cont [6/8] 0, 128
        %1557 = vxpose.xlu0.c.b16.cont [7/8] 0, 128
        %1558 = vxpose.xlu0.c.b16.end [8/8] 0, 128
        %v1559 = vpop.trf.xlu0
        %v1560 = vpop.trf.xlu0
        %v1561 = vpop.trf.xlu0
        %v1562 = vpop.trf.xlu0
        %v1563 = vpop.trf.xlu0
        %v1564 = vpop.trf.xlu0
        %v1565 = vpop.trf.xlu0
        %v1566 = vpop.trf.xlu0
        %v1568 = vsel %vm1293, %v1543, 0
        %v1571 = vsel %vm1293, %v1544, 0
        %v1574 = vsel %vm1293, %v1545, 0
        %v1577 = vsel %vm1293, %v1546, 0
        %v1580 = vsel %vm1293, %v1547, 0
        %v1583 = vsel %vm1293, %v1548, 0
        %v1586 = vsel %vm1293, %v1549, 0
        %v1589 = vsel %vm1293, %v1550, 0
        %v1592 = vsel %vm1293, %v1559, 0
        %v1595 = vsel %vm1293, %v1560, 0
        %v1598 = vsel %vm1293, %v1561, 0
        %v1601 = vsel %vm1293, %v1562, 0
        %v1604 = vsel %vm1293, %v1563, 0
        %v1607 = vsel %vm1293, %v1564, 0
        %v1610 = vsel %vm1293, %v1565, 0
        %v1613 = vsel %vm1293, %v1566, 0
        %1615 = vmatprep.subr.bf16.mxu0 %v1250
        %1616 = vmatpush1.bf16.msra.mxu0 %v1249
        %1617 = vmatprep.subr.bf16.mxu0 %v1252
        %1618 = vmatpush1.bf16.msra.mxu0 %v1251
        %1619 = vmatprep.subr.bf16.mxu0 0
        %1620 = vmatpush1.bf16.msra.mxu0 0
        %1621 = vmatprep.subr.bf16.mxu0 0
        %1622 = vmatpush1.bf16.msra.mxu0 0
        %1623 = vmatprep.subr.bf16.mxu0 0
        %1624 = vmatpush1.bf16.msra.mxu0 0
        %1625 = vmatprep.subr.bf16.mxu0 0
        %1626 = vmatpush1.bf16.msra.mxu0 0
        %1627 = vmatprep.subr.bf16.mxu0 0
        %1628 = vmatpush1.bf16.msra.mxu0 0
        %1629 = vmatprep.subr.bf16.mxu0 0
        %1630 = vmatpush1.bf16.msra.mxu0 0
        %1631 = vmatprep.subr.bf16.mxu0 0
        %1632 = vmatpush1.bf16.msra.mxu0 0
        %1633 = vmatprep.subr.bf16.mxu0 0
        %1634 = vmatpush1.bf16.msra.mxu0 0
        %1635 = vmatprep.subr.bf16.mxu0 0
        %1636 = vmatpush1.bf16.msra.mxu0 0
        %1637 = vmatprep.subr.bf16.mxu0 0
        %1638 = vmatpush1.bf16.msra.mxu0 0
        %1639 = vmatprep.subr.bf16.mxu0 0
        %1640 = vmatpush1.bf16.msra.mxu0 0
        %1641 = vmatprep.subr.bf16.mxu0 0
        %1642 = vmatpush1.bf16.msra.mxu0 0
        %1643 = vmatprep.subr.bf16.mxu0 0
        %1644 = vmatpush1.bf16.msra.mxu0 0
        %1645 = vmatprep.subr.bf16.mxu0 0
        %1646 = vmatpush1.bf16.msra.mxu0 0
        %1647 = vmatprep.mubr.bf16.mxu0 0
        %1648 = vmatmul.mubr.bf16.gmra.mrb[0].mxu0 %v1568
        %v1649 = vpop.f32.mrb[0].mxu0
        %v1650 = vadd.f32 0.0, %v1649
        %v1651 = vpop.f32.mrb[0].mxu0
        %v1652 = vadd.f32 0.0, %v1651
        %v1653 = vpop.f32.mrb[0].mxu0
        %v1654 = vadd.f32 0.0, %v1653
        %v1655 = vpop.f32.mrb[0].mxu0
        %v1656 = vadd.f32 0.0, %v1655
        %1657 = vmatprep.mubr.bf16.mxu0 0
        %1658 = vmatmul.mubr.bf16.gmra.mrb[0].mxu0 %v1571
        %v1659 = vpop.f32.mrb[0].mxu0
        %v1660 = vadd.f32 0.0, %v1659
        %v1661 = vpop.f32.mrb[0].mxu0
        %v1662 = vadd.f32 0.0, %v1661
        %v1663 = vpop.f32.mrb[0].mxu0
        %v1664 = vadd.f32 0.0, %v1663
        %v1665 = vpop.f32.mrb[0].mxu0
        %v1666 = vadd.f32 0.0, %v1665
        %1667 = vmatprep.mubr.bf16.mxu0 0
        %1668 = vmatmul.mubr.bf16.gmra.mrb[0].mxu0 %v1574
        %v1669 = vpop.f32.mrb[0].mxu0
        %v1670 = vadd.f32 0.0, %v1669
        %v1671 = vpop.f32.mrb[0].mxu0
        %v1672 = vadd.f32 0.0, %v1671
        %v1673 = vpop.f32.mrb[0].mxu0
        %v1674 = vadd.f32 0.0, %v1673
        %v1675 = vpop.f32.mrb[0].mxu0
        %v1676 = vadd.f32 0.0, %v1675
        %1677 = vmatprep.mubr.bf16.mxu0 0
        %1678 = vmatmul.mubr.bf16.gmra.mrb[0].mxu0 %v1577
        %v1679 = vpop.f32.mrb[0].mxu0
        %v1680 = vadd.f32 0.0, %v1679
        %v1681 = vpop.f32.mrb[0].mxu0
        %v1682 = vadd.f32 0.0, %v1681
        %v1683 = vpop.f32.mrb[0].mxu0
        %v1684 = vadd.f32 0.0, %v1683
        %v1685 = vpop.f32.mrb[0].mxu0
        %v1686 = vadd.f32 0.0, %v1685
        %1687 = vmatprep.mubr.bf16.mxu0 0
        %1688 = vmatmul.mubr.bf16.gmra.mrb[0].mxu0 %v1580
        %v1689 = vpop.f32.mrb[0].mxu0
        %v1690 = vadd.f32 0.0, %v1689
        %v1691 = vpop.f32.mrb[0].mxu0
        %v1692 = vadd.f32 0.0, %v1691
        %v1693 = vpop.f32.mrb[0].mxu0
        %v1694 = vadd.f32 0.0, %v1693
        %v1695 = vpop.f32.mrb[0].mxu0
        %v1696 = vadd.f32 0.0, %v1695
        %1697 = vmatprep.mubr.bf16.mxu0 0
        %1698 = vmatmul.mubr.bf16.gmra.mrb[0].mxu0 %v1583
        %v1699 = vpop.f32.mrb[0].mxu0
        %v1700 = vadd.f32 0.0, %v1699
        %v1701 = vpop.f32.mrb[0].mxu0
        %v1702 = vadd.f32 0.0, %v1701
        %v1703 = vpop.f32.mrb[0].mxu0
        %v1704 = vadd.f32 0.0, %v1703
        %v1705 = vpop.f32.mrb[0].mxu0
        %v1706 = vadd.f32 0.0, %v1705
        %1707 = vmatprep.mubr.bf16.mxu0 0
        %1708 = vmatmul.mubr.bf16.gmra.mrb[0].mxu0 %v1586
        %v1709 = vpop.f32.mrb[0].mxu0
        %v1710 = vadd.f32 0.0, %v1709
        %v1711 = vpop.f32.mrb[0].mxu0
        %v1712 = vadd.f32 0.0, %v1711
        %v1713 = vpop.f32.mrb[0].mxu0
        %v1714 = vadd.f32 0.0, %v1713
        %v1715 = vpop.f32.mrb[0].mxu0
        %v1716 = vadd.f32 0.0, %v1715
        %1717 = vmatprep.mubr.bf16.mxu0 0
        %1718 = vmatmul.mubr.bf16.gmra.mrb[0].mxu0 %v1589
        %v1719 = vpop.f32.mrb[0].mxu0
        %v1720 = vadd.f32 0.0, %v1719
        %v1721 = vpop.f32.mrb[0].mxu0
        %v1722 = vadd.f32 0.0, %v1721
        %v1723 = vpop.f32.mrb[0].mxu0
        %v1724 = vadd.f32 0.0, %v1723
        %v1725 = vpop.f32.mrb[0].mxu0
        %v1726 = vadd.f32 0.0, %v1725
        %1727 = vmatprep.mubr.bf16.mxu0 0
        %1728 = vmatmul.mubr.bf16.gmra.mrb[0].mxu0 %v1592
        %v1729 = vpop.f32.mrb[0].mxu0
        %v1730 = vadd.f32 0.0, %v1729
        %v1731 = vpop.f32.mrb[0].mxu0
        %v1732 = vadd.f32 0.0, %v1731
        %v1733 = vpop.f32.mrb[0].mxu0
        %v1734 = vadd.f32 0.0, %v1733
        %v1735 = vpop.f32.mrb[0].mxu0
        %v1736 = vadd.f32 0.0, %v1735
        %1737 = vmatprep.mubr.bf16.mxu0 0
        %1738 = vmatmul.mubr.bf16.gmra.mrb[0].mxu0 %v1595
        %v1739 = vpop.f32.mrb[0].mxu0
        %v1740 = vadd.f32 0.0, %v1739
        %v1741 = vpop.f32.mrb[0].mxu0
        %v1742 = vadd.f32 0.0, %v1741
        %v1743 = vpop.f32.mrb[0].mxu0
        %v1744 = vadd.f32 0.0, %v1743
        %v1745 = vpop.f32.mrb[0].mxu0
        %v1746 = vadd.f32 0.0, %v1745
        %1747 = vmatprep.mubr.bf16.mxu0 0
        %1748 = vmatmul.mubr.bf16.gmra.mrb[0].mxu0 %v1598
        %v1749 = vpop.f32.mrb[0].mxu0
        %v1750 = vadd.f32 0.0, %v1749
        %v1751 = vpop.f32.mrb[0].mxu0
        %v1752 = vadd.f32 0.0, %v1751
        %v1753 = vpop.f32.mrb[0].mxu0
        %v1754 = vadd.f32 0.0, %v1753
        %v1755 = vpop.f32.mrb[0].mxu0
        %v1756 = vadd.f32 0.0, %v1755
        %1757 = vmatprep.mubr.bf16.mxu0 0
        %1758 = vmatmul.mubr.bf16.gmra.mrb[0].mxu0 %v1601
        %v1759 = vpop.f32.mrb[0].mxu0
        %v1760 = vadd.f32 0.0, %v1759
        %v1761 = vpop.f32.mrb[0].mxu0
        %v1762 = vadd.f32 0.0, %v1761
        %v1763 = vpop.f32.mrb[0].mxu0
        %v1764 = vadd.f32 0.0, %v1763
        %v1765 = vpop.f32.mrb[0].mxu0
        %v1766 = vadd.f32 0.0, %v1765
        %1767 = vmatprep.mubr.bf16.mxu0 0
        %1768 = vmatmul.mubr.bf16.gmra.mrb[0].mxu0 %v1604
        %v1769 = vpop.f32.mrb[0].mxu0
        %v1770 = vadd.f32 0.0, %v1769
        %v1771 = vpop.f32.mrb[0].mxu0
        %v1772 = vadd.f32 0.0, %v1771
        %v1773 = vpop.f32.mrb[0].mxu0
        %v1774 = vadd.f32 0.0, %v1773
        %v1775 = vpop.f32.mrb[0].mxu0
        %v1776 = vadd.f32 0.0, %v1775
        %1777 = vmatprep.mubr.bf16.mxu0 0
        %1778 = vmatmul.mubr.bf16.gmra.mrb[0].mxu0 %v1607
        %v1779 = vpop.f32.mrb[0].mxu0
        %v1780 = vadd.f32 0.0, %v1779
        %v1781 = vpop.f32.mrb[0].mxu0
        %v1782 = vadd.f32 0.0, %v1781
        %v1783 = vpop.f32.mrb[0].mxu0
        %v1784 = vadd.f32 0.0, %v1783
        %v1785 = vpop.f32.mrb[0].mxu0
        %v1786 = vadd.f32 0.0, %v1785
        %1787 = vmatprep.mubr.bf16.mxu0 0
        %1788 = vmatmul.mubr.bf16.gmra.mrb[0].mxu0 %v1610
        %v1789 = vpop.f32.mrb[0].mxu0
        %v1790 = vadd.f32 0.0, %v1789
        %v1791 = vpop.f32.mrb[0].mxu0
        %v1792 = vadd.f32 0.0, %v1791
        %v1793 = vpop.f32.mrb[0].mxu0
        %v1794 = vadd.f32 0.0, %v1793
        %v1795 = vpop.f32.mrb[0].mxu0
        %v1796 = vadd.f32 0.0, %v1795
        %1797 = vmatprep.mubr.bf16.mxu0 0
        %1798 = vmatmul.mubr.bf16.gmra.mrb[0].mxu0 %v1613
        %v1799 = vpop.f32.mrb[0].mxu0
        %v1800 = vadd.f32 0.0, %v1799
        %v1801 = vpop.f32.mrb[0].mxu0
        %v1802 = vadd.f32 0.0, %v1801
        %v1803 = vpop.f32.mrb[0].mxu0
        %v1804 = vadd.f32 0.0, %v1803
        %v1805 = vpop.f32.mrb[0].mxu0
        %v1806 = vadd.f32 0.0, %v1805
        %1807 = vdwg.mxu0
        %v1808 = vmax.f32 %v1377, %v1379
        %1809 = vmax.xlane.f32.xlu0 %v1808
        %v1810 = vpop.xlane.xlu0 %1809
        %v1811 = vmax.f32 %v1381, %v1383
        %1812 = vmax.xlane.f32.xlu0 %v1811
        %v1813 = vpop.xlane.xlu0 %1812
        %v1814 = vmax.f32 %v1387, %v1389
        %1815 = vmax.xlane.f32.xlu0 %v1814
        %v1816 = vpop.xlane.xlu0 %1815
        %v1817 = vmax.f32 %v1391, %v1393
        %1818 = vmax.xlane.f32.xlu0 %v1817
        %v1819 = vpop.xlane.xlu0 %1818
        %v1820 = vmax.f32 %v1397, %v1399
        %1821 = vmax.xlane.f32.xlu0 %v1820
        %v1822 = vpop.xlane.xlu0 %1821
        %v1823 = vmax.f32 %v1401, %v1403
        %1824 = vmax.xlane.f32.xlu0 %v1823
        %v1825 = vpop.xlane.xlu0 %1824
        %v1826 = vmax.f32 %v1407, %v1409
        %1827 = vmax.xlane.f32.xlu0 %v1826
        %v1828 = vpop.xlane.xlu0 %1827
        %v1829 = vmax.f32 %v1411, %v1413
        %1830 = vmax.xlane.f32.xlu0 %v1829
        %v1831 = vpop.xlane.xlu0 %1830
        %v1832 = vmax.f32 %v1417, %v1419
        %1833 = vmax.xlane.f32.xlu0 %v1832
        %v1834 = vpop.xlane.xlu0 %1833
        %v1835 = vmax.f32 %v1421, %v1423
        %1836 = vmax.xlane.f32.xlu0 %v1835
        %v1837 = vpop.xlane.xlu0 %1836
        %v1838 = vmax.f32 %v1427, %v1429
        %1839 = vmax.xlane.f32.xlu0 %v1838
        %v1840 = vpop.xlane.xlu0 %1839
        %v1841 = vmax.f32 %v1431, %v1433
        %1842 = vmax.xlane.f32.xlu0 %v1841
        %v1843 = vpop.xlane.xlu0 %1842
        %v1844 = vmax.f32 %v1437, %v1439
        %1845 = vmax.xlane.f32.xlu0 %v1844
        %v1846 = vpop.xlane.xlu0 %1845
        %v1847 = vmax.f32 %v1441, %v1443
        %1848 = vmax.xlane.f32.xlu0 %v1847
        %v1849 = vpop.xlane.xlu0 %1848
        %v1850 = vmax.f32 %v1447, %v1449
        %1851 = vmax.xlane.f32.xlu0 %v1850
        %v1852 = vpop.xlane.xlu0 %1851
        %v1853 = vmax.f32 %v1451, %v1453
        %1854 = vmax.xlane.f32.xlu0 %v1853
        %v1855 = vpop.xlane.xlu0 %1854
        %v1856 = vmax.f32 %v1457, %v1459
        %1857 = vmax.xlane.f32.xlu0 %v1856
        %v1858 = vpop.xlane.xlu0 %1857
        %v1859 = vmax.f32 %v1461, %v1463
        %1860 = vmax.xlane.f32.xlu0 %v1859
        %v1861 = vpop.xlane.xlu0 %1860
        %v1862 = vmax.f32 %v1467, %v1469
        %1863 = vmax.xlane.f32.xlu0 %v1862
        %v1864 = vpop.xlane.xlu0 %1863
        %v1865 = vmax.f32 %v1471, %v1473
        %1866 = vmax.xlane.f32.xlu0 %v1865
        %v1867 = vpop.xlane.xlu0 %1866
        %v1868 = vmax.f32 %v1477, %v1479
        %1869 = vmax.xlane.f32.xlu0 %v1868
        %v1870 = vpop.xlane.xlu0 %1869
        %v1871 = vmax.f32 %v1481, %v1483
        %1872 = vmax.xlane.f32.xlu0 %v1871
        %v1873 = vpop.xlane.xlu0 %1872
        %v1874 = vmax.f32 %v1487, %v1489
        %1875 = vmax.xlane.f32.xlu0 %v1874
        %v1876 = vpop.xlane.xlu0 %1875
        %v1877 = vmax.f32 %v1491, %v1493
        %1878 = vmax.xlane.f32.xlu0 %v1877
        %v1879 = vpop.xlane.xlu0 %1878
        %v1880 = vmax.f32 %v1497, %v1499
        %1881 = vmax.xlane.f32.xlu0 %v1880
        %v1882 = vpop.xlane.xlu0 %1881
        %v1883 = vmax.f32 %v1501, %v1503
        %1884 = vmax.xlane.f32.xlu0 %v1883
        %v1885 = vpop.xlane.xlu0 %1884
        %v1886 = vmax.f32 %v1507, %v1509
        %1887 = vmax.xlane.f32.xlu0 %v1886
        %v1888 = vpop.xlane.xlu0 %1887
        %v1889 = vmax.f32 %v1511, %v1513
        %1890 = vmax.xlane.f32.xlu0 %v1889
        %v1891 = vpop.xlane.xlu0 %1890
        %v1892 = vmax.f32 %v1517, %v1519
        %1893 = vmax.xlane.f32.xlu0 %v1892
        %v1894 = vpop.xlane.xlu0 %1893
        %v1895 = vmax.f32 %v1521, %v1523
        %1896 = vmax.xlane.f32.xlu0 %v1895
        %v1897 = vpop.xlane.xlu0 %1896
        %v1898 = vmax.f32 %v1527, %v1529
        %1899 = vmax.xlane.f32.xlu0 %v1898
        %v1900 = vpop.xlane.xlu0 %1899
        %v1901 = vmax.f32 %v1531, %v1533
        %1902 = vmax.xlane.f32.xlu0 %v1901
        %v1903 = vpop.xlane.xlu0 %1902
        %v1904 = vmax.f32 %v1650, %v1652
        %1905 = vmax.xlane.f32.xlu0 %v1904
        %v1906 = vpop.xlane.xlu0 %1905
        %v1907 = vmax.f32 %v1654, %v1656
        %1908 = vmax.xlane.f32.xlu0 %v1907
        %v1909 = vpop.xlane.xlu0 %1908
        %v1910 = vmax.f32 %v1660, %v1662
        %1911 = vmax.xlane.f32.xlu0 %v1910
        %v1912 = vpop.xlane.xlu0 %1911
        %v1913 = vmax.f32 %v1664, %v1666
        %1914 = vmax.xlane.f32.xlu0 %v1913
        %v1915 = vpop.xlane.xlu0 %1914
        %v1916 = vmax.f32 %v1670, %v1672
        %1917 = vmax.xlane.f32.xlu0 %v1916
        %v1918 = vpop.xlane.xlu0 %1917
        %v1919 = vmax.f32 %v1674, %v1676
        %1920 = vmax.xlane.f32.xlu0 %v1919
        %v1921 = vpop.xlane.xlu0 %1920
        %v1922 = vmax.f32 %v1680, %v1682
        %1923 = vmax.xlane.f32.xlu0 %v1922
        %v1924 = vpop.xlane.xlu0 %1923
        %v1925 = vmax.f32 %v1684, %v1686
        %1926 = vmax.xlane.f32.xlu0 %v1925
        %v1927 = vpop.xlane.xlu0 %1926
        %v1928 = vmax.f32 %v1690, %v1692
        %1929 = vmax.xlane.f32.xlu0 %v1928
        %v1930 = vpop.xlane.xlu0 %1929
        %v1931 = vmax.f32 %v1694, %v1696
        %1932 = vmax.xlane.f32.xlu0 %v1931
        %v1933 = vpop.xlane.xlu0 %1932
        %v1934 = vmax.f32 %v1700, %v1702
        %1935 = vmax.xlane.f32.xlu0 %v1934
        %v1936 = vpop.xlane.xlu0 %1935
        %v1937 = vmax.f32 %v1704, %v1706
        %1938 = vmax.xlane.f32.xlu0 %v1937
        %v1939 = vpop.xlane.xlu0 %1938
        %v1940 = vmax.f32 %v1710, %v1712
        %1941 = vmax.xlane.f32.xlu0 %v1940
        %v1942 = vpop.xlane.xlu0 %1941
        %v1943 = vmax.f32 %v1714, %v1716
        %1944 = vmax.xlane.f32.xlu0 %v1943
        %v1945 = vpop.xlane.xlu0 %1944
        %v1946 = vmax.f32 %v1720, %v1722
        %1947 = vmax.xlane.f32.xlu0 %v1946
        %v1948 = vpop.xlane.xlu0 %1947
        %v1949 = vmax.f32 %v1724, %v1726
        %1950 = vmax.xlane.f32.xlu0 %v1949
        %v1951 = vpop.xlane.xlu0 %1950
        %v1952 = vmax.f32 %v1730, %v1732
        %1953 = vmax.xlane.f32.xlu0 %v1952
        %v1954 = vpop.xlane.xlu0 %1953
        %v1955 = vmax.f32 %v1734, %v1736
        %1956 = vmax.xlane.f32.xlu0 %v1955
        %v1957 = vpop.xlane.xlu0 %1956
        %v1958 = vmax.f32 %v1740, %v1742
        %1959 = vmax.xlane.f32.xlu0 %v1958
        %v1960 = vpop.xlane.xlu0 %1959
        %v1961 = vmax.f32 %v1744, %v1746
        %1962 = vmax.xlane.f32.xlu0 %v1961
        %v1963 = vpop.xlane.xlu0 %1962
        %v1964 = vmax.f32 %v1750, %v1752
        %1965 = vmax.xlane.f32.xlu0 %v1964
        %v1966 = vpop.xlane.xlu0 %1965
        %v1967 = vmax.f32 %v1754, %v1756
        %1968 = vmax.xlane.f32.xlu0 %v1967
        %v1969 = vpop.xlane.xlu0 %1968
        %v1970 = vmax.f32 %v1760, %v1762
        %1971 = vmax.xlane.f32.xlu0 %v1970
        %v1972 = vpop.xlane.xlu0 %1971
        %v1973 = vmax.f32 %v1764, %v1766
        %1974 = vmax.xlane.f32.xlu0 %v1973
        %v1975 = vpop.xlane.xlu0 %1974
        %v1976 = vmax.f32 %v1770, %v1772
        %1977 = vmax.xlane.f32.xlu0 %v1976
        %v1978 = vpop.xlane.xlu0 %1977
        %v1979 = vmax.f32 %v1774, %v1776
        %1980 = vmax.xlane.f32.xlu0 %v1979
        %v1981 = vpop.xlane.xlu0 %1980
        %v1982 = vmax.f32 %v1780, %v1782
        %1983 = vmax.xlane.f32.xlu0 %v1982
        %v1984 = vpop.xlane.xlu0 %1983
        %v1985 = vmax.f32 %v1784, %v1786
        %1986 = vmax.xlane.f32.xlu0 %v1985
        %v1987 = vpop.xlane.xlu0 %1986
        %v1988 = vmax.f32 %v1790, %v1792
        %1989 = vmax.xlane.f32.xlu0 %v1988
        %v1990 = vpop.xlane.xlu0 %1989
        %v1991 = vmax.f32 %v1794, %v1796
        %1992 = vmax.xlane.f32.xlu0 %v1991
        %v1993 = vpop.xlane.xlu0 %1992
        %v1994 = vmax.f32 %v1800, %v1802
        %1995 = vmax.xlane.f32.xlu0 %v1994
        %v1996 = vpop.xlane.xlu0 %1995
        %v1997 = vmax.f32 %v1804, %v1806
        %1998 = vmax.xlane.f32.xlu0 %v1997
        %v1999 = vpop.xlane.xlu0 %1998
        %v2000 = vsub.f32 %v1377, %v1810
        %v2001 = vsub.f32 %v1379, %v1810
        %v2002 = vsub.f32 %v1381, %v1813
        %v2003 = vsub.f32 %v1383, %v1813
        %v2004 = vsub.f32 %v1387, %v1816
        %v2005 = vsub.f32 %v1389, %v1816
        %v2006 = vsub.f32 %v1391, %v1819
        %v2007 = vsub.f32 %v1393, %v1819
        %v2008 = vsub.f32 %v1397, %v1822
        %v2009 = vsub.f32 %v1399, %v1822
        %v2010 = vsub.f32 %v1401, %v1825
        %v2011 = vsub.f32 %v1403, %v1825
        %v2012 = vsub.f32 %v1407, %v1828
        %v2013 = vsub.f32 %v1409, %v1828
        %v2014 = vsub.f32 %v1411, %v1831
        %v2015 = vsub.f32 %v1413, %v1831
        %v2016 = vsub.f32 %v1417, %v1834
        %v2017 = vsub.f32 %v1419, %v1834
        %v2018 = vsub.f32 %v1421, %v1837
        %v2019 = vsub.f32 %v1423, %v1837
        %v2020 = vsub.f32 %v1427, %v1840
        %v2021 = vsub.f32 %v1429, %v1840
        %v2022 = vsub.f32 %v1431, %v1843
        %v2023 = vsub.f32 %v1433, %v1843
        %v2024 = vsub.f32 %v1437, %v1846
        %v2025 = vsub.f32 %v1439, %v1846
        %v2026 = vsub.f32 %v1441, %v1849
        %v2027 = vsub.f32 %v1443, %v1849
        %v2028 = vsub.f32 %v1447, %v1852
        %v2029 = vsub.f32 %v1449, %v1852
        %v2030 = vsub.f32 %v1451, %v1855
        %v2031 = vsub.f32 %v1453, %v1855
        %v2032 = vsub.f32 %v1457, %v1858
        %v2033 = vsub.f32 %v1459, %v1858
        %v2034 = vsub.f32 %v1461, %v1861
        %v2035 = vsub.f32 %v1463, %v1861
        %v2036 = vsub.f32 %v1467, %v1864
        %v2037 = vsub.f32 %v1469, %v1864
        %v2038 = vsub.f32 %v1471, %v1867
        %v2039 = vsub.f32 %v1473, %v1867
        %v2040 = vsub.f32 %v1477, %v1870
        %v2041 = vsub.f32 %v1479, %v1870
        %v2042 = vsub.f32 %v1481, %v1873
        %v2043 = vsub.f32 %v1483, %v1873
        %v2044 = vsub.f32 %v1487, %v1876
        %v2045 = vsub.f32 %v1489, %v1876
        %v2046 = vsub.f32 %v1491, %v1879
        %v2047 = vsub.f32 %v1493, %v1879
        %v2048 = vsub.f32 %v1497, %v1882
        %v2049 = vsub.f32 %v1499, %v1882
        %v2050 = vsub.f32 %v1501, %v1885
        %v2051 = vsub.f32 %v1503, %v1885
        %v2052 = vsub.f32 %v1507, %v1888
        %v2053 = vsub.f32 %v1509, %v1888
        %v2054 = vsub.f32 %v1511, %v1891
        %v2055 = vsub.f32 %v1513, %v1891
        %v2056 = vsub.f32 %v1517, %v1894
        %v2057 = vsub.f32 %v1519, %v1894
        %v2058 = vsub.f32 %v1521, %v1897
        %v2059 = vsub.f32 %v1523, %v1897
        %v2060 = vsub.f32 %v1527, %v1900
        %v2061 = vsub.f32 %v1529, %v1900
        %v2062 = vsub.f32 %v1531, %v1903
        %v2063 = vsub.f32 %v1533, %v1903
        %v2064 = vsub.f32 %v1650, %v1906
        %v2065 = vsub.f32 %v1652, %v1906
        %v2066 = vsub.f32 %v1654, %v1909
        %v2067 = vsub.f32 %v1656, %v1909
        %v2068 = vsub.f32 %v1660, %v1912
        %v2069 = vsub.f32 %v1662, %v1912
        %v2070 = vsub.f32 %v1664, %v1915
        %v2071 = vsub.f32 %v1666, %v1915
        %v2072 = vsub.f32 %v1670, %v1918
        %v2073 = vsub.f32 %v1672, %v1918
        %v2074 = vsub.f32 %v1674, %v1921
        %v2075 = vsub.f32 %v1676, %v1921
        %v2076 = vsub.f32 %v1680, %v1924
        %v2077 = vsub.f32 %v1682, %v1924
        %v2078 = vsub.f32 %v1684, %v1927
        %v2079 = vsub.f32 %v1686, %v1927
        %v2080 = vsub.f32 %v1690, %v1930
        %v2081 = vsub.f32 %v1692, %v1930
        %v2082 = vsub.f32 %v1694, %v1933
        %v2083 = vsub.f32 %v1696, %v1933
        %v2084 = vsub.f32 %v1700, %v1936
        %v2085 = vsub.f32 %v1702, %v1936
        %v2086 = vsub.f32 %v1704, %v1939
        %v2087 = vsub.f32 %v1706, %v1939
        %v2088 = vsub.f32 %v1710, %v1942
        %v2089 = vsub.f32 %v1712, %v1942
        %v2090 = vsub.f32 %v1714, %v1945
        %v2091 = vsub.f32 %v1716, %v1945
        %v2092 = vsub.f32 %v1720, %v1948
        %v2093 = vsub.f32 %v1722, %v1948
        %v2094 = vsub.f32 %v1724, %v1951
        %v2095 = vsub.f32 %v1726, %v1951
        %v2096 = vsub.f32 %v1730, %v1954
        %v2097 = vsub.f32 %v1732, %v1954
        %v2098 = vsub.f32 %v1734, %v1957
        %v2099 = vsub.f32 %v1736, %v1957
        %v2100 = vsub.f32 %v1740, %v1960
        %v2101 = vsub.f32 %v1742, %v1960
        %v2102 = vsub.f32 %v1744, %v1963
        %v2103 = vsub.f32 %v1746, %v1963
        %v2104 = vsub.f32 %v1750, %v1966
        %v2105 = vsub.f32 %v1752, %v1966
        %v2106 = vsub.f32 %v1754, %v1969
        %v2107 = vsub.f32 %v1756, %v1969
        %v2108 = vsub.f32 %v1760, %v1972
        %v2109 = vsub.f32 %v1762, %v1972
        %v2110 = vsub.f32 %v1764, %v1975
        %v2111 = vsub.f32 %v1766, %v1975
        %v2112 = vsub.f32 %v1770, %v1978
        %v2113 = vsub.f32 %v1772, %v1978
        %v2114 = vsub.f32 %v1774, %v1981
        %v2115 = vsub.f32 %v1776, %v1981
        %v2116 = vsub.f32 %v1780, %v1984
        %v2117 = vsub.f32 %v1782, %v1984
        %v2118 = vsub.f32 %v1784, %v1987
        %v2119 = vsub.f32 %v1786, %v1987
        %v2120 = vsub.f32 %v1790, %v1990
        %v2121 = vsub.f32 %v1792, %v1990
        %v2122 = vsub.f32 %v1794, %v1993
        %v2123 = vsub.f32 %v1796, %v1993
        %v2124 = vsub.f32 %v1800, %v1996
        %v2125 = vsub.f32 %v1802, %v1996
        %v2126 = vsub.f32 %v1804, %v1999
        %v2127 = vsub.f32 %v1806, %v1999
        %v2128 = vmul.f32 %v2000, 1.442695
        %v2129 = vpow.pop %v2128
        %v2130 = vmul.f32 %v2001, 1.442695
        %v2131 = vpow.pop %v2130
        %v2132 = vmul.f32 %v2002, 1.442695
        %v2133 = vpow.pop %v2132
        %v2134 = vmul.f32 %v2003, 1.442695
        %v2135 = vpow.pop %v2134
        %v2136 = vmul.f32 %v2004, 1.442695
        %v2137 = vpow.pop %v2136
        %v2138 = vmul.f32 %v2005, 1.442695
        %v2139 = vpow.pop %v2138
        %v2140 = vmul.f32 %v2006, 1.442695
        %v2141 = vpow.pop %v2140
        %v2142 = vmul.f32 %v2007, 1.442695
        %v2143 = vpow.pop %v2142
        %v2144 = vmul.f32 %v2008, 1.442695
        %v2145 = vpow.pop %v2144
        %v2146 = vmul.f32 %v2009, 1.442695
        %v2147 = vpow.pop %v2146
        %v2148 = vmul.f32 %v2010, 1.442695
        %v2149 = vpow.pop %v2148
        %v2150 = vmul.f32 %v2011, 1.442695
        %v2151 = vpow.pop %v2150
        %v2152 = vmul.f32 %v2012, 1.442695
        %v2153 = vpow.pop %v2152
        %v2154 = vmul.f32 %v2013, 1.442695
        %v2155 = vpow.pop %v2154
        %v2156 = vmul.f32 %v2014, 1.442695
        %v2157 = vpow.pop %v2156
        %v2158 = vmul.f32 %v2015, 1.442695
        %v2159 = vpow.pop %v2158
        %v2160 = vmul.f32 %v2016, 1.442695
        %v2161 = vpow.pop %v2160
        %v2162 = vmul.f32 %v2017, 1.442695
        %v2163 = vpow.pop %v2162
        %v2164 = vmul.f32 %v2018, 1.442695
        %v2165 = vpow.pop %v2164
        %v2166 = vmul.f32 %v2019, 1.442695
        %v2167 = vpow.pop %v2166
        %v2168 = vmul.f32 %v2020, 1.442695
        %v2169 = vpow.pop %v2168
        %v2170 = vmul.f32 %v2021, 1.442695
        %v2171 = vpow.pop %v2170
        %v2172 = vmul.f32 %v2022, 1.442695
        %v2173 = vpow.pop %v2172
        %v2174 = vmul.f32 %v2023, 1.442695
        %v2175 = vpow.pop %v2174
        %v2176 = vmul.f32 %v2024, 1.442695
        %v2177 = vpow.pop %v2176
        %v2178 = vmul.f32 %v2025, 1.442695
        %v2179 = vpow.pop %v2178
        %v2180 = vmul.f32 %v2026, 1.442695
        %v2181 = vpow.pop %v2180
        %v2182 = vmul.f32 %v2027, 1.442695
        %v2183 = vpow.pop %v2182
        %v2184 = vmul.f32 %v2028, 1.442695
        %v2185 = vpow.pop %v2184
        %v2186 = vmul.f32 %v2029, 1.442695
        %v2187 = vpow.pop %v2186
        %v2188 = vmul.f32 %v2030, 1.442695
        %v2189 = vpow.pop %v2188
        %v2190 = vmul.f32 %v2031, 1.442695
        %v2191 = vpow.pop %v2190
        %v2192 = vmul.f32 %v2032, 1.442695
        %v2193 = vpow.pop %v2192
        %v2194 = vmul.f32 %v2033, 1.442695
        %v2195 = vpow.pop %v2194
        %v2196 = vmul.f32 %v2034, 1.442695
        %v2197 = vpow.pop %v2196
        %v2198 = vmul.f32 %v2035, 1.442695
        %v2199 = vpow.pop %v2198
        %v2200 = vmul.f32 %v2036, 1.442695
        %v2201 = vpow.pop %v2200
        %v2202 = vmul.f32 %v2037, 1.442695
        %v2203 = vpow.pop %v2202
        %v2204 = vmul.f32 %v2038, 1.442695
        %v2205 = vpow.pop %v2204
        %v2206 = vmul.f32 %v2039, 1.442695
        %v2207 = vpow.pop %v2206
        %v2208 = vmul.f32 %v2040, 1.442695
        %v2209 = vpow.pop %v2208
        %v2210 = vmul.f32 %v2041, 1.442695
        %v2211 = vpow.pop %v2210
        %v2212 = vmul.f32 %v2042, 1.442695
        %v2213 = vpow.pop %v2212
        %v2214 = vmul.f32 %v2043, 1.442695
        %v2215 = vpow.pop %v2214
        %v2216 = vmul.f32 %v2044, 1.442695
        %v2217 = vpow.pop %v2216
        %v2218 = vmul.f32 %v2045, 1.442695
        %v2219 = vpow.pop %v2218
        %v2220 = vmul.f32 %v2046, 1.442695
        %v2221 = vpow.pop %v2220
        %v2222 = vmul.f32 %v2047, 1.442695
        %v2223 = vpow.pop %v2222
        %v2224 = vmul.f32 %v2048, 1.442695
        %v2225 = vpow.pop %v2224
        %v2226 = vmul.f32 %v2049, 1.442695
        %v2227 = vpow.pop %v2226
        %v2228 = vmul.f32 %v2050, 1.442695
        %v2229 = vpow.pop %v2228
        %v2230 = vmul.f32 %v2051, 1.442695
        %v2231 = vpow.pop %v2230
        %v2232 = vmul.f32 %v2052, 1.442695
        %v2233 = vpow.pop %v2232
        %v2234 = vmul.f32 %v2053, 1.442695
        %v2235 = vpow.pop %v2234
        %v2236 = vmul.f32 %v2054, 1.442695
        %v2237 = vpow.pop %v2236
        %v2238 = vmul.f32 %v2055, 1.442695
        %v2239 = vpow.pop %v2238
        %v2240 = vmul.f32 %v2056, 1.442695
        %v2241 = vpow.pop %v2240
        %v2242 = vmul.f32 %v2057, 1.442695
        %v2243 = vpow.pop %v2242
        %v2244 = vmul.f32 %v2058, 1.442695
        %v2245 = vpow.pop %v2244
        %v2246 = vmul.f32 %v2059, 1.442695
        %v2247 = vpow.pop %v2246
        %v2248 = vmul.f32 %v2060, 1.442695
        %v2249 = vpow.pop %v2248
        %v2250 = vmul.f32 %v2061, 1.442695
        %v2251 = vpow.pop %v2250
        %v2252 = vmul.f32 %v2062, 1.442695
        %v2253 = vpow.pop %v2252
        %v2254 = vmul.f32 %v2063, 1.442695
        %v2255 = vpow.pop %v2254
        %v2256 = vmul.f32 %v2064, 1.442695
        %v2257 = vpow.pop %v2256
        %v2258 = vmul.f32 %v2065, 1.442695
        %v2259 = vpow.pop %v2258
        %v2260 = vmul.f32 %v2066, 1.442695
        %v2261 = vpow.pop %v2260
        %v2262 = vmul.f32 %v2067, 1.442695
        %v2263 = vpow.pop %v2262
        %v2264 = vmul.f32 %v2068, 1.442695
        %v2265 = vpow.pop %v2264
        %v2266 = vmul.f32 %v2069, 1.442695
        %v2267 = vpow.pop %v2266
        %v2268 = vmul.f32 %v2070, 1.442695
        %v2269 = vpow.pop %v2268
        %v2270 = vmul.f32 %v2071, 1.442695
        %v2271 = vpow.pop %v2270
        %v2272 = vmul.f32 %v2072, 1.442695
        %v2273 = vpow.pop %v2272
        %v2274 = vmul.f32 %v2073, 1.442695
        %v2275 = vpow.pop %v2274
        %v2276 = vmul.f32 %v2074, 1.442695
        %v2277 = vpow.pop %v2276
        %v2278 = vmul.f32 %v2075, 1.442695
        %v2279 = vpow.pop %v2278
        %v2280 = vmul.f32 %v2076, 1.442695
        %v2281 = vpow.pop %v2280
        %v2282 = vmul.f32 %v2077, 1.442695
        %v2283 = vpow.pop %v2282
        %v2284 = vmul.f32 %v2078, 1.442695
        %v2285 = vpow.pop %v2284
        %v2286 = vmul.f32 %v2079, 1.442695
        %v2287 = vpow.pop %v2286
        %v2288 = vmul.f32 %v2080, 1.442695
        %v2289 = vpow.pop %v2288
        %v2290 = vmul.f32 %v2081, 1.442695
        %v2291 = vpow.pop %v2290
        %v2292 = vmul.f32 %v2082, 1.442695
        %v2293 = vpow.pop %v2292
        %v2294 = vmul.f32 %v2083, 1.442695
        %v2295 = vpow.pop %v2294
        %v2296 = vmul.f32 %v2084, 1.442695
        %v2297 = vpow.pop %v2296
        %v2298 = vmul.f32 %v2085, 1.442695
        %v2299 = vpow.pop %v2298
        %v2300 = vmul.f32 %v2086, 1.442695
        %v2301 = vpow.pop %v2300
        %v2302 = vmul.f32 %v2087, 1.442695
        %v2303 = vpow.pop %v2302
        %v2304 = vmul.f32 %v2088, 1.442695
        %v2305 = vpow.pop %v2304
        %v2306 = vmul.f32 %v2089, 1.442695
        %v2307 = vpow.pop %v2306
        %v2308 = vmul.f32 %v2090, 1.442695
        %v2309 = vpow.pop %v2308
        %v2310 = vmul.f32 %v2091, 1.442695
        %v2311 = vpow.pop %v2310
        %v2312 = vmul.f32 %v2092, 1.442695
        %v2313 = vpow.pop %v2312
        %v2314 = vmul.f32 %v2093, 1.442695
        %v2315 = vpow.pop %v2314
        %v2316 = vmul.f32 %v2094, 1.442695
        %v2317 = vpow.pop %v2316
        %v2318 = vmul.f32 %v2095, 1.442695
        %v2319 = vpow.pop %v2318
        %v2320 = vmul.f32 %v2096, 1.442695
        %v2321 = vpow.pop %v2320
        %v2322 = vmul.f32 %v2097, 1.442695
        %v2323 = vpow.pop %v2322
        %v2324 = vmul.f32 %v2098, 1.442695
        %v2325 = vpow.pop %v2324
        %v2326 = vmul.f32 %v2099, 1.442695
        %v2327 = vpow.pop %v2326
        %v2328 = vmul.f32 %v2100, 1.442695
        %v2329 = vpow.pop %v2328
        %v2330 = vmul.f32 %v2101, 1.442695
        %v2331 = vpow.pop %v2330
        %v2332 = vmul.f32 %v2102, 1.442695
        %v2333 = vpow.pop %v2332
        %v2334 = vmul.f32 %v2103, 1.442695
        %v2335 = vpow.pop %v2334
        %v2336 = vmul.f32 %v2104, 1.442695
        %v2337 = vpow.pop %v2336
        %v2338 = vmul.f32 %v2105, 1.442695
        %v2339 = vpow.pop %v2338
        %v2340 = vmul.f32 %v2106, 1.442695
        %v2341 = vpow.pop %v2340
        %v2342 = vmul.f32 %v2107, 1.442695
        %v2343 = vpow.pop %v2342
        %v2344 = vmul.f32 %v2108, 1.442695
        %v2345 = vpow.pop %v2344
        %v2346 = vmul.f32 %v2109, 1.442695
        %v2347 = vpow.pop %v2346
        %v2348 = vmul.f32 %v2110, 1.442695
        %v2349 = vpow.pop %v2348
        %v2350 = vmul.f32 %v2111, 1.442695
        %v2351 = vpow.pop %v2350
        %v2352 = vmul.f32 %v2112, 1.442695
        %v2353 = vpow.pop %v2352
        %v2354 = vmul.f32 %v2113, 1.442695
        %v2355 = vpow.pop %v2354
        %v2356 = vmul.f32 %v2114, 1.442695
        %v2357 = vpow.pop %v2356
        %v2358 = vmul.f32 %v2115, 1.442695
        %v2359 = vpow.pop %v2358
        %v2360 = vmul.f32 %v2116, 1.442695
        %v2361 = vpow.pop %v2360
        %v2362 = vmul.f32 %v2117, 1.442695
        %v2363 = vpow.pop %v2362
        %v2364 = vmul.f32 %v2118, 1.442695
        %v2365 = vpow.pop %v2364
        %v2366 = vmul.f32 %v2119, 1.442695
        %v2367 = vpow.pop %v2366
        %v2368 = vmul.f32 %v2120, 1.442695
        %v2369 = vpow.pop %v2368
        %v2370 = vmul.f32 %v2121, 1.442695
        %v2371 = vpow.pop %v2370
        %v2372 = vmul.f32 %v2122, 1.442695
        %v2373 = vpow.pop %v2372
        %v2374 = vmul.f32 %v2123, 1.442695
        %v2375 = vpow.pop %v2374
        %v2376 = vmul.f32 %v2124, 1.442695
        %v2377 = vpow.pop %v2376
        %v2378 = vmul.f32 %v2125, 1.442695
        %v2379 = vpow.pop %v2378
        %v2380 = vmul.f32 %v2126, 1.442695
        %v2381 = vpow.pop %v2380
        %v2382 = vmul.f32 %v2127, 1.442695
        %v2383 = vpow.pop %v2382
        %v2384 = vadd.f32 %v2129, %v2131
        %2385 = vadd.xlane.f32.xlu0 %v2384
        %v2386 = vpop.xlane.xlu0 %2385
        %v2387 = vadd.f32 %v2133, %v2135
        %2388 = vadd.xlane.f32.xlu0 %v2387
        %v2389 = vpop.xlane.xlu0 %2388
        %v2390 = vadd.f32 %v2137, %v2139
        %2391 = vadd.xlane.f32.xlu0 %v2390
        %v2392 = vpop.xlane.xlu0 %2391
        %v2393 = vadd.f32 %v2141, %v2143
        %2394 = vadd.xlane.f32.xlu0 %v2393
        %v2395 = vpop.xlane.xlu0 %2394
        %v2396 = vadd.f32 %v2145, %v2147
        %2397 = vadd.xlane.f32.xlu0 %v2396
        %v2398 = vpop.xlane.xlu0 %2397
        %v2399 = vadd.f32 %v2149, %v2151
        %2400 = vadd.xlane.f32.xlu0 %v2399
        %v2401 = vpop.xlane.xlu0 %2400
        %v2402 = vadd.f32 %v2153, %v2155
        %2403 = vadd.xlane.f32.xlu0 %v2402
        %v2404 = vpop.xlane.xlu0 %2403
        %v2405 = vadd.f32 %v2157, %v2159
        %2406 = vadd.xlane.f32.xlu0 %v2405
        %v2407 = vpop.xlane.xlu0 %2406
        %v2408 = vadd.f32 %v2161, %v2163
        %2409 = vadd.xlane.f32.xlu0 %v2408
        %v2410 = vpop.xlane.xlu0 %2409
        %v2411 = vadd.f32 %v2165, %v2167
        %2412 = vadd.xlane.f32.xlu0 %v2411
        %v2413 = vpop.xlane.xlu0 %2412
        %v2414 = vadd.f32 %v2169, %v2171
        %2415 = vadd.xlane.f32.xlu0 %v2414
        %v2416 = vpop.xlane.xlu0 %2415
        %v2417 = vadd.f32 %v2173, %v2175
        %2418 = vadd.xlane.f32.xlu0 %v2417
        %v2419 = vpop.xlane.xlu0 %2418
        %v2420 = vadd.f32 %v2177, %v2179
        %2421 = vadd.xlane.f32.xlu0 %v2420
        %v2422 = vpop.xlane.xlu0 %2421
        %v2423 = vadd.f32 %v2181, %v2183
        %2424 = vadd.xlane.f32.xlu0 %v2423
        %v2425 = vpop.xlane.xlu0 %2424
        %v2426 = vadd.f32 %v2185, %v2187
        %2427 = vadd.xlane.f32.xlu0 %v2426
        %v2428 = vpop.xlane.xlu0 %2427
        %v2429 = vadd.f32 %v2189, %v2191
        %2430 = vadd.xlane.f32.xlu0 %v2429
        %v2431 = vpop.xlane.xlu0 %2430
        %v2432 = vadd.f32 %v2193, %v2195
        %2433 = vadd.xlane.f32.xlu0 %v2432
        %v2434 = vpop.xlane.xlu0 %2433
        %v2435 = vadd.f32 %v2197, %v2199
        %2436 = vadd.xlane.f32.xlu0 %v2435
        %v2437 = vpop.xlane.xlu0 %2436
        %v2438 = vadd.f32 %v2201, %v2203
        %2439 = vadd.xlane.f32.xlu0 %v2438
        %v2440 = vpop.xlane.xlu0 %2439
        %v2441 = vadd.f32 %v2205, %v2207
        %2442 = vadd.xlane.f32.xlu0 %v2441
        %v2443 = vpop.xlane.xlu0 %2442
        %v2444 = vadd.f32 %v2209, %v2211
        %2445 = vadd.xlane.f32.xlu0 %v2444
        %v2446 = vpop.xlane.xlu0 %2445
        %v2447 = vadd.f32 %v2213, %v2215
        %2448 = vadd.xlane.f32.xlu0 %v2447
        %v2449 = vpop.xlane.xlu0 %2448
        %v2450 = vadd.f32 %v2217, %v2219
        %2451 = vadd.xlane.f32.xlu0 %v2450
        %v2452 = vpop.xlane.xlu0 %2451
        %v2453 = vadd.f32 %v2221, %v2223
        %2454 = vadd.xlane.f32.xlu0 %v2453
        %v2455 = vpop.xlane.xlu0 %2454
        %v2456 = vadd.f32 %v2225, %v2227
        %2457 = vadd.xlane.f32.xlu0 %v2456
        %v2458 = vpop.xlane.xlu0 %2457
        %v2459 = vadd.f32 %v2229, %v2231
        %2460 = vadd.xlane.f32.xlu0 %v2459
        %v2461 = vpop.xlane.xlu0 %2460
        %v2462 = vadd.f32 %v2233, %v2235
        %2463 = vadd.xlane.f32.xlu0 %v2462
        %v2464 = vpop.xlane.xlu0 %2463
        %v2465 = vadd.f32 %v2237, %v2239
        %2466 = vadd.xlane.f32.xlu0 %v2465
        %v2467 = vpop.xlane.xlu0 %2466
        %v2468 = vadd.f32 %v2241, %v2243
        %2469 = vadd.xlane.f32.xlu0 %v2468
        %v2470 = vpop.xlane.xlu0 %2469
        %v2471 = vadd.f32 %v2245, %v2247
        %2472 = vadd.xlane.f32.xlu0 %v2471
        %v2473 = vpop.xlane.xlu0 %2472
        %v2474 = vadd.f32 %v2249, %v2251
        %2475 = vadd.xlane.f32.xlu0 %v2474
        %v2476 = vpop.xlane.xlu0 %2475
        %v2477 = vadd.f32 %v2253, %v2255
        %2478 = vadd.xlane.f32.xlu0 %v2477
        %v2479 = vpop.xlane.xlu0 %2478
        %v2480 = vadd.f32 %v2257, %v2259
        %2481 = vadd.xlane.f32.xlu0 %v2480
        %v2482 = vpop.xlane.xlu0 %2481
        %v2483 = vadd.f32 %v2261, %v2263
        %2484 = vadd.xlane.f32.xlu0 %v2483
        %v2485 = vpop.xlane.xlu0 %2484
        %v2486 = vadd.f32 %v2265, %v2267
        %2487 = vadd.xlane.f32.xlu0 %v2486
        %v2488 = vpop.xlane.xlu0 %2487
        %v2489 = vadd.f32 %v2269, %v2271
        %2490 = vadd.xlane.f32.xlu0 %v2489
        %v2491 = vpop.xlane.xlu0 %2490
        %v2492 = vadd.f32 %v2273, %v2275
        %2493 = vadd.xlane.f32.xlu0 %v2492
        %v2494 = vpop.xlane.xlu0 %2493
        %v2495 = vadd.f32 %v2277, %v2279
        %2496 = vadd.xlane.f32.xlu0 %v2495
        %v2497 = vpop.xlane.xlu0 %2496
        %v2498 = vadd.f32 %v2281, %v2283
        %2499 = vadd.xlane.f32.xlu0 %v2498
        %v2500 = vpop.xlane.xlu0 %2499
        %v2501 = vadd.f32 %v2285, %v2287
        %2502 = vadd.xlane.f32.xlu0 %v2501
        %v2503 = vpop.xlane.xlu0 %2502
        %v2504 = vadd.f32 %v2289, %v2291
        %2505 = vadd.xlane.f32.xlu0 %v2504
        %v2506 = vpop.xlane.xlu0 %2505
        %v2507 = vadd.f32 %v2293, %v2295
        %2508 = vadd.xlane.f32.xlu0 %v2507
        %v2509 = vpop.xlane.xlu0 %2508
        %v2510 = vadd.f32 %v2297, %v2299
        %2511 = vadd.xlane.f32.xlu0 %v2510
        %v2512 = vpop.xlane.xlu0 %2511
        %v2513 = vadd.f32 %v2301, %v2303
        %2514 = vadd.xlane.f32.xlu0 %v2513
        %v2515 = vpop.xlane.xlu0 %2514
        %v2516 = vadd.f32 %v2305, %v2307
        %2517 = vadd.xlane.f32.xlu0 %v2516
        %v2518 = vpop.xlane.xlu0 %2517
        %v2519 = vadd.f32 %v2309, %v2311
        %2520 = vadd.xlane.f32.xlu0 %v2519
        %v2521 = vpop.xlane.xlu0 %2520
        %v2522 = vadd.f32 %v2313, %v2315
        %2523 = vadd.xlane.f32.xlu0 %v2522
        %v2524 = vpop.xlane.xlu0 %2523
        %v2525 = vadd.f32 %v2317, %v2319
        %2526 = vadd.xlane.f32.xlu0 %v2525
        %v2527 = vpop.xlane.xlu0 %2526
        %v2528 = vadd.f32 %v2321, %v2323
        %2529 = vadd.xlane.f32.xlu0 %v2528
        %v2530 = vpop.xlane.xlu0 %2529
        %v2531 = vadd.f32 %v2325, %v2327
        %2532 = vadd.xlane.f32.xlu0 %v2531
        %v2533 = vpop.xlane.xlu0 %2532
        %v2534 = vadd.f32 %v2329, %v2331
        %2535 = vadd.xlane.f32.xlu0 %v2534
        %v2536 = vpop.xlane.xlu0 %2535
        %v2537 = vadd.f32 %v2333, %v2335
        %2538 = vadd.xlane.f32.xlu0 %v2537
        %v2539 = vpop.xlane.xlu0 %2538
        %v2540 = vadd.f32 %v2337, %v2339
        %2541 = vadd.xlane.f32.xlu0 %v2540
        %v2542 = vpop.xlane.xlu0 %2541
        %v2543 = vadd.f32 %v2341, %v2343
        %2544 = vadd.xlane.f32.xlu0 %v2543
        %v2545 = vpop.xlane.xlu0 %2544
        %v2546 = vadd.f32 %v2345, %v2347
        %2547 = vadd.xlane.f32.xlu0 %v2546
        %v2548 = vpop.xlane.xlu0 %2547
        %v2549 = vadd.f32 %v2349, %v2351
        %2550 = vadd.xlane.f32.xlu0 %v2549
        %v2551 = vpop.xlane.xlu0 %2550
        %v2552 = vadd.f32 %v2353, %v2355
        %2553 = vadd.xlane.f32.xlu0 %v2552
        %v2554 = vpop.xlane.xlu0 %2553
        %v2555 = vadd.f32 %v2357, %v2359
        %2556 = vadd.xlane.f32.xlu0 %v2555
        %v2557 = vpop.xlane.xlu0 %2556
        %v2558 = vadd.f32 %v2361, %v2363
        %2559 = vadd.xlane.f32.xlu0 %v2558
        %v2560 = vpop.xlane.xlu0 %2559
        %v2561 = vadd.f32 %v2365, %v2367
        %2562 = vadd.xlane.f32.xlu0 %v2561
        %v2563 = vpop.xlane.xlu0 %2562
        %v2564 = vadd.f32 %v2369, %v2371
        %2565 = vadd.xlane.f32.xlu0 %v2564
        %v2566 = vpop.xlane.xlu0 %2565
        %v2567 = vadd.f32 %v2373, %v2375
        %2568 = vadd.xlane.f32.xlu0 %v2567
        %v2569 = vpop.xlane.xlu0 %2568
        %v2570 = vadd.f32 %v2377, %v2379
        %2571 = vadd.xlane.f32.xlu0 %v2570
        %v2572 = vpop.xlane.xlu0 %2571
        %v2573 = vadd.f32 %v2381, %v2383
        %2574 = vadd.xlane.f32.xlu0 %v2573
        %v2575 = vpop.xlane.xlu0 %2574
        %v2576 = vrcp.pop %v2386
        %v2577 = vrcp.pop %v2389
        %v2578 = vrcp.pop %v2392
        %v2579 = vrcp.pop %v2395
        %v2580 = vrcp.pop %v2398
        %v2581 = vrcp.pop %v2401
        %v2582 = vrcp.pop %v2404
        %v2583 = vrcp.pop %v2407
        %v2584 = vrcp.pop %v2410
        %v2585 = vrcp.pop %v2413
        %v2586 = vrcp.pop %v2416
        %v2587 = vrcp.pop %v2419
        %v2588 = vrcp.pop %v2422
        %v2589 = vrcp.pop %v2425
        %v2590 = vrcp.pop %v2428
        %v2591 = vrcp.pop %v2431
        %v2592 = vrcp.pop %v2434
        %v2593 = vrcp.pop %v2437
        %v2594 = vrcp.pop %v2440
        %v2595 = vrcp.pop %v2443
        %v2596 = vrcp.pop %v2446
        %v2597 = vrcp.pop %v2449
        %v2598 = vrcp.pop %v2452
        %v2599 = vrcp.pop %v2455
        %v2600 = vrcp.pop %v2458
        %v2601 = vrcp.pop %v2461
        %v2602 = vrcp.pop %v2464
        %v2603 = vrcp.pop %v2467
        %v2604 = vrcp.pop %v2470
        %v2605 = vrcp.pop %v2473
        %v2606 = vrcp.pop %v2476
        %v2607 = vrcp.pop %v2479
        %v2608 = vrcp.pop %v2482
        %v2609 = vrcp.pop %v2485
        %v2610 = vrcp.pop %v2488
        %v2611 = vrcp.pop %v2491
        %v2612 = vrcp.pop %v2494
        %v2613 = vrcp.pop %v2497
        %v2614 = vrcp.pop %v2500
        %v2615 = vrcp.pop %v2503
        %v2616 = vrcp.pop %v2506
        %v2617 = vrcp.pop %v2509
        %v2618 = vrcp.pop %v2512
        %v2619 = vrcp.pop %v2515
        %v2620 = vrcp.pop %v2518
        %v2621 = vrcp.pop %v2521
        %v2622 = vrcp.pop %v2524
        %v2623 = vrcp.pop %v2527
        %v2624 = vrcp.pop %v2530
        %v2625 = vrcp.pop %v2533
        %v2626 = vrcp.pop %v2536
        %v2627 = vrcp.pop %v2539
        %v2628 = vrcp.pop %v2542
        %v2629 = vrcp.pop %v2545
        %v2630 = vrcp.pop %v2548
        %v2631 = vrcp.pop %v2551
        %v2632 = vrcp.pop %v2554
        %v2633 = vrcp.pop %v2557
        %v2634 = vrcp.pop %v2560
        %v2635 = vrcp.pop %v2563
        %v2636 = vrcp.pop %v2566
        %v2637 = vrcp.pop %v2569
        %v2638 = vrcp.pop %v2572
        %v2639 = vrcp.pop %v2575
        %v2640 = vmul.f32 %v2129, %v2576
        %v2641 = vmul.f32 %v2131, %v2576
        %v2642 = vmul.f32 %v2133, %v2577
        %v2643 = vmul.f32 %v2135, %v2577
        %v2644 = vmul.f32 %v2137, %v2578
        %v2645 = vmul.f32 %v2139, %v2578
        %v2646 = vmul.f32 %v2141, %v2579
        %v2647 = vmul.f32 %v2143, %v2579
        %v2648 = vmul.f32 %v2145, %v2580
        %v2649 = vmul.f32 %v2147, %v2580
        %v2650 = vmul.f32 %v2149, %v2581
        %v2651 = vmul.f32 %v2151, %v2581
        %v2652 = vmul.f32 %v2153, %v2582
        %v2653 = vmul.f32 %v2155, %v2582
        %v2654 = vmul.f32 %v2157, %v2583
        %v2655 = vmul.f32 %v2159, %v2583
        %v2656 = vmul.f32 %v2161, %v2584
        %v2657 = vmul.f32 %v2163, %v2584
        %v2658 = vmul.f32 %v2165, %v2585
        %v2659 = vmul.f32 %v2167, %v2585
        %v2660 = vmul.f32 %v2169, %v2586
        %v2661 = vmul.f32 %v2171, %v2586
        %v2662 = vmul.f32 %v2173, %v2587
        %v2663 = vmul.f32 %v2175, %v2587
        %v2664 = vmul.f32 %v2177, %v2588
        %v2665 = vmul.f32 %v2179, %v2588
        %v2666 = vmul.f32 %v2181, %v2589
        %v2667 = vmul.f32 %v2183, %v2589
        %v2668 = vmul.f32 %v2185, %v2590
        %v2669 = vmul.f32 %v2187, %v2590
        %v2670 = vmul.f32 %v2189, %v2591
        %v2671 = vmul.f32 %v2191, %v2591
        %v2672 = vmul.f32 %v2193, %v2592
        %v2673 = vmul.f32 %v2195, %v2592
        %v2674 = vmul.f32 %v2197, %v2593
        %v2675 = vmul.f32 %v2199, %v2593
        %v2676 = vmul.f32 %v2201, %v2594
        %v2677 = vmul.f32 %v2203, %v2594
        %v2678 = vmul.f32 %v2205, %v2595
        %v2679 = vmul.f32 %v2207, %v2595
        %v2680 = vmul.f32 %v2209, %v2596
        %v2681 = vmul.f32 %v2211, %v2596
        %v2682 = vmul.f32 %v2213, %v2597
        %v2683 = vmul.f32 %v2215, %v2597
        %v2684 = vmul.f32 %v2217, %v2598
        %v2685 = vmul.f32 %v2219, %v2598
        %v2686 = vmul.f32 %v2221, %v2599
        %v2687 = vmul.f32 %v2223, %v2599
        %v2688 = vmul.f32 %v2225, %v2600
        %v2689 = vmul.f32 %v2227, %v2600
        %v2690 = vmul.f32 %v2229, %v2601
        %v2691 = vmul.f32 %v2231, %v2601
        %v2692 = vmul.f32 %v2233, %v2602
        %v2693 = vmul.f32 %v2235, %v2602
        %v2694 = vmul.f32 %v2237, %v2603
        %v2695 = vmul.f32 %v2239, %v2603
        %v2696 = vmul.f32 %v2241, %v2604
        %v2697 = vmul.f32 %v2243, %v2604
        %v2698 = vmul.f32 %v2245, %v2605
        %v2699 = vmul.f32 %v2247, %v2605
        %v2700 = vmul.f32 %v2249, %v2606
        %v2701 = vmul.f32 %v2251, %v2606
        %v2702 = vmul.f32 %v2253, %v2607
        %v2703 = vmul.f32 %v2255, %v2607
        %v2704 = vmul.f32 %v2257, %v2608
        %v2705 = vmul.f32 %v2259, %v2608
        %v2706 = vmul.f32 %v2261, %v2609
        %v2707 = vmul.f32 %v2263, %v2609
        %v2708 = vmul.f32 %v2265, %v2610
        %v2709 = vmul.f32 %v2267, %v2610
        %v2710 = vmul.f32 %v2269, %v2611
        %v2711 = vmul.f32 %v2271, %v2611
        %v2712 = vmul.f32 %v2273, %v2612
        %v2713 = vmul.f32 %v2275, %v2612
        %v2714 = vmul.f32 %v2277, %v2613
        %v2715 = vmul.f32 %v2279, %v2613
        %v2716 = vmul.f32 %v2281, %v2614
        %v2717 = vmul.f32 %v2283, %v2614
        %v2718 = vmul.f32 %v2285, %v2615
        %v2719 = vmul.f32 %v2287, %v2615
        %v2720 = vmul.f32 %v2289, %v2616
        %v2721 = vmul.f32 %v2291, %v2616
        %v2722 = vmul.f32 %v2293, %v2617
        %v2723 = vmul.f32 %v2295, %v2617
        %v2724 = vmul.f32 %v2297, %v2618
        %v2725 = vmul.f32 %v2299, %v2618
        %v2726 = vmul.f32 %v2301, %v2619
        %v2727 = vmul.f32 %v2303, %v2619
        %v2728 = vmul.f32 %v2305, %v2620
        %v2729 = vmul.f32 %v2307, %v2620
        %v2730 = vmul.f32 %v2309, %v2621
        %v2731 = vmul.f32 %v2311, %v2621
        %v2732 = vmul.f32 %v2313, %v2622
        %v2733 = vmul.f32 %v2315, %v2622
        %v2734 = vmul.f32 %v2317, %v2623
        %v2735 = vmul.f32 %v2319, %v2623
        %v2736 = vmul.f32 %v2321, %v2624
        %v2737 = vmul.f32 %v2323, %v2624
        %v2738 = vmul.f32 %v2325, %v2625
        %v2739 = vmul.f32 %v2327, %v2625
        %v2740 = vmul.f32 %v2329, %v2626
        %v2741 = vmul.f32 %v2331, %v2626
        %v2742 = vmul.f32 %v2333, %v2627
        %v2743 = vmul.f32 %v2335, %v2627
        %v2744 = vmul.f32 %v2337, %v2628
        %v2745 = vmul.f32 %v2339, %v2628
        %v2746 = vmul.f32 %v2341, %v2629
        %v2747 = vmul.f32 %v2343, %v2629
        %v2748 = vmul.f32 %v2345, %v2630
        %v2749 = vmul.f32 %v2347, %v2630
        %v2750 = vmul.f32 %v2349, %v2631
        %v2751 = vmul.f32 %v2351, %v2631
        %v2752 = vmul.f32 %v2353, %v2632
        %v2753 = vmul.f32 %v2355, %v2632
        %v2754 = vmul.f32 %v2357, %v2633
        %v2755 = vmul.f32 %v2359, %v2633
        %v2756 = vmul.f32 %v2361, %v2634
        %v2757 = vmul.f32 %v2363, %v2634
        %v2758 = vmul.f32 %v2365, %v2635
        %v2759 = vmul.f32 %v2367, %v2635
        %v2760 = vmul.f32 %v2369, %v2636
        %v2761 = vmul.f32 %v2371, %v2636
        %v2762 = vmul.f32 %v2373, %v2637
        %v2763 = vmul.f32 %v2375, %v2637
        %v2764 = vmul.f32 %v2377, %v2638
        %v2765 = vmul.f32 %v2379, %v2638
        %v2766 = vmul.f32 %v2381, %v2639
        %v2767 = vmul.f32 %v2383, %v2639
        %v2768 = vpack.c.bf16 %v2642, %v2640
        %v2769 = vpack.c.bf16 %v2643, %v2641
        %v2770 = vpack.c.bf16 %v2646, %v2644
        %v2771 = vpack.c.bf16 %v2647, %v2645
        %v2772 = vpack.c.bf16 %v2650, %v2648
        %v2773 = vpack.c.bf16 %v2651, %v2649
        %v2774 = vpack.c.bf16 %v2654, %v2652
        %v2775 = vpack.c.bf16 %v2655, %v2653
        %v2776 = vpack.c.bf16 %v2658, %v2656
        %v2777 = vpack.c.bf16 %v2659, %v2657
        %v2778 = vpack.c.bf16 %v2662, %v2660
        %v2779 = vpack.c.bf16 %v2663, %v2661
        %v2780 = vpack.c.bf16 %v2666, %v2664
        %v2781 = vpack.c.bf16 %v2667, %v2665
        %v2782 = vpack.c.bf16 %v2670, %v2668
        %v2783 = vpack.c.bf16 %v2671, %v2669
        %v2784 = vpack.c.bf16 %v2674, %v2672
        %v2785 = vpack.c.bf16 %v2675, %v2673
        %v2786 = vpack.c.bf16 %v2678, %v2676
        %v2787 = vpack.c.bf16 %v2679, %v2677
        %v2788 = vpack.c.bf16 %v2682, %v2680
        %v2789 = vpack.c.bf16 %v2683, %v2681
        %v2790 = vpack.c.bf16 %v2686, %v2684
        %v2791 = vpack.c.bf16 %v2687, %v2685
        %v2792 = vpack.c.bf16 %v2690, %v2688
        %v2793 = vpack.c.bf16 %v2691, %v2689
        %v2794 = vpack.c.bf16 %v2694, %v2692
        %v2795 = vpack.c.bf16 %v2695, %v2693
        %v2796 = vpack.c.bf16 %v2698, %v2696
        %v2797 = vpack.c.bf16 %v2699, %v2697
        %v2798 = vpack.c.bf16 %v2702, %v2700
        %v2799 = vpack.c.bf16 %v2703, %v2701
        %v2800 = vpack.c.bf16 %v2706, %v2704
        %v2801 = vpack.c.bf16 %v2707, %v2705
        %v2802 = vpack.c.bf16 %v2710, %v2708
        %v2803 = vpack.c.bf16 %v2711, %v2709
        %v2804 = vpack.c.bf16 %v2714, %v2712
        %v2805 = vpack.c.bf16 %v2715, %v2713
        %v2806 = vpack.c.bf16 %v2718, %v2716
        %v2807 = vpack.c.bf16 %v2719, %v2717
        %v2808 = vpack.c.bf16 %v2722, %v2720
        %v2809 = vpack.c.bf16 %v2723, %v2721
        %v2810 = vpack.c.bf16 %v2726, %v2724
        %v2811 = vpack.c.bf16 %v2727, %v2725
        %v2812 = vpack.c.bf16 %v2730, %v2728
        %v2813 = vpack.c.bf16 %v2731, %v2729
        %v2814 = vpack.c.bf16 %v2734, %v2732
        %v2815 = vpack.c.bf16 %v2735, %v2733
        %v2816 = vpack.c.bf16 %v2738, %v2736
        %v2817 = vpack.c.bf16 %v2739, %v2737
        %v2818 = vpack.c.bf16 %v2742, %v2740
        %v2819 = vpack.c.bf16 %v2743, %v2741
        %v2820 = vpack.c.bf16 %v2746, %v2744
        %v2821 = vpack.c.bf16 %v2747, %v2745
        %v2822 = vpack.c.bf16 %v2750, %v2748
        %v2823 = vpack.c.bf16 %v2751, %v2749
        %v2824 = vpack.c.bf16 %v2754, %v2752
        %v2825 = vpack.c.bf16 %v2755, %v2753
        %v2826 = vpack.c.bf16 %v2758, %v2756
        %v2827 = vpack.c.bf16 %v2759, %v2757
        %v2828 = vpack.c.bf16 %v2762, %v2760
        %v2829 = vpack.c.bf16 %v2763, %v2761
        %v2830 = vpack.c.bf16 %v2766, %v2764
        %v2831 = vpack.c.bf16 %v2767, %v2765
        %2832 = vmatprep.subr.bf16.mxu0 %v2769
        %2833 = vmatpush1.bf16.xpose.msra.mxu0 %v2768
        %2834 = vmatprep.subr.bf16.mxu0 %v2771
        %2835 = vmatpush1.bf16.xpose.msra.mxu0 %v2770
        %2836 = vmatprep.subr.bf16.mxu0 %v2773
        %2837 = vmatpush1.bf16.xpose.msra.mxu0 %v2772
        %2838 = vmatprep.subr.bf16.mxu0 %v2775
        %2839 = vmatpush1.bf16.xpose.msra.mxu0 %v2774
        %2840 = vmatprep.subr.bf16.mxu0 %v2777
        %2841 = vmatpush1.bf16.xpose.msra.mxu0 %v2776
        %2842 = vmatprep.subr.bf16.mxu0 %v2779
        %2843 = vmatpush1.bf16.xpose.msra.mxu0 %v2778
        %2844 = vmatprep.subr.bf16.mxu0 %v2781
        %2845 = vmatpush1.bf16.xpose.msra.mxu0 %v2780
        %2846 = vmatprep.subr.bf16.mxu0 %v2783
        %2847 = vmatpush1.bf16.xpose.msra.mxu0 %v2782
        %2848 = vmatprep.subr.bf16.mxu0 %v2785
        %2849 = vmatpush1.bf16.xpose.msra.mxu0 %v2784
        %2850 = vmatprep.subr.bf16.mxu0 %v2787
        %2851 = vmatpush1.bf16.xpose.msra.mxu0 %v2786
        %2852 = vmatprep.subr.bf16.mxu0 %v2789
        %2853 = vmatpush1.bf16.xpose.msra.mxu0 %v2788
        %2854 = vmatprep.subr.bf16.mxu0 %v2791
        %2855 = vmatpush1.bf16.xpose.msra.mxu0 %v2790
        %2856 = vmatprep.subr.bf16.mxu0 %v2793
        %2857 = vmatpush1.bf16.xpose.msra.mxu0 %v2792
        %2858 = vmatprep.subr.bf16.mxu0 %v2795
        %2859 = vmatpush1.bf16.xpose.msra.mxu0 %v2794
        %2860 = vmatprep.subr.bf16.mxu0 %v2797
        %2861 = vmatpush1.bf16.xpose.msra.mxu0 %v2796
        %2862 = vmatprep.subr.bf16.mxu0 %v2799
        %2863 = vmatpush1.bf16.xpose.msra.mxu0 %v2798
        %2864 = vmatprep.mubr.bf16.mxu0 %v1254
        %2865 = vmatmul.mubr.bf16.gmra.mrb[0].mxu0 %v1253
        %v2866 = vpop.f32.mrb[0].mxu0
        %v2867 = vadd.f32 0.0, %v2866
        %v2868 = vpop.f32.mrb[0].mxu0
        %v2869 = vadd.f32 0.0, %v2868
        %v2870 = vpop.f32.mrb[0].mxu0
        %v2871 = vadd.f32 0.0, %v2870
        %v2872 = vpop.f32.mrb[0].mxu0
        %v2873 = vadd.f32 0.0, %v2872
        %2874 = vmatprep.mubr.bf16.mxu0 %v1256
        %2875 = vmatmul.mubr.bf16.gmra.mrb[0].mxu0 %v1255
        %v2876 = vpop.f32.mrb[0].mxu0
        %v2877 = vadd.f32 0.0, %v2876
        %v2878 = vpop.f32.mrb[0].mxu0
        %v2879 = vadd.f32 0.0, %v2878
        %v2880 = vpop.f32.mrb[0].mxu0
        %v2881 = vadd.f32 0.0, %v2880
        %v2882 = vpop.f32.mrb[0].mxu0
        %v2883 = vadd.f32 0.0, %v2882
        %2884 = vdwg.mxu0
        %2885 = vmatprep.subr.bf16.mxu0 %v2801
        %2886 = vmatpush1.bf16.xpose.msra.mxu0 %v2800
        %2887 = vmatprep.subr.bf16.mxu0 %v2803
        %2888 = vmatpush1.bf16.xpose.msra.mxu0 %v2802
        %2889 = vmatprep.subr.bf16.mxu0 %v2805
        %2890 = vmatpush1.bf16.xpose.msra.mxu0 %v2804
        %2891 = vmatprep.subr.bf16.mxu0 %v2807
        %2892 = vmatpush1.bf16.xpose.msra.mxu0 %v2806
        %2893 = vmatprep.subr.bf16.mxu0 %v2809
        %2894 = vmatpush1.bf16.xpose.msra.mxu0 %v2808
        %2895 = vmatprep.subr.bf16.mxu0 %v2811
        %2896 = vmatpush1.bf16.xpose.msra.mxu0 %v2810
        %2897 = vmatprep.subr.bf16.mxu0 %v2813
        %2898 = vmatpush1.bf16.xpose.msra.mxu0 %v2812
        %2899 = vmatprep.subr.bf16.mxu0 %v2815
        %2900 = vmatpush1.bf16.xpose.msra.mxu0 %v2814
        %2901 = vmatprep.subr.bf16.mxu0 %v2817
        %2902 = vmatpush1.bf16.xpose.msra.mxu0 %v2816
        %2903 = vmatprep.subr.bf16.mxu0 %v2819
        %2904 = vmatpush1.bf16.xpose.msra.mxu0 %v2818
        %2905 = vmatprep.subr.bf16.mxu0 %v2821
        %2906 = vmatpush1.bf16.xpose.msra.mxu0 %v2820
        %2907 = vmatprep.subr.bf16.mxu0 %v2823
        %2908 = vmatpush1.bf16.xpose.msra.mxu0 %v2822
        %2909 = vmatprep.subr.bf16.mxu0 %v2825
        %2910 = vmatpush1.bf16.xpose.msra.mxu0 %v2824
        %2911 = vmatprep.subr.bf16.mxu0 %v2827
        %2912 = vmatpush1.bf16.xpose.msra.mxu0 %v2826
        %2913 = vmatprep.subr.bf16.mxu0 %v2829
        %2914 = vmatpush1.bf16.xpose.msra.mxu0 %v2828
        %2915 = vmatprep.subr.bf16.mxu0 %v2831
        %2916 = vmatpush1.bf16.xpose.msra.mxu0 %v2830
        %2917 = vmatprep.mubr.bf16.mxu0 %v1258
        %2918 = vmatmul.mubr.bf16.gmra.mrb[0].mxu0 %v1257
        %v2919 = vpop.f32.mrb[0].mxu0
        %v2920 = vadd.f32 0.0, %v2919
        %v2921 = vpop.f32.mrb[0].mxu0
        %v2922 = vadd.f32 0.0, %v2921
        %v2923 = vpop.f32.mrb[0].mxu0
        %v2924 = vadd.f32 0.0, %v2923
        %v2925 = vpop.f32.mrb[0].mxu0
        %v2926 = vadd.f32 0.0, %v2925
        %2927 = vmatprep.mubr.bf16.mxu0 %v1260
        %2928 = vmatmul.mubr.bf16.gmra.mrb[0].mxu0 %v1259
        %v2929 = vpop.f32.mrb[0].mxu0
        %v2930 = vadd.f32 0.0, %v2929
        %v2931 = vpop.f32.mrb[0].mxu0
        %v2932 = vadd.f32 0.0, %v2931
        %v2933 = vpop.f32.mrb[0].mxu0
        %v2934 = vadd.f32 0.0, %v2933
        %v2935 = vpop.f32.mrb[0].mxu0
        %v2936 = vadd.f32 0.0, %v2935
        %2937 = vdwg.mxu0
        %v2938 = vpack.c.bf16 %v2871, %v2867
        %v2939 = vpack.c.bf16 %v2873, %v2869
        %v2940 = vpack.c.bf16 %v2881, %v2877
        %v2941 = vpack.c.bf16 %v2883, %v2879
        %v2942 = vpack.c.bf16 %v2924, %v2920
        %v2943 = vpack.c.bf16 %v2926, %v2922
        %v2944 = vpack.c.bf16 %v2934, %v2930
        %v2945 = vpack.c.bf16 %v2936, %v2932
        %v2946 = vld [vmem:[%s6] sm:$0xf]
        %v2947 = vld [vmem:[%s6 + $0x4] sm:$0xf]
        %v2948 = vld [vmem:[%s6 + $0x8] sm:$0xf]
        %v2949 = vld [vmem:[%s6 + $0xc] sm:$0xf]
        %v2950 = vld [vmem:[%s6 + $0x10] sm:$0xf]
        %v2951 = vld [vmem:[%s6 + $0x14] sm:$0xf]
        %v2952 = vld [vmem:[%s6 + $0x18] sm:$0xf]
        %v2953 = vld [vmem:[%s6 + $0x1c] sm:$0xf]
        %v2954 = vld [vmem:[%s7] sm:$0xff]
        %v2955 = vld [vmem:[%s7 + $0x8] sm:$0xff]
        %v2956 = vld [vmem:[%s7 + $0x10] sm:$0xff]
        %v2957 = vld [vmem:[%s7 + $0x18] sm:$0xff]
        %v2958 = vld [vmem:[%s7 + $0x20] sm:$0xff]
        %v2959 = vld [vmem:[%s7 + $0x28] sm:$0xff]
        %v2960 = vld [vmem:[%s7 + $0x30] sm:$0xff]
        %v2961 = vld [vmem:[%s7 + $0x38] sm:$0xff]
        %2963 = vset.pattern.permute.xlu0 0
        %2964 = vperm.xlu0 %2963, %v2954
        %v2965 = vpop.permute.xlu0 %2964
        %2968 = vset.pattern.permute.xlu0 0
        %2969 = vperm.xlu0 %2968, %v2955
        %v2970 = vpop.permute.xlu0 %2969
        %2973 = vset.pattern.permute.xlu0 0
        %2974 = vperm.xlu0 %2973, %v2956
        %v2975 = vpop.permute.xlu0 %2974
        %2978 = vset.pattern.permute.xlu0 0
        %2979 = vperm.xlu0 %2978, %v2957
        %v2980 = vpop.permute.xlu0 %2979
        %2983 = vset.pattern.permute.xlu0 0
        %2984 = vperm.xlu0 %2983, %v2958
        %v2985 = vpop.permute.xlu0 %2984
        %2988 = vset.pattern.permute.xlu0 0
        %2989 = vperm.xlu0 %2988, %v2959
        %v2990 = vpop.permute.xlu0 %2989
        %2993 = vset.pattern.permute.xlu0 0
        %2994 = vperm.xlu0 %2993, %v2960
        %v2995 = vpop.permute.xlu0 %2994
        %2998 = vset.pattern.permute.xlu0 0
        %2999 = vperm.xlu0 %2998, %v2961
        %v3000 = vpop.permute.xlu0 %2999
        %v3010 = vunpack.c.l.b16 %v2946
        %v3011 = vunpack.c.l.b16 %v2947
        %v3012 = vunpack.c.l.b16 %v2948
        %v3013 = vunpack.c.l.b16 %v2949
        %v3014 = vunpack.c.l.b16 %v2950
        %v3015 = vunpack.c.l.b16 %v2951
        %v3016 = vunpack.c.l.b16 %v2952
        %v3017 = vunpack.c.l.b16 %v2953
        %v3018 = vpack.c.b16 %v3011, %v3010
        %v3019 = vpack.c.b16 %v3013, %v3012
        %v3020 = vpack.c.b16 %v3015, %v3014
        %v3021 = vpack.c.b16 %v3017, %v3016
        %v3023 = vsel %vm393, %v3018, 0
        %v3026 = vsel %vm393, %v3019, 0
        %v3029 = vsel %vm393, %v3020, 0
        %v3032 = vsel %vm393, %v3021, 0
        %3034 = vmatprep.subr.bf16.mxu0 %v2939
        %3035 = vmatpush1.bf16.msra.mxu0 %v2938
        %3036 = vmatprep.subr.bf16.mxu0 %v2941
        %3037 = vmatpush1.bf16.msra.mxu0 %v2940
        %3038 = vmatprep.subr.bf16.mxu0 %v2943
        %3039 = vmatpush1.bf16.msra.mxu0 %v2942
        %3040 = vmatprep.subr.bf16.mxu0 %v2945
        %3041 = vmatpush1.bf16.msra.mxu0 %v2944
        %3042 = vmatprep.subr.bf16.mxu0 0
        %3043 = vmatpush1.bf16.msra.mxu0 0
        %3044 = vmatprep.subr.bf16.mxu0 0
        %3045 = vmatpush1.bf16.msra.mxu0 0
        %3046 = vmatprep.subr.bf16.mxu0 0
        %3047 = vmatpush1.bf16.msra.mxu0 0
        %3048 = vmatprep.subr.bf16.mxu0 0
        %3049 = vmatpush1.bf16.msra.mxu0 0
        %3050 = vmatprep.subr.bf16.mxu0 0
        %3051 = vmatpush1.bf16.msra.mxu0 0
        %3052 = vmatprep.subr.bf16.mxu0 0
        %3053 = vmatpush1.bf16.msra.mxu0 0
        %3054 = vmatprep.subr.bf16.mxu0 0
        %3055 = vmatpush1.bf16.msra.mxu0 0
        %3056 = vmatprep.subr.bf16.mxu0 0
        %3057 = vmatpush1.bf16.msra.mxu0 0
        %3058 = vmatprep.subr.bf16.mxu0 0
        %3059 = vmatpush1.bf16.msra.mxu0 0
        %3060 = vmatprep.subr.bf16.mxu0 0
        %3061 = vmatpush1.bf16.msra.mxu0 0
        %3062 = vmatprep.subr.bf16.mxu0 0
        %3063 = vmatpush1.bf16.msra.mxu0 0
        %3064 = vmatprep.subr.bf16.mxu0 0
        %3065 = vmatpush1.bf16.msra.mxu0 0
        %3066 = vmatprep.mubr.bf16.mxu0 0
        %3067 = vmatmul.mubr.bf16.gmra.mrb[0].mxu0 %v3023
        %v3068 = vpop.f32.mrb[0].mxu0
        %v3069 = vadd.f32 %v2965, %v3068
        %v3070 = vpop.f32.mrb[0].mxu0
        %v3071 = vadd.f32 %v2965, %v3070
        %v3072 = vpop.f32.mrb[0].mxu0
        %v3073 = vadd.f32 %v2970, %v3072
        %v3074 = vpop.f32.mrb[0].mxu0
        %v3075 = vadd.f32 %v2970, %v3074
        %3076 = vmatprep.mubr.bf16.mxu0 0
        %3077 = vmatmul.mubr.bf16.gmra.mrb[0].mxu0 %v3026
        %v3078 = vpop.f32.mrb[0].mxu0
        %v3079 = vadd.f32 %v2975, %v3078
        %v3080 = vpop.f32.mrb[0].mxu0
        %v3081 = vadd.f32 %v2975, %v3080
        %v3082 = vpop.f32.mrb[0].mxu0
        %v3083 = vadd.f32 %v2980, %v3082
        %v3084 = vpop.f32.mrb[0].mxu0
        %v3085 = vadd.f32 %v2980, %v3084
        %3086 = vmatprep.mubr.bf16.mxu0 0
        %3087 = vmatmul.mubr.bf16.gmra.mrb[0].mxu0 %v3029
        %v3088 = vpop.f32.mrb[0].mxu0
        %v3089 = vadd.f32 %v2985, %v3088
        %v3090 = vpop.f32.mrb[0].mxu0
        %v3091 = vadd.f32 %v2985, %v3090
        %v3092 = vpop.f32.mrb[0].mxu0
        %v3093 = vadd.f32 %v2990, %v3092
        %v3094 = vpop.f32.mrb[0].mxu0
        %v3095 = vadd.f32 %v2990, %v3094
        %3096 = vmatprep.mubr.bf16.mxu0 0
        %3097 = vmatmul.mubr.bf16.gmra.mrb[0].mxu0 %v3032
        %v3098 = vpop.f32.mrb[0].mxu0
        %v3099 = vadd.f32 %v2995, %v3098
        %v3100 = vpop.f32.mrb[0].mxu0
        %v3101 = vadd.f32 %v2995, %v3100
        %v3102 = vpop.f32.mrb[0].mxu0
        %v3103 = vadd.f32 %v3000, %v3102
        %v3104 = vpop.f32.mrb[0].mxu0
        %v3105 = vadd.f32 %v3000, %v3104
        %3106 = vdwg.mxu0
        %v3107 = vadd.f32 %v305, %v3069
        %v3108 = vadd.f32 %v306, %v3071
        %v3109 = vadd.f32 %v307, %v3073
        %v3110 = vadd.f32 %v308, %v3075
        %v3111 = vadd.f32 %v309, %v3079
        %v3112 = vadd.f32 %v310, %v3081
        %v3113 = vadd.f32 %v311, %v3083
        %v3114 = vadd.f32 %v312, %v3085
        %v3115 = vadd.f32 %v313, %v3089
        %v3116 = vadd.f32 %v314, %v3091
        %v3117 = vadd.f32 %v315, %v3093
        %v3118 = vadd.f32 %v316, %v3095
        %v3119 = vadd.f32 %v317, %v3099
        %v3120 = vadd.f32 %v318, %v3101
        %v3121 = vadd.f32 %v319, %v3103
        %v3122 = vadd.f32 %v320, %v3105
        %3123 = vst [vmem:[%s298] sm:$0xff] %v3107
        %3124 = vst [vmem:[%s298 + $0x8] sm:$0xff] %v3108
        %3125 = vst [vmem:[%s298 + $0x10] sm:$0xff] %v3109
        %3126 = vst [vmem:[%s298 + $0x18] sm:$0xff] %v3110
        %3127 = vst [vmem:[%s298 + $0x20] sm:$0xff] %v3111
        %3128 = vst [vmem:[%s298 + $0x28] sm:$0xff] %v3112
        %3129 = vst [vmem:[%s298 + $0x30] sm:$0xff] %v3113
        %3130 = vst [vmem:[%s298 + $0x38] sm:$0xff] %v3114
        %3131 = vst [vmem:[%s298 + $0x40] sm:$0xff] %v3115
        %3132 = vst [vmem:[%s298 + $0x48] sm:$0xff] %v3116
        %3133 = vst [vmem:[%s298 + $0x50] sm:$0xff] %v3117
        %3134 = vst [vmem:[%s298 + $0x58] sm:$0xff] %v3118
        %3135 = vst [vmem:[%s298 + $0x60] sm:$0xff] %v3119
        %3136 = vst [vmem:[%s298 + $0x68] sm:$0xff] %v3120
        %3137 = vst [vmem:[%s298 + $0x70] sm:$0xff] %v3121
        %3138 = vst [vmem:[%s298 + $0x78] sm:$0xff] %v3122
        %s3139 = sand.u32 %s203, 1
        %s3140 = scalar_lea.sflag [#allocation3], %s3139
        %s3141 = sand.u32 %s203, 1
        %s3142 = smul.addr %s3141, 128
        %s3143 = scalar_lea.vmem [#allocation2], %s3142
        // Predicated region
        $region53: #{tpu_custom_call.1} parent=51 // pred_check
          %p3144 = pneg %p213
        $region54: #{tpu_custom_call.1} parent=51 // pred_check_branch
          %3146 = sbr.rel (%p3144) target = $region56
        $region55: #{tpu_custom_call.1} parent=51 // pred_region
          %s3148 = ssub.s32 2048, 2048
          %3149 = vsyncadd %s3140, %s3148
          %s3150 = smul.addr %s22, 16
          %s3151 = smul.addr %s3150, 128
          %s3152 = scalar_lea.hbm %s8, %s3151
          %s3153 = sshll.u32 %s3143, 4
          %s3154 = int_to_ptr.vmem [resolvable:$true] %s3153
          %3159 = dma.vmem_to_hbm [thread:$0]  %s3154, 2048, %s3152, %s3140, 256, 256, 16
        $region56: #{tpu_custom_call.1} parent=51 // pred_fallthru
          _
      $region52: #{tpu_custom_call.1} parent=5 // pred_fallthru
        _
      %p3160 = scmp.le.s32.totalorder 2, %s17
      // Predicated region
      $region57: #{tpu_custom_call.1} parent=5 // pred_check
        %p3161 = pneg %p3160
      $region58: #{tpu_custom_call.1} parent=5 // pred_check_branch
        %3163 = sbr.rel (%p3161) target = $region60
      $region59: #{tpu_custom_call.1} parent=5 // pred_region
        %s3164 = ssub.s32 %s17, 2
        // Predicated region
        $region61: #{tpu_custom_call.1} parent=59 // pred_check
          %p3165 = pneg %p219
        $region62: #{tpu_custom_call.1} parent=59 // pred_check_branch
          %3167 = sbr.rel (%p3165) target = $region64
        $region63: #{tpu_custom_call.1} parent=59 // pred_region
          %s3168 = sand.u32 %s204, 1
          %s3169 = scalar_lea.sflag [#allocation3], %s3168
          %s3170 = sand.u32 %s204, 1
          %s3171 = smul.addr %s3170, 128
          %s3172 = scalar_lea.vmem [#allocation2], %s3171
          %3173 = dma.done %s3169, 2048
        $region64: #{tpu_custom_call.1} parent=59 // pred_fallthru
          _
      $region60: #{tpu_custom_call.1} parent=5 // pred_fallthru
        _
    $region6: #{tpu_custom_call.1} parent=1 // loop_footer
      %s21 = sadd.s32 1, %s17
    $region7: #{tpu_custom_call.1} parent=1 // loop_footer_branch
      %16 = sbr.rel target = $region3
    $region8: #{tpu_custom_call.1} parent=1 // loop_exit
      _
    %3174 = vsyncpa [#allocation3], 1
    %s3175 = scalar_lea.sflag [#allocation3], 1
    %3176 = vsyncpa %s3175, 1

</llo_original>
